<compile_context>
chip_gen: v7x
topology: tpu7x:2x2x1
jax: 0.10.0
libtpu: 0.0.40
codegen_flags: <defaults>
</compile_context>

<pallas_src>
import math
from functools import partial

import jax
import jax.numpy as jnp
from jax.experimental import pallas as pl
from jax.experimental.pallas import tpu as pltpu


# ----------------------------- in-kernel helpers -----------------------------

def _layernorm(x, w, b, eps=1e-6):
    # f32 statistics, biased variance (matches torch.nn.LayerNorm).
    x = x.astype(jnp.float32)
    mu = jnp.mean(x, axis=-1, keepdims=True)
    var = jnp.mean((x - mu) ** 2, axis=-1, keepdims=True)
    return (x - mu) * jax.lax.rsqrt(var + eps) * w + b


def _gelu_exact(x):
    # nn.GELU default (exact, erf based), computed in f32.
    # TODO(synk): on v6e/v7x a bf16 / tanh-approx GELU would halve VPU/EUP work.
    return 0.5 * x * (1.0 + jax.lax.erf(x * (1.0 / math.sqrt(2.0))))


def _matmul(a, b, compute_dtype):
    # a @ b on the MXU: low-precision operands, f32 accumulation.
    return jax.lax.dot_general(
        a.astype(compute_dtype), b.astype(compute_dtype),
        dimension_numbers=(((1,), (0,)), ((), ())),
        preferred_element_type=jnp.float32)


# ------------------------------- Pallas kernel --------------------------------

def encoder_block_kernel(num_heads, s_orig, apply_final_ln, compute_dtype,
                         x_ref,
                         ln1_w_ref, ln1_b_ref,
                         wqkv_t_ref, bqkv_ref,
                         wo_t_ref, bo_ref,
                         ln2_w_ref, ln2_b_ref,
                         w1_t_ref, b1_ref,
                         w2_t_ref, b2_ref,
                         *rest):
    if apply_final_ln:
        lnf_w_ref, lnf_b_ref, o_ref = rest
    else:
        (o_ref,) = rest

    NB, S, D = x_ref.shape
    H = num_heads
    hd = D // H
    cd = compute_dtype

    # Fold the per-step batch block into the matmul M dimension.
    x = x_ref[...].astype(jnp.float32).reshape(NB * S, D)

    # ---- ln_1 + fused qkv projection (1/sqrt(hd) already folded into Q) ----
    h = _layernorm(x, ln1_w_ref[...], ln1_b_ref[...])
    qkv = _matmul(h, wqkv_t_ref[...], cd) + bqkv_ref[...]          # (NB*S, 3D) f32

    # One up-front relayout to head-major (NB*H, S, hd) for q, k, v.
    # TODO(synk): pltpu.einshape could fuse the reshape+transpose if its split
    # syntax is available on this build.
    def to_heads(t2d):
        t = t2d.reshape(NB, S, H, hd)
        t = jnp.swapaxes(t, 1, 2)                                   # (NB, H, S, hd)
        return t.reshape(NB * H, S, hd)

    q = to_heads(qkv[:, :D]).astype(cd)
    k = to_heads(qkv[:, D:2 * D]).astype(cd)
    v = to_heads(qkv[:, 2 * D:]).astype(cd)

    # Batched scores / softmax / context for all (batch, head) pairs at once.
    s = jax.lax.dot_general(q, k, (((2,), (2,)), ((0,), (0,))),
                            preferred_element_type=jnp.float32)     # (NB*H, S, S)
    if S != s_orig:
        # Mask padded key positions (sequence padding added by the wrapper).
        kidx = jax.lax.broadcasted_iota(jnp.int32, (1, 1, S), 2)
        s = jnp.where(kidx < s_orig, s, jnp.float32(-1e30))
    s = s - jnp.max(s, axis=-1, keepdims=True)
    p = jnp.exp(s)
    p = p * pl.reciprocal(jnp.sum(p, axis=-1, keepdims=True), approx=True)

    ctx = jax.lax.dot_general(p.astype(cd), v, (((2,), (1,)), ((0,), (0,))),
                              preferred_element_type=jnp.float32)   # (NB*H, S, hd)
    ctx = jnp.swapaxes(ctx.reshape(NB, H, S, hd), 1, 2).reshape(NB * S, D)

    # Single out-projection over all heads (K = D, one MXU matmul).
    attn = _matmul(ctx, wo_t_ref[...], cd) + bo_ref[...]

    # dropout is identity in eval mode
    x2 = x + attn

    # ---- ln_2 + MLP (Linear -> GELU -> Linear) ----
    y = _layernorm(x2, ln2_w_ref[...], ln2_b_ref[...])
    m = _matmul(y, w1_t_ref[...], cd) + b1_ref[...]
    m = _gelu_exact(m)
    m = _matmul(m, w2_t_ref[...], cd) + b2_ref[...]

    out = x2 + m
    if apply_final_ln:
        # Final Encoder LayerNorm fused into the last block's epilogue.
        out = _layernorm(out, lnf_w_ref[...], lnf_b_ref[...])

    o_ref[...] = out.reshape(NB, S, D).astype(o_ref.dtype)


# --------------------------------- wrappers ------------------------------------

_BUFFERED_ONE = None


def _buffered_one_supported():
    """Probe whether BlockSpec(pipeline_mode=pl.Buffered(1)) lowers on this build."""
    global _BUFFERED_ONE
    if _BUFFERED_ONE is not None:
        return _BUFFERED_ONE
    try:
        spec = pl.BlockSpec((8, 128), lambda i: (0, 0), pipeline_mode=pl.Buffered(1))

        def _probe(x_ref, o_ref):
            o_ref[...] = x_ref[...]

        out = pl.pallas_call(
            _probe,
            out_shape=jax.ShapeDtypeStruct((8, 128), jnp.float32),
            grid=(1,),
            in_specs=[spec],
            out_specs=pl.BlockSpec((8, 128), lambda i: (0, 0)),
        )(jnp.zeros((8, 128), jnp.float32))
        jax.block_until_ready(out)
        _BUFFERED_ONE = True
    except Exception:
        _BUFFERED_ONE = False
    return _BUFFERED_ONE


def _const_spec(shape):
    # Weights/biases use the same block on every grid step; single-buffer them
    # when supported (halves weight VMEM with zero pipelining loss).
    idx = lambda b: (0,) * len(shape)
    if _buffered_one_supported():
        return pl.BlockSpec(shape, idx, pipeline_mode=pl.Buffered(1))
    return pl.BlockSpec(shape, idx)


def _physical_vmem_cap_bytes():
    try:
        return int(pltpu.get_tpu_info().vmem_capacity_bytes * 0.85)
    except Exception:
        # Conservative fallback (safe on v5e/v6e/v7x).
        return 64 * 1024 * 1024


def _vmem_limit_bytes(block_b, S, D, mlp_dim, num_heads, weight_buf_count):
    f32, b16 = 4, 2
    rows = block_b * S
    weights = (3 * D * D + D * D + 2 * D * mlp_dim) * b16 * weight_buf_count
    small = (16 * D + 3 * D + mlp_dim) * f32 * weight_buf_count
    acts = 2 * 2 * rows * D * f32                         # in/out, double-buffered
    inter = (rows * 3 * D                                  # qkv
             + 3 * rows * D                                # q/k/v head-major copies
             + 2 * num_heads * block_b * S * S             # scores + probs
             + 3 * rows * D                                # ctx, attn, x2
             + 2 * rows * mlp_dim                          # mlp hidden + gelu
             + 2 * rows * D) * f32
    need = int(1.5 * (weights + small + acts + inter)) + (4 << 20)
    return max(32 * 1024 * 1024, min(need, _physical_vmem_cap_bytes()))


def _auto_block_b(B, S):
    # Keep >= 2 grid steps (v7x has 2 TensorCores) while growing M = block_b*S
    # so the dense projections / MLP see a taller MXU M dim on v5e/v6e.
    if B < 2:
        return 1
    max_bb = max(1, min(8, B // 2))
    bb = 1
    for cand in range(1, max_bb + 1):
        if B % cand == 0 and cand * S <= 2048:
            bb = cand
    return bb


def encoder_block_forward(x, p, num_heads, *, s_orig, block_b=1, final_ln=None,
                          out_dtype=None, compute_dtype=jnp.bfloat16):
    B, S, D = x.shape                     # S is already padded to a multiple of 8
    assert B % block_b == 0 and D % num_heads == 0
    mlp_dim = p["w1_t"].shape[1]
    out_dtype = x.dtype if out_dtype is None else out_dtype

    # TODO(synk): for toy configs with D < 128, pad D to a lane multiple to avoid
    # masked partial stores; irrelevant for real ViT widths (D=768).
    in_specs = [
        pl.BlockSpec((block_b, S, D), lambda b: (b, 0, 0)),           # activations
        _const_spec((1, D)), _const_spec((1, D)),                     # ln1 w, b
        _const_spec((D, 3 * D)), _const_spec((1, 3 * D)),             # qkv proj (pre-T)
        _const_spec((D, D)), _const_spec((1, D)),                     # out proj (pre-T)
        _const_spec((1, D)), _const_spec((1, D)),                     # ln2 w, b
        _const_spec((D, mlp_dim)), _const_spec((1, mlp_dim)),         # mlp fc1 (pre-T)
        _const_spec((mlp_dim, D)), _const_spec((1, D)),               # mlp fc2 (pre-T)
    ]
    args = [x, p["ln1_w"], p["ln1_b"], p["wqkv_t"], p["bqkv"], p["wo_t"], p["bo"],
            p["ln2_w"], p["ln2_b"], p["w1_t"], p["b1"], p["w2_t"], p["b2"]]

    apply_final_ln = final_ln is not None
    if apply_final_ln:
        in_specs += [_const_spec((1, D)), _const_spec((1, D))]
        args += [final_ln[0], final_ln[1]]

    weight_bufs = 1 if _buffered_one_supported() else 2
    vmem_limit = _vmem_limit_bytes(block_b, S, D, mlp_dim, num_heads, weight_bufs)

    return pl.pallas_call(
        partial(encoder_block_kernel, num_heads, s_orig, apply_final_ln, compute_dtype),
        out_shape=jax.ShapeDtypeStruct((B, S, D), out_dtype),
        grid=(B // block_b,),
        in_specs=in_specs,
        out_specs=pl.BlockSpec((block_b, S, D), lambda b: (b, 0, 0)),
        compiler_params=pltpu.CompilerParams(
            dimension_semantics=("parallel",),          # shard batch over TCs (v7x)
            vmem_limit_bytes=vmem_limit),
    )(*args)


def encoder_forward(x, prepared_params, num_heads, *, block_b=None,
                    compute_dtype=jnp.bfloat16):
    # Encoder.forward: ln(layers(dropout(input))) -- dropout is identity (eval).
    # The final ln is fused into the last block's kernel epilogue.
    B, S, D = x.shape
    layers = prepared_params["layers"]
    assert len(layers) >= 1

    # Pad S once for the whole stack (sublane alignment); padded keys are masked
    # inside the kernel and padded rows are sliced off at the end.
    s_pad = ((S + 7) // 8) * 8
    h = x if s_pad == S else jnp.pad(x, ((0, 0), (0, s_pad - S), (0, 0)))

    if block_b is None:
        block_b = _auto_block_b(B, s_pad)

    # TODO(synk): on v5e/v6e, fuse two layers per pallas_call (or add a P10
    # cross-call weight-prefetch future) to hide the per-layer weight DMA.
    for li, p in enumerate(layers):
        is_last = li == len(layers) - 1
        h = encoder_block_forward(
            h, p, num_heads, s_orig=S, block_b=block_b,
            final_ln=(prepared_params["ln_w"], prepared_params["ln_b"]) if is_last else None,
            out_dtype=(x.dtype if is_last else jnp.bfloat16),   # bf16 residual stream
            compute_dtype=compute_dtype)

    if s_pad != S:
        h = h[:, :S, :]
    return h


# ----------------------------- parameter handling -----------------------------

def _xavier_uniform(key, shape):
    fan_out, fan_in = shape
    limit = math.sqrt(6.0 / (fan_in + fan_out))
    return jax.random.uniform(key, shape, jnp.float32, -limit, limit)


def init_encoder_params(key, num_layers, hidden_dim, mlp_dim):
    # PyTorch conventions: nn.Linear weights are (out, in).
    D, M = hidden_dim, mlp_dim
    layers = []
    for _ in range(num_layers):
        key, k1, k2, k3, k4, k5, k6 = jax.random.split(key, 7)
        layers.append(dict(
            ln1_w=jnp.ones((1, D), jnp.float32),
            ln1_b=jnp.zeros((1, D), jnp.float32),
            wqkv=_xavier_uniform(k1, (3 * D, D)),
            bqkv=jnp.zeros((1, 3 * D), jnp.float32),
            wo=_xavier_uniform(k2, (D, D)),
            bo=jnp.zeros((1, D), jnp.float32),
            ln2_w=jnp.ones((1, D), jnp.float32),
            ln2_b=jnp.zeros((1, D), jnp.float32),
            w1=_xavier_uniform(k3, (M, D)),
            b1=1e-6 * jax.random.normal(k4, (1, M), jnp.float32),
            w2=_xavier_uniform(k5, (D, M)),
            b2=1e-6 * jax.random.normal(k6, (1, D), jnp.float32),
        ))
    return dict(layers=layers,
                ln_w=jnp.ones((1, D), jnp.float32),
                ln_b=jnp.zeros((1, D), jnp.float32))


def prepare_params(params, num_heads, compute_dtype=jnp.bfloat16):
    """Pre-transpose weights to (in, out), fold the 1/sqrt(hd) attention scale
    into the Q rows of the qkv projection, and cast matmul operands to the MXU
    compute dtype once, outside the kernel.  Biases and LN params stay f32."""
    def prep_layer(p):
        D = p["wqkv"].shape[1]
        hd = D // num_heads
        scale = 1.0 / math.sqrt(hd)
        wqkv_t = p["wqkv"].T.astype(jnp.float32)
        wqkv_t = wqkv_t.at[:, :D].multiply(scale)
        bqkv = p["bqkv"].astype(jnp.float32).at[:, :D].multiply(scale)
        return dict(
            ln1_w=p["ln1_w"].astype(jnp.float32), ln1_b=p["ln1_b"].astype(jnp.float32),
            wqkv_t=wqkv_t.astype(compute_dtype), bqkv=bqkv,
            wo_t=p["wo"].T.astype(compute_dtype), bo=p["bo"].astype(jnp.float32),
            ln2_w=p["ln2_w"].astype(jnp.float32), ln2_b=p["ln2_b"].astype(jnp.float32),
            w1_t=p["w1"].T.astype(compute_dtype), b1=p["b1"].astype(jnp.float32),
            w2_t=p["w2"].T.astype(compute_dtype), b2=p["b2"].astype(jnp.float32),
        )
    return dict(layers=[prep_layer(p) for p in params["layers"]],
                ln_w=params["ln_w"].astype(jnp.float32),
                ln_b=params["ln_b"].astype(jnp.float32))


# ------------------------------------ main -------------------------------------

if __name__ == "__main__":
    # Small, lane/sublane-aligned config consistent with
    # Encoder(num_layers, num_heads, hidden_dim, mlp_dim, ...)
    B, S, D = 2, 16, 128
    NUM_LAYERS, NUM_HEADS, MLP_DIM = 2, 4, 256

    key = jax.random.PRNGKey(0)
    key, kx, kp = jax.random.split(key, 3)
    x = jax.random.normal(kx, (B, S, D), jnp.float32)

    params = init_encoder_params(kp, NUM_LAYERS, D, MLP_DIM)
    prepped = prepare_params(params, NUM_HEADS, compute_dtype=jnp.bfloat16)

    # TODO(synk): key_padding_mask (mask != None) path is not implemented; only the
    # unmasked forward is reproduced, matching mask=None in the reference.
    out = encoder_forward(x, prepped, NUM_HEADS)
    jax.block_until_ready(out)
    assert out.shape == (B, S, D) and out.dtype == jnp.float32
    assert bool(jnp.isfinite(out).all())
    print("KERNEL_OK")
</pallas_src>

<mosaic_0001>
module attributes {stable_mosaic.version = 11 : i64} {
  func.func @_probe(%arg0: i32, %arg1: memref<8x128xf32, #tpu.memory_space<vmem>>, %arg2: memref<8x128xf32, #tpu.memory_space<vmem>>) attributes {dimension_semantics = [#tpu.dimension_semantics<arbitrary>], iteration_bounds = array<i64: 1>, scalar_prefetch = 0 : i64, scratch_operands = 0 : i64, tpu.core_type = #tpu.core_type<tc>, window_params = [{pipeline_mode = #tpu.pipeline_mode<synchronous>, transform_indices = @transform_0, window_bounds = array<i64: 8, 128>}, {pipeline_mode = #tpu.pipeline_mode<synchronous>, transform_indices = @transform_1, window_bounds = array<i64: 8, 128>}]} {
    %c0 = arith.constant 0 : index
    %c0_0 = arith.constant 0 : index
    %0 = vector.load %arg1[%c0, %c0_0] : memref<8x128xf32, #tpu.memory_space<vmem>>, vector<8x128xf32>
    %c0_1 = arith.constant 0 : index
    %c0_2 = arith.constant 0 : index
    %1 = vector.load %arg2[%c0_1, %c0_2] : memref<8x128xf32, #tpu.memory_space<vmem>>, vector<8x128xf32>
    tpu.vector_store %arg2[%c0_1, %c0_2], %0 {strides = array<i32>} : memref<8x128xf32, #tpu.memory_space<vmem>>, vector<8x128xf32>,
    return
  }
  func.func @transform_0(%arg0: i32) -> (i32, i32) {
    %c0_i32 = arith.constant 0 : i32
    %c0_i32_0 = arith.constant 0 : i32
    %c0_i32_1 = arith.constant 0 : i32
    return %c0_i32, %c0_i32_0 : i32, i32
  }
  func.func @transform_1(%arg0: i32) -> (i32, i32) {
    %c0_i32 = arith.constant 0 : i32
    %c0_i32_0 = arith.constant 0 : i32
    %c0_i32_1 = arith.constant 0 : i32
    return %c0_i32, %c0_i32_0 : i32, i32
  }
}

module attributes {stable_mosaic.version = 11 : i64} {
  func.func @encoder_block_kernel(%arg0: i32, %arg1: memref<1x16x128xf32, #tpu.memory_space<vmem>>, %arg2: memref<1x128xf32, #tpu.memory_space<vmem>>, %arg3: memref<1x128xf32, #tpu.memory_space<vmem>>, %arg4: memref<128x384xbf16, #tpu.memory_space<vmem>>, %arg5: memref<1x384xf32, #tpu.memory_space<vmem>>, %arg6: memref<128x128xbf16, #tpu.memory_space<vmem>>, %arg7: memref<1x128xf32, #tpu.memory_space<vmem>>, %arg8: memref<1x128xf32, #tpu.memory_space<vmem>>, %arg9: memref<1x128xf32, #tpu.memory_space<vmem>>, %arg10: memref<128x256xbf16, #tpu.memory_space<vmem>>, %arg11: memref<1x256xf32, #tpu.memory_space<vmem>>, %arg12: memref<256x128xbf16, #tpu.memory_space<vmem>>, %arg13: memref<1x128xf32, #tpu.memory_space<vmem>>, %arg14: memref<1x16x128xbf16, #tpu.memory_space<vmem>>) attributes {dimension_semantics = [#tpu.dimension_semantics<parallel>], iteration_bounds = array<i64: 2>, scalar_prefetch = 0 : i64, scratch_operands = 0 : i64, tpu.core_type = #tpu.core_type<tc>, window_params = [{transform_indices = @transform_0, window_bounds = array<i64: 1, 16, 128>}, {pipeline_mode = #tpu.pipeline_mode<synchronous>, transform_indices = @transform_1, window_bounds = array<i64: 1, 128>}, {pipeline_mode = #tpu.pipeline_mode<synchronous>, transform_indices = @transform_2, window_bounds = array<i64: 1, 128>}, {pipeline_mode = #tpu.pipeline_mode<synchronous>, transform_indices = @transform_3, window_bounds = array<i64: 128, 384>}, {pipeline_mode = #tpu.pipeline_mode<synchronous>, transform_indices = @transform_4, window_bounds = array<i64: 1, 384>}, {pipeline_mode = #tpu.pipeline_mode<synchronous>, transform_indices = @transform_5, window_bounds = array<i64: 128, 128>}, {pipeline_mode = #tpu.pipeline_mode<synchronous>, transform_indices = @transform_6, window_bounds = array<i64: 1, 128>}, {pipeline_mode = #tpu.pipeline_mode<synchronous>, transform_indices = @transform_7, window_bounds = array<i64: 1, 128>}, {pipeline_mode = #tpu.pipeline_mode<synchronous>, transform_indices = @transform_8, window_bounds = array<i64: 1, 128>}, {pipeline_mode = #tpu.pipeline_mode<synchronous>, transform_indices = @transform_9, window_bounds = array<i64: 128, 256>}, {pipeline_mode = #tpu.pipeline_mode<synchronous>, transform_indices = @transform_10, window_bounds = array<i64: 1, 256>}, {pipeline_mode = #tpu.pipeline_mode<synchronous>, transform_indices = @transform_11, window_bounds = array<i64: 256, 128>}, {pipeline_mode = #tpu.pipeline_mode<synchronous>, transform_indices = @transform_12, window_bounds = array<i64: 1, 128>}, {transform_indices = @transform_13, window_bounds = array<i64: 1, 16, 128>}]} {
    %c0 = arith.constant 0 : index
    %c0_0 = arith.constant 0 : index
    %c0_1 = arith.constant 0 : index
    %0 = vector.load %arg1[%c0, %c0_0, %c0_1] : memref<1x16x128xf32, #tpu.memory_space<vmem>>, vector<1x16x128xf32>
    %1 = vector.shape_cast %0 : vector<1x16x128xf32> to vector<16x128xf32>
    %c0_2 = arith.constant 0 : index
    %c0_3 = arith.constant 0 : index
    %2 = vector.load %arg2[%c0_2, %c0_3] : memref<1x128xf32, #tpu.memory_space<vmem>>, vector<1x128xf32>
    %c0_4 = arith.constant 0 : index
    %c0_5 = arith.constant 0 : index
    %3 = vector.load %arg3[%c0_4, %c0_5] : memref<1x128xf32, #tpu.memory_space<vmem>>, vector<1x128xf32>
    %cst = arith.constant dense<0.000000e+00> : vector<16xf32>
    %4 = vector.multi_reduction <add>, %1, %cst [1] : vector<16x128xf32> to vector<16xf32>
    %5 = vector.shape_cast %4 : vector<16xf32> to vector<16x1xf32>
    %cst_6 = arith.constant 1.280000e+02 : f32
    %6 = vector.broadcast %cst_6 : f32 to vector<16x1xf32>
    %7 = arith.divf %5, %6 : vector<16x1xf32>
    %8 = vector.broadcast %7 : vector<16x1xf32> to vector<16x128xf32>
    %9 = arith.subf %1, %8 : vector<16x128xf32>
    %10 = arith.mulf %9, %9 : vector<16x128xf32>
    %cst_7 = arith.constant dense<0.000000e+00> : vector<16xf32>
    %11 = vector.multi_reduction <add>, %10, %cst_7 [1] : vector<16x128xf32> to vector<16xf32>
    %12 = vector.shape_cast %11 : vector<16xf32> to vector<16x1xf32>
    %cst_8 = arith.constant 1.280000e+02 : f32
    %13 = vector.broadcast %cst_8 : f32 to vector<16x1xf32>
    %14 = arith.divf %12, %13 : vector<16x1xf32>
    %15 = vector.broadcast %7 : vector<16x1xf32> to vector<16x128xf32>
    %16 = arith.subf %1, %15 : vector<16x128xf32>
    %cst_9 = arith.constant 9.99999997E-7 : f32
    %17 = vector.broadcast %cst_9 : f32 to vector<16x1xf32>
    %18 = arith.addf %14, %17 : vector<16x1xf32>
    %19 = math.rsqrt %18 : vector<16x1xf32>
    %20 = vector.broadcast %19 : vector<16x1xf32> to vector<16x128xf32>
    %21 = arith.mulf %16, %20 : vector<16x128xf32>
    %22 = vector.broadcast %2 : vector<1x128xf32> to vector<16x128xf32>
    %23 = arith.mulf %21, %22 : vector<16x128xf32>
    %24 = vector.broadcast %3 : vector<1x128xf32> to vector<16x128xf32>
    %25 = arith.addf %23, %24 : vector<16x128xf32>
    %c0_10 = arith.constant 0 : index
    %c0_11 = arith.constant 0 : index
    %26 = vector.load %arg4[%c0_10, %c0_11] : memref<128x384xbf16, #tpu.memory_space<vmem>>, vector<128x384xbf16>
    %27 = arith.truncf %25 : vector<16x128xf32> to vector<16x128xbf16>
    %cst_12 = arith.constant dense<0.000000e+00> : vector<16x384xf32>
    %28 = tpu.matmul %27, %26, %cst_12 {dimension_numbers = #tpu.dot_dimension_numbers<[1], [0], [0], [1], [0, 0, 1, 1], [], []>} : vector<16x128xbf16>, vector<128x384xbf16>, vector<16x384xf32> -> vector<16x384xf32>
    %c0_13 = arith.constant 0 : index
    %c0_14 = arith.constant 0 : index
    %29 = vector.load %arg5[%c0_13, %c0_14] : memref<1x384xf32, #tpu.memory_space<vmem>>, vector<1x384xf32>
    %30 = vector.broadcast %29 : vector<1x384xf32> to vector<16x384xf32>
    %31 = arith.addf %28, %30 : vector<16x384xf32>
    %32 = vector.extract_strided_slice %31 {offsets = [0, 0], sizes = [16, 128], strides = [1, 1]} : vector<16x384xf32> to vector<16x128xf32>
    %33 = vector.shape_cast %32 : vector<16x128xf32> to vector<1x16x4x32xf32>
    %34 = tpu.transpose %33, [0, 2, 1, 3] : vector<1x16x4x32xf32> -> vector<1x4x16x32xf32>
    %35 = vector.shape_cast %34 : vector<1x4x16x32xf32> to vector<4x16x32xf32>
    %36 = arith.truncf %35 : vector<4x16x32xf32> to vector<4x16x32xbf16>
    %37 = vector.extract_strided_slice %31 {offsets = [0, 128], sizes = [16, 128], strides = [1, 1]} : vector<16x384xf32> to vector<16x128xf32>
    %38 = vector.shape_cast %37 : vector<16x128xf32> to vector<1x16x4x32xf32>
    %39 = tpu.transpose %38, [0, 2, 1, 3] : vector<1x16x4x32xf32> -> vector<1x4x16x32xf32>
    %40 = vector.shape_cast %39 : vector<1x4x16x32xf32> to vector<4x16x32xf32>
    %41 = arith.truncf %40 : vector<4x16x32xf32> to vector<4x16x32xbf16>
    %42 = vector.extract_strided_slice %31 {offsets = [0, 256], sizes = [16, 128], strides = [1, 1]} : vector<16x384xf32> to vector<16x128xf32>
    %43 = vector.shape_cast %42 : vector<16x128xf32> to vector<1x16x4x32xf32>
    %44 = tpu.transpose %43, [0, 2, 1, 3] : vector<1x16x4x32xf32> -> vector<1x4x16x32xf32>
    %45 = vector.shape_cast %44 : vector<1x4x16x32xf32> to vector<4x16x32xf32>
    %46 = arith.truncf %45 : vector<4x16x32xf32> to vector<4x16x32xbf16>
    %cst_15 = arith.constant dense<0.000000e+00> : vector<4x16x16xf32>
    %47 = tpu.matmul %36, %41, %cst_15 {dimension_numbers = #tpu.dot_dimension_numbers<[2], [2], [1], [1], [0, 0, 0, 1, 1, 1], [0], [0]>} : vector<4x16x32xbf16>, vector<4x16x32xbf16>, vector<4x16x16xf32> -> vector<4x16x16xf32>
    %cst_16 = arith.constant dense<0xFF800000> : vector<4x16xf32>
    %48 = vector.multi_reduction <maximumf>, %47, %cst_16 [2] : vector<4x16x16xf32> to vector<4x16xf32>
    %49 = vector.shape_cast %48 : vector<4x16xf32> to vector<4x16x1xf32>
    %50 = vector.broadcast %49 : vector<4x16x1xf32> to vector<4x16x16xf32>
    %51 = arith.subf %47, %50 : vector<4x16x16xf32>
    %52 = math.exp %51 : vector<4x16x16xf32>
    %cst_17 = arith.constant dense<0.000000e+00> : vector<4x16xf32>
    %53 = vector.multi_reduction <add>, %52, %cst_17 [2] : vector<4x16x16xf32> to vector<4x16xf32>
    %54 = vector.shape_cast %53 : vector<4x16xf32> to vector<4x16x1xf32>
    %55 = tpu.reciprocal %54 {approx = true} : vector<4x16x1xf32> -> vector<4x16x1xf32>
    %56 = vector.broadcast %55 : vector<4x16x1xf32> to vector<4x16x16xf32>
    %57 = arith.mulf %52, %56 : vector<4x16x16xf32>
    %58 = arith.truncf %57 : vector<4x16x16xf32> to vector<4x16x16xbf16>
    %cst_18 = arith.constant dense<0.000000e+00> : vector<4x16x32xf32>
    %59 = tpu.matmul %58, %46, %cst_18 {dimension_numbers = #tpu.dot_dimension_numbers<[2], [1], [1], [2], [0, 0, 0, 1, 1, 2], [0], [0]>} : vector<4x16x16xbf16>, vector<4x16x32xbf16>, vector<4x16x32xf32> -> vector<4x16x32xf32>
    %60 = vector.shape_cast %59 : vector<4x16x32xf32> to vector<1x4x16x32xf32>
    %61 = tpu.transpose %60, [0, 2, 1, 3] : vector<1x4x16x32xf32> -> vector<1x16x4x32xf32>
    %62 = vector.shape_cast %61 : vector<1x16x4x32xf32> to vector<16x128xf32>
    %c0_19 = arith.constant 0 : index
    %c0_20 = arith.constant 0 : index
    %63 = vector.load %arg6[%c0_19, %c0_20] : memref<128x128xbf16, #tpu.memory_space<vmem>>, vector<128x128xbf16>
    %64 = arith.truncf %62 : vector<16x128xf32> to vector<16x128xbf16>
    %cst_21 = arith.constant dense<0.000000e+00> : vector<16x128xf32>
    %65 = tpu.matmul %64, %63, %cst_21 {dimension_numbers = #tpu.dot_dimension_numbers<[1], [0], [0], [1], [0, 0, 1, 1], [], []>} : vector<16x128xbf16>, vector<128x128xbf16>, vector<16x128xf32> -> vector<16x128xf32>
    %c0_22 = arith.constant 0 : index
    %c0_23 = arith.constant 0 : index
    %66 = vector.load %arg7[%c0_22, %c0_23] : memref<1x128xf32, #tpu.memory_space<vmem>>, vector<1x128xf32>
    %67 = vector.broadcast %66 : vector<1x128xf32> to vector<16x128xf32>
    %68 = arith.addf %65, %67 : vector<16x128xf32>
    %69 = arith.addf %1, %68 : vector<16x128xf32>
    %c0_24 = arith.constant 0 : index
    %c0_25 = arith.constant 0 : index
    %70 = vector.load %arg8[%c0_24, %c0_25] : memref<1x128xf32, #tpu.memory_space<vmem>>, vector<1x128xf32>
    %c0_26 = arith.constant 0 : index
    %c0_27 = arith.constant 0 : index
    %71 = vector.load %arg9[%c0_26, %c0_27] : memref<1x128xf32, #tpu.memory_space<vmem>>, vector<1x128xf32>
    %cst_28 = arith.constant dense<0.000000e+00> : vector<16xf32>
    %72 = vector.multi_reduction <add>, %69, %cst_28 [1] : vector<16x128xf32> to vector<16xf32>
    %73 = vector.shape_cast %72 : vector<16xf32> to vector<16x1xf32>
    %cst_29 = arith.constant 1.280000e+02 : f32
    %74 = vector.broadcast %cst_29 : f32 to vector<16x1xf32>
    %75 = arith.divf %73, %74 : vector<16x1xf32>
    %76 = vector.broadcast %75 : vector<16x1xf32> to vector<16x128xf32>
    %77 = arith.subf %69, %76 : vector<16x128xf32>
    %78 = arith.mulf %77, %77 : vector<16x128xf32>
    %cst_30 = arith.constant dense<0.000000e+00> : vector<16xf32>
    %79 = vector.multi_reduction <add>, %78, %cst_30 [1] : vector<16x128xf32> to vector<16xf32>
    %80 = vector.shape_cast %79 : vector<16xf32> to vector<16x1xf32>
    %cst_31 = arith.constant 1.280000e+02 : f32
    %81 = vector.broadcast %cst_31 : f32 to vector<16x1xf32>
    %82 = arith.divf %80, %81 : vector<16x1xf32>
    %83 = vector.broadcast %75 : vector<16x1xf32> to vector<16x128xf32>
    %84 = arith.subf %69, %83 : vector<16x128xf32>
    %cst_32 = arith.constant 9.99999997E-7 : f32
    %85 = vector.broadcast %cst_32 : f32 to vector<16x1xf32>
    %86 = arith.addf %82, %85 : vector<16x1xf32>
    %87 = math.rsqrt %86 : vector<16x1xf32>
    %88 = vector.broadcast %87 : vector<16x1xf32> to vector<16x128xf32>
    %89 = arith.mulf %84, %88 : vector<16x128xf32>
    %90 = vector.broadcast %70 : vector<1x128xf32> to vector<16x128xf32>
    %91 = arith.mulf %89, %90 : vector<16x128xf32>
    %92 = vector.broadcast %71 : vector<1x128xf32> to vector<16x128xf32>
    %93 = arith.addf %91, %92 : vector<16x128xf32>
    %c0_33 = arith.constant 0 : index
    %c0_34 = arith.constant 0 : index
    %94 = vector.load %arg10[%c0_33, %c0_34] : memref<128x256xbf16, #tpu.memory_space<vmem>>, vector<128x256xbf16>
    %95 = arith.truncf %93 : vector<16x128xf32> to vector<16x128xbf16>
    %cst_35 = arith.constant dense<0.000000e+00> : vector<16x256xf32>
    %96 = tpu.matmul %95, %94, %cst_35 {dimension_numbers = #tpu.dot_dimension_numbers<[1], [0], [0], [1], [0, 0, 1, 1], [], []>} : vector<16x128xbf16>, vector<128x256xbf16>, vector<16x256xf32> -> vector<16x256xf32>
    %c0_36 = arith.constant 0 : index
    %c0_37 = arith.constant 0 : index
    %97 = vector.load %arg11[%c0_36, %c0_37] : memref<1x256xf32, #tpu.memory_space<vmem>>, vector<1x256xf32>
    %98 = vector.broadcast %97 : vector<1x256xf32> to vector<16x256xf32>
    %99 = arith.addf %96, %98 : vector<16x256xf32>
    %cst_38 = arith.constant 5.000000e-01 : f32
    %100 = vector.broadcast %cst_38 : f32 to vector<16x256xf32>
    %101 = arith.mulf %100, %99 : vector<16x256xf32>
    %cst_39 = arith.constant 0.707106769 : f32
    %102 = vector.broadcast %cst_39 : f32 to vector<16x256xf32>
    %103 = arith.mulf %99, %102 : vector<16x256xf32>
    %104 = math.erf %103 : vector<16x256xf32>
    %cst_40 = arith.constant 1.000000e+00 : f32
    %105 = vector.broadcast %cst_40 : f32 to vector<16x256xf32>
    %106 = arith.addf %105, %104 : vector<16x256xf32>
    %107 = arith.mulf %101, %106 : vector<16x256xf32>
    %c0_41 = arith.constant 0 : index
    %c0_42 = arith.constant 0 : index
    %108 = vector.load %arg12[%c0_41, %c0_42] : memref<256x128xbf16, #tpu.memory_space<vmem>>, vector<256x128xbf16>
    %109 = arith.truncf %107 : vector<16x256xf32> to vector<16x256xbf16>
    %cst_43 = arith.constant dense<0.000000e+00> : vector<16x128xf32>
    %110 = tpu.matmul %109, %108, %cst_43 {dimension_numbers = #tpu.dot_dimension_numbers<[1], [0], [0], [1], [0, 0, 1, 1], [], []>} : vector<16x256xbf16>, vector<256x128xbf16>, vector<16x128xf32> -> vector<16x128xf32>
    %c0_44 = arith.constant 0 : index
    %c0_45 = arith.constant 0 : index
    %111 = vector.load %arg13[%c0_44, %c0_45] : memref<1x128xf32, #tpu.memory_space<vmem>>, vector<1x128xf32>
    %112 = vector.broadcast %111 : vector<1x128xf32> to vector<16x128xf32>
    %113 = arith.addf %110, %112 : vector<16x128xf32>
    %114 = arith.addf %69, %113 : vector<16x128xf32>
    %115 = vector.shape_cast %114 : vector<16x128xf32> to vector<1x16x128xf32>
    %116 = arith.truncf %115 : vector<1x16x128xf32> to vector<1x16x128xbf16>
    %c0_46 = arith.constant 0 : index
    %c0_47 = arith.constant 0 : index
    %c0_48 = arith.constant 0 : index
    %117 = vector.load %arg14[%c0_46, %c0_47, %c0_48] : memref<1x16x128xbf16, #tpu.memory_space<vmem>>, vector<1x16x128xbf16>
    tpu.vector_store %arg14[%c0_46, %c0_47, %c0_48], %116 {strides = array<i32>} : memref<1x16x128xbf16, #tpu.memory_space<vmem>>, vector<1x16x128xbf16>,
    return
  }
  func.func @transform_0(%arg0: i32) -> (i32, i32, i32) {
    %c0_i32 = arith.constant 0 : i32
    %c0_i32_0 = arith.constant 0 : i32
    %c0_i32_1 = arith.constant 0 : i32
    return %arg0, %c0_i32, %c0_i32_0 : i32, i32, i32
  }
  func.func @transform_1(%arg0: i32) -> (i32, i32) {
    %c0_i32 = arith.constant 0 : i32
    %c0_i32_0 = arith.constant 0 : i32
    %c0_i32_1 = arith.constant 0 : i32
    return %c0_i32, %c0_i32_0 : i32, i32
  }
  func.func @transform_2(%arg0: i32) -> (i32, i32) {
    %c0_i32 = arith.constant 0 : i32
    %c0_i32_0 = arith.constant 0 : i32
    %c0_i32_1 = arith.constant 0 : i32
    return %c0_i32, %c0_i32_0 : i32, i32
  }
  func.func @transform_3(%arg0: i32) -> (i32, i32) {
    %c0_i32 = arith.constant 0 : i32
    %c0_i32_0 = arith.constant 0 : i32
    %c0_i32_1 = arith.constant 0 : i32
    return %c0_i32, %c0_i32_0 : i32, i32
  }
  func.func @transform_4(%arg0: i32) -> (i32, i32) {
    %c0_i32 = arith.constant 0 : i32
    %c0_i32_0 = arith.constant 0 : i32
    %c0_i32_1 = arith.constant 0 : i32
    return %c0_i32, %c0_i32_0 : i32, i32
  }
  func.func @transform_5(%arg0: i32) -> (i32, i32) {
    %c0_i32 = arith.constant 0 : i32
    %c0_i32_0 = arith.constant 0 : i32
    %c0_i32_1 = arith.constant 0 : i32
    return %c0_i32, %c0_i32_0 : i32, i32
  }
  func.func @transform_6(%arg0: i32) -> (i32, i32) {
    %c0_i32 = arith.constant 0 : i32
    %c0_i32_0 = arith.constant 0 : i32
    %c0_i32_1 = arith.constant 0 : i32
    return %c0_i32, %c0_i32_0 : i32, i32
  }
  func.func @transform_7(%arg0: i32) -> (i32, i32) {
    %c0_i32 = arith.constant 0 : i32
    %c0_i32_0 = arith.constant 0 : i32
    %c0_i32_1 = arith.constant 0 : i32
    return %c0_i32, %c0_i32_0 : i32, i32
  }
  func.func @transform_8(%arg0: i32) -> (i32, i32) {
    %c0_i32 = arith.constant 0 : i32
    %c0_i32_0 = arith.constant 0 : i32
    %c0_i32_1 = arith.constant 0 : i32
    return %c0_i32, %c0_i32_0 : i32, i32
  }
  func.func @transform_9(%arg0: i32) -> (i32, i32) {
    %c0_i32 = arith.constant 0 : i32
    %c0_i32_0 = arith.constant 0 : i32
    %c0_i32_1 = arith.constant 0 : i32
    return %c0_i32, %c0_i32_0 : i32, i32
  }
  func.func @transform_10(%arg0: i32) -> (i32, i32) {
    %c0_i32 = arith.constant 0 : i32
    %c0_i32_0 = arith.constant 0 : i32
    %c0_i32_1 = arith.constant 0 : i32
    return %c0_i32, %c0_i32_0 : i32, i32
  }
  func.func @transform_11(%arg0: i32) -> (i32, i32) {
    %c0_i32 = arith.constant 0 : i32
    %c0_i32_0 = arith.constant 0 : i32
    %c0_i32_1 = arith.constant 0 : i32
    return %c0_i32, %c0_i32_0 : i32, i32
  }
  func.func @transform_12(%arg0: i32) -> (i32, i32) {
    %c0_i32 = arith.constant 0 : i32
    %c0_i32_0 = arith.constant 0 : i32
    %c0_i32_1 = arith.constant 0 : i32
    return %c0_i32, %c0_i32_0 : i32, i32
  }
  func.func @transform_13(%arg0: i32) -> (i32, i32, i32) {
    %c0_i32 = arith.constant 0 : i32
    %c0_i32_0 = arith.constant 0 : i32
    %c0_i32_1 = arith.constant 0 : i32
    return %arg0, %c0_i32, %c0_i32_0 : i32, i32, i32
  }
}

</mosaic_0001>

<llo_original>
// kernel: tpu_custom_call.1
$region0: #{tpu_custom_call.1}
  #allocation0 [shape = 'u32[]', space=smem, size = 0x4, offset = 0x4, fixed_abs, tag = 'smem constant byte address 0x4 - core index']
  #allocation1 [shape = 'u32[144,128]{1,0:T(1,128)}', space=vmem, size = 0x12000, scoped, tag = 'internal scratch']
  %s0 = inlined_call_operand.hbm [shape: f32[8,128], index: 0, kind: input, shape index: {}]
  %s1 = inlined_call_operand.hbm [shape: f32[8,128], index: 1, kind: output, shape index: {}]
  %s2 = sld [smem:[#allocation0]]
  $region18: #{tpu_custom_call.1} parent=0
    _
  %s4 = ssub.s32 1, %s2
  %s5 = scalar_select 0, %s4, %s2
  $region1: #{tpu_custom_call.1} parent=0
    #allocation2 [shape = 'u8[4096]{0}', space=vmem, size = 0x1000, scoped, tag = 'input window, operand 0, single buffered']
    #allocation3 [shape = 's32[1]{0}', space=sflag, size = 0x4, scoped, tag = 'scoped memory for tpu_custom_call.1']
    #allocation4 [shape = 's32[1]{0}', space=sflag, size = 0x4, scoped, tag = 'scoped memory for tpu_custom_call.1']
    #allocation5 [shape = 'u8[4096]{0}', space=vmem, size = 0x1000, scoped, tag = 'output window, operand 0, single buffered']
    %6 = vsyncpa [#allocation3], 0
    %7 = vsyncpa [#allocation4], 0
    // Predicated region
    $region2: #{tpu_custom_call.1} parent=1 // pred_check
      _
    $region3: #{tpu_custom_call.1} parent=1 // pred_check_branch
      %9 = sbr.rel (0) target = $region5
    $region4: #{tpu_custom_call.1} parent=1 // pred_region
      %s11 = ssub.s32 128, 128
      %12 = vsyncadd [#allocation3], %s11
      %s14 = sshll.u32 [#allocation2], 4
      %s15 = int_to_ptr.vmem [resolvable:$true] %s14
      %17 = dma.hbm_to_vmem [thread:$0]  %s0, 128, %s15, [#allocation3]
    $region5: #{tpu_custom_call.1} parent=1 // pred_fallthru
      _
    // Predicated region
    $region6: #{tpu_custom_call.1} parent=1 // pred_check
      _
    $region7: #{tpu_custom_call.1} parent=1 // pred_check_branch
      %19 = sbr.rel (0) target = $region9
    $region8: #{tpu_custom_call.1} parent=1 // pred_region
      %20 = dma.done [#allocation3], 128
    $region9: #{tpu_custom_call.1} parent=1 // pred_fallthru
      _
    %v21 = vld [vmem:[#allocation2] sm:$0xff]
    %22 = vst [vmem:[#allocation5] sm:$0xff] %v21
    // Predicated region
    $region10: #{tpu_custom_call.1} parent=1 // pred_check
      _
    $region11: #{tpu_custom_call.1} parent=1 // pred_check_branch
      %24 = sbr.rel (0) target = $region13
    $region12: #{tpu_custom_call.1} parent=1 // pred_region
      %s26 = ssub.s32 128, 128
      %27 = vsyncadd [#allocation4], %s26
      %s29 = sshll.u32 [#allocation5], 4
      %s30 = int_to_ptr.vmem [resolvable:$true] %s29
      %32 = dma.vmem_to_hbm [thread:$0]  %s30, 128, %s1, [#allocation4]
    $region13: #{tpu_custom_call.1} parent=1 // pred_fallthru
      _
    // Predicated region
    $region14: #{tpu_custom_call.1} parent=1 // pred_check
      _
    $region15: #{tpu_custom_call.1} parent=1 // pred_check_branch
      %34 = sbr.rel (0) target = $region17
    $region16: #{tpu_custom_call.1} parent=1 // pred_region
      %35 = dma.done [#allocation4], 128
    $region17: #{tpu_custom_call.1} parent=1 // pred_fallthru
      _
    %36 = vsyncpa [#allocation3], 1
    %37 = vsyncpa [#allocation4], 1

// kernel: tpu_custom_call.1
$region0: #{tpu_custom_call.1}
  #allocation0 [shape = 'u32[]', space=smem, size = 0x4, offset = 0x4, fixed_abs, tag = 'smem constant byte address 0x4 - core index']
  #allocation1 [shape = 'u32[144,128]{1,0:T(1,128)}', space=vmem, size = 0x12000, scoped, tag = 'internal scratch']
  %s0 = inlined_call_operand.hbm [shape: f32[2,16,128], index: 0, kind: input, shape index: {}]
  %s1 = inlined_call_operand.vmem [shape: f32[1,128], index: 1, kind: input, shape index: {}]
  %s2 = inlined_call_operand.vmem [shape: f32[1,128], index: 2, kind: input, shape index: {}]
  %s3 = inlined_call_operand.hbm [shape: bf16[128,384], index: 3, kind: input, shape index: {}]
  %s4 = inlined_call_operand.vmem [shape: f32[1,384], index: 4, kind: input, shape index: {}]
  %s5 = inlined_call_operand.hbm [shape: bf16[128,128], index: 5, kind: input, shape index: {}]
  %s6 = inlined_call_operand.vmem [shape: f32[1,128], index: 6, kind: input, shape index: {}]
  %s7 = inlined_call_operand.vmem [shape: f32[1,128], index: 7, kind: input, shape index: {}]
  %s8 = inlined_call_operand.vmem [shape: f32[1,128], index: 8, kind: input, shape index: {}]
  %s9 = inlined_call_operand.hbm [shape: bf16[128,256], index: 9, kind: input, shape index: {}]
  %s10 = inlined_call_operand.vmem [shape: f32[1,256], index: 10, kind: input, shape index: {}]
  %s11 = inlined_call_operand.hbm [shape: bf16[256,128], index: 11, kind: input, shape index: {}]
  %s12 = inlined_call_operand.vmem [shape: f32[1,128], index: 12, kind: input, shape index: {}]
  %s13 = inlined_call_operand.hbm [shape: bf16[2,16,128], index: 13, kind: output, shape index: {}]
  %s14 = sld [smem:[#allocation0]]
  $region105: #{tpu_custom_call.1} parent=0
    _
  %s16 = ssub.s32 1, %s14
  %s17 = scalar_select 0, %s16, %s14
  $region1: #{tpu_custom_call.1} parent=0
    #allocation2 [shape = 'u8[16384]{0}', space=vmem, size = 0x4000, scoped, tag = 'input window, operand 0']
    #allocation3 [shape = 's32[2]{0}', space=sflag, size = 0x8, scoped, tag = 'scoped memory for tpu_custom_call.1']
    #allocation4 [shape = 's32[2]{0}', space=sflag, size = 0x8, scoped, tag = 'scoped memory for tpu_custom_call.1']
    #allocation5 [shape = 'u8[98304]{0}', space=vmem, size = 0x18000, scoped, tag = 'input window, operand 3, single buffered']
    #allocation6 [shape = 's32[1]{0}', space=sflag, size = 0x4, scoped, tag = 'scoped memory for tpu_custom_call.1']
    #allocation7 [shape = 'u8[32768]{0}', space=vmem, size = 0x8000, scoped, tag = 'input window, operand 5, single buffered']
    #allocation8 [shape = 'u8[65536]{0}', space=vmem, size = 0x10000, scoped, tag = 'input window, operand 9, single buffered']
    #allocation9 [shape = 's32[1]{0}', space=sflag, size = 0x4, scoped, tag = 'scoped memory for tpu_custom_call.1']
    #allocation10 [shape = 'u8[65536]{0}', space=vmem, size = 0x10000, scoped, tag = 'input window, operand 11, single buffered']
    #allocation11 [shape = 'u8[8192]{0}', space=vmem, size = 0x2000, scoped, tag = 'output window, operand 0']
    %18 = vsyncpa [#allocation3], 0
    %s19 = scalar_lea.sflag [#allocation3], 1
    %20 = vsyncpa %s19, 0
    %21 = vsyncpa [#allocation6], 0
    %22 = vsyncpa [#allocation9], 0
    %23 = vsyncpa [#allocation4], 0
    %s24 = scalar_lea.sflag [#allocation4], 1
    %25 = vsyncpa %s24, 0
    loop: start=0, step=1, limit=4
    $region2: #{tpu_custom_call.1} parent=1 // loop_pre_header
      _
    $region3: #{tpu_custom_call.1} parent=1 // loop_header
      %s27 = sphi 0, %s31
      %p28 = scmp.ge.s32.totalorder %s27, 4
      %s37 = sphi 0, %s39
      %s40 = sphi 0, %s37
      %s41 = sphi 0, %s40
      %s57 = sphi 0, %s41
      %s61 = sphi 0, %s61
      %s63 = sphi 0, %s61
      %s64 = sphi 0, %s63
      %s78 = sphi 0, %s64
      %s82 = sphi 0, %s82
      %s84 = sphi 0, %s82
      %s85 = sphi 0, %s84
      %s99 = sphi 0, %s85
      %s103 = sphi 0, %s103
      %s105 = sphi 0, %s103
      %s106 = sphi 0, %s105
      %s120 = sphi 0, %s106
      %s124 = sphi 0, %s124
      %s126 = sphi 0, %s124
      %s127 = sphi 0, %s126
      %s141 = sphi 0, %s127
      %s145 = sphi 0, %s145
      %s147 = sphi 0, %s145
      %s148 = sphi 0, %s147
      %s162 = sphi 0, %s148
      %s166 = sphi 0, %s166
      %s168 = sphi 0, %s166
      %s169 = sphi 0, %s168
      %s183 = sphi 0, %s169
      %s187 = sphi 0, %s187
      %s189 = sphi 0, %s187
      %s190 = sphi 0, %s189
      %s204 = sphi 0, %s190
      %s208 = sphi 0, %s208
      %s210 = sphi 0, %s208
      %s211 = sphi 0, %s210
      %s225 = sphi 0, %s211
      %s229 = sphi 0, %s229
      %s231 = sphi 0, %s229
      %s232 = sphi 0, %s231
      %s246 = sphi 0, %s232
      %s250 = sphi 0, %s250
      %s252 = sphi 0, %s250
      %s253 = sphi 0, %s252
      %s267 = sphi 0, %s253
      %s271 = sphi 0, %s271
      %s273 = sphi 0, %s271
      %s274 = sphi 0, %s273
      %s288 = sphi 0, %s274
      %s292 = sphi 0, %s292
      %s294 = sphi 0, %s292
      %s295 = sphi 0, %s294
      %s309 = sphi 0, %s295
      %s315 = sphi 0, %s317
      %s318 = sphi 0, %s315
      %s319 = sphi 0, %s318
      %s335 = sphi 0, %s319
    $region4: #{tpu_custom_call.1} parent=1 // loop_header_branch
      %30 = sbr.rel (%p28) target = $region8
    $region5: #{tpu_custom_call.1} parent=1 // loop_body
      %s32 = ssub.s32 %s27, 1
      %s33 = ssub.s32 %s27, 2
      %s34 = sadd.s32 %s27, 1
      %s35 = ssub.s32 %s27, %s34
      %p36 = scmp.eq.s32.totalorder %s35, 0
      %s38 = sadd.s32 %s37, 1
      %s39 = scalar_select %p36, %s37, %s38
      %p42 = pneg %p36
      %p43 = scmp.eq.s32.totalorder %s27, 1
      %p44 = por %p42, %p43
      %p45 = scmp.ne.s32.totalorder %s37, %s40
      %p46 = scmp.eq.s32.totalorder %s27, 0
      %p47 = por %p45, %p46
      %p48 = scmp.ne.s32.totalorder %s37, %s40
      %p49 = scmp.eq.s32.totalorder %s32, 1
      %p50 = por %p48, %p49
      %p51 = scmp.ne.s32.totalorder %s40, %s41
      %p52 = scmp.eq.s32.totalorder %s32, 0
      %p53 = por %p51, %p52
      %p54 = scmp.ne.s32.totalorder %s40, %s41
      %p55 = scmp.eq.s32.totalorder %s33, 1
      %p56 = por %p54, %p55
      %p58 = scmp.ne.s32.totalorder %s41, %s57
      %p59 = scmp.eq.s32.totalorder %s33, 0
      %p60 = por %p58, %p59
      %s62 = sadd.s32 %s61, 1
      %p65 = scmp.eq.s32.totalorder %s27, 1
      %p66 = scmp.ne.s32.totalorder %s61, %s63
      %p67 = scmp.eq.s32.totalorder %s27, 0
      %p68 = por %p66, %p67
      %p69 = scmp.ne.s32.totalorder %s61, %s63
      %p70 = scmp.eq.s32.totalorder %s32, 1
      %p71 = por %p69, %p70
      %p72 = scmp.ne.s32.totalorder %s63, %s64
      %p73 = scmp.eq.s32.totalorder %s32, 0
      %p74 = por %p72, %p73
      %p75 = scmp.ne.s32.totalorder %s63, %s64
      %p76 = scmp.eq.s32.totalorder %s33, 1
      %p77 = por %p75, %p76
      %p79 = scmp.ne.s32.totalorder %s64, %s78
      %p80 = scmp.eq.s32.totalorder %s33, 0
      %p81 = por %p79, %p80
      %s83 = sadd.s32 %s82, 1
      %p86 = scmp.eq.s32.totalorder %s27, 1
      %p87 = scmp.ne.s32.totalorder %s82, %s84
      %p88 = scmp.eq.s32.totalorder %s27, 0
      %p89 = por %p87, %p88
      %p90 = scmp.ne.s32.totalorder %s82, %s84
      %p91 = scmp.eq.s32.totalorder %s32, 1
      %p92 = por %p90, %p91
      %p93 = scmp.ne.s32.totalorder %s84, %s85
      %p94 = scmp.eq.s32.totalorder %s32, 0
      %p95 = por %p93, %p94
      %p96 = scmp.ne.s32.totalorder %s84, %s85
      %p97 = scmp.eq.s32.totalorder %s33, 1
      %p98 = por %p96, %p97
      %p100 = scmp.ne.s32.totalorder %s85, %s99
      %p101 = scmp.eq.s32.totalorder %s33, 0
      %p102 = por %p100, %p101
      %s104 = sadd.s32 %s103, 1
      %p107 = scmp.eq.s32.totalorder %s27, 1
      %p108 = scmp.ne.s32.totalorder %s103, %s105
      %p109 = scmp.eq.s32.totalorder %s27, 0
      %p110 = por %p108, %p109
      %p111 = scmp.ne.s32.totalorder %s103, %s105
      %p112 = scmp.eq.s32.totalorder %s32, 1
      %p113 = por %p111, %p112
      %p114 = scmp.ne.s32.totalorder %s105, %s106
      %p115 = scmp.eq.s32.totalorder %s32, 0
      %p116 = por %p114, %p115
      %p117 = scmp.ne.s32.totalorder %s105, %s106
      %p118 = scmp.eq.s32.totalorder %s33, 1
      %p119 = por %p117, %p118
      %p121 = scmp.ne.s32.totalorder %s106, %s120
      %p122 = scmp.eq.s32.totalorder %s33, 0
      %p123 = por %p121, %p122
      %s125 = sadd.s32 %s124, 1
      %p128 = scmp.eq.s32.totalorder %s27, 1
      %p129 = scmp.ne.s32.totalorder %s124, %s126
      %p130 = scmp.eq.s32.totalorder %s27, 0
      %p131 = por %p129, %p130
      %p132 = scmp.ne.s32.totalorder %s124, %s126
      %p133 = scmp.eq.s32.totalorder %s32, 1
      %p134 = por %p132, %p133
      %p135 = scmp.ne.s32.totalorder %s126, %s127
      %p136 = scmp.eq.s32.totalorder %s32, 0
      %p137 = por %p135, %p136
      %p138 = scmp.ne.s32.totalorder %s126, %s127
      %p139 = scmp.eq.s32.totalorder %s33, 1
      %p140 = por %p138, %p139
      %p142 = scmp.ne.s32.totalorder %s127, %s141
      %p143 = scmp.eq.s32.totalorder %s33, 0
      %p144 = por %p142, %p143
      %s146 = sadd.s32 %s145, 1
      %p149 = scmp.eq.s32.totalorder %s27, 1
      %p150 = scmp.ne.s32.totalorder %s145, %s147
      %p151 = scmp.eq.s32.totalorder %s27, 0
      %p152 = por %p150, %p151
      %p153 = scmp.ne.s32.totalorder %s145, %s147
      %p154 = scmp.eq.s32.totalorder %s32, 1
      %p155 = por %p153, %p154
      %p156 = scmp.ne.s32.totalorder %s147, %s148
      %p157 = scmp.eq.s32.totalorder %s32, 0
      %p158 = por %p156, %p157
      %p159 = scmp.ne.s32.totalorder %s147, %s148
      %p160 = scmp.eq.s32.totalorder %s33, 1
      %p161 = por %p159, %p160
      %p163 = scmp.ne.s32.totalorder %s148, %s162
      %p164 = scmp.eq.s32.totalorder %s33, 0
      %p165 = por %p163, %p164
      %s167 = sadd.s32 %s166, 1
      %p170 = scmp.eq.s32.totalorder %s27, 1
      %p171 = scmp.ne.s32.totalorder %s166, %s168
      %p172 = scmp.eq.s32.totalorder %s27, 0
      %p173 = por %p171, %p172
      %p174 = scmp.ne.s32.totalorder %s166, %s168
      %p175 = scmp.eq.s32.totalorder %s32, 1
      %p176 = por %p174, %p175
      %p177 = scmp.ne.s32.totalorder %s168, %s169
      %p178 = scmp.eq.s32.totalorder %s32, 0
      %p179 = por %p177, %p178
      %p180 = scmp.ne.s32.totalorder %s168, %s169
      %p181 = scmp.eq.s32.totalorder %s33, 1
      %p182 = por %p180, %p181
      %p184 = scmp.ne.s32.totalorder %s169, %s183
      %p185 = scmp.eq.s32.totalorder %s33, 0
      %p186 = por %p184, %p185
      %s188 = sadd.s32 %s187, 1
      %p191 = scmp.eq.s32.totalorder %s27, 1
      %p192 = scmp.ne.s32.totalorder %s187, %s189
      %p193 = scmp.eq.s32.totalorder %s27, 0
      %p194 = por %p192, %p193
      %p195 = scmp.ne.s32.totalorder %s187, %s189
      %p196 = scmp.eq.s32.totalorder %s32, 1
      %p197 = por %p195, %p196
      %p198 = scmp.ne.s32.totalorder %s189, %s190
      %p199 = scmp.eq.s32.totalorder %s32, 0
      %p200 = por %p198, %p199
      %p201 = scmp.ne.s32.totalorder %s189, %s190
      %p202 = scmp.eq.s32.totalorder %s33, 1
      %p203 = por %p201, %p202
      %p205 = scmp.ne.s32.totalorder %s190, %s204
      %p206 = scmp.eq.s32.totalorder %s33, 0
      %p207 = por %p205, %p206
      %s209 = sadd.s32 %s208, 1
      %p212 = scmp.eq.s32.totalorder %s27, 1
      %p213 = scmp.ne.s32.totalorder %s208, %s210
      %p214 = scmp.eq.s32.totalorder %s27, 0
      %p215 = por %p213, %p214
      %p216 = scmp.ne.s32.totalorder %s208, %s210
      %p217 = scmp.eq.s32.totalorder %s32, 1
      %p218 = por %p216, %p217
      %p219 = scmp.ne.s32.totalorder %s210, %s211
      %p220 = scmp.eq.s32.totalorder %s32, 0
      %p221 = por %p219, %p220
      %p222 = scmp.ne.s32.totalorder %s210, %s211
      %p223 = scmp.eq.s32.totalorder %s33, 1
      %p224 = por %p222, %p223
      %p226 = scmp.ne.s32.totalorder %s211, %s225
      %p227 = scmp.eq.s32.totalorder %s33, 0
      %p228 = por %p226, %p227
      %s230 = sadd.s32 %s229, 1
      %p233 = scmp.eq.s32.totalorder %s27, 1
      %p234 = scmp.ne.s32.totalorder %s229, %s231
      %p235 = scmp.eq.s32.totalorder %s27, 0
      %p236 = por %p234, %p235
      %p237 = scmp.ne.s32.totalorder %s229, %s231
      %p238 = scmp.eq.s32.totalorder %s32, 1
      %p239 = por %p237, %p238
      %p240 = scmp.ne.s32.totalorder %s231, %s232
      %p241 = scmp.eq.s32.totalorder %s32, 0
      %p242 = por %p240, %p241
      %p243 = scmp.ne.s32.totalorder %s231, %s232
      %p244 = scmp.eq.s32.totalorder %s33, 1
      %p245 = por %p243, %p244
      %p247 = scmp.ne.s32.totalorder %s232, %s246
      %p248 = scmp.eq.s32.totalorder %s33, 0
      %p249 = por %p247, %p248
      %s251 = sadd.s32 %s250, 1
      %p254 = scmp.eq.s32.totalorder %s27, 1
      %p255 = scmp.ne.s32.totalorder %s250, %s252
      %p256 = scmp.eq.s32.totalorder %s27, 0
      %p257 = por %p255, %p256
      %p258 = scmp.ne.s32.totalorder %s250, %s252
      %p259 = scmp.eq.s32.totalorder %s32, 1
      %p260 = por %p258, %p259
      %p261 = scmp.ne.s32.totalorder %s252, %s253
      %p262 = scmp.eq.s32.totalorder %s32, 0
      %p263 = por %p261, %p262
      %p264 = scmp.ne.s32.totalorder %s252, %s253
      %p265 = scmp.eq.s32.totalorder %s33, 1
      %p266 = por %p264, %p265
      %p268 = scmp.ne.s32.totalorder %s253, %s267
      %p269 = scmp.eq.s32.totalorder %s33, 0
      %p270 = por %p268, %p269
      %s272 = sadd.s32 %s271, 1
      %p275 = scmp.eq.s32.totalorder %s27, 1
      %p276 = scmp.ne.s32.totalorder %s271, %s273
      %p277 = scmp.eq.s32.totalorder %s27, 0
      %p278 = por %p276, %p277
      %p279 = scmp.ne.s32.totalorder %s271, %s273
      %p280 = scmp.eq.s32.totalorder %s32, 1
      %p281 = por %p279, %p280
      %p282 = scmp.ne.s32.totalorder %s273, %s274
      %p283 = scmp.eq.s32.totalorder %s32, 0
      %p284 = por %p282, %p283
      %p285 = scmp.ne.s32.totalorder %s273, %s274
      %p286 = scmp.eq.s32.totalorder %s33, 1
      %p287 = por %p285, %p286
      %p289 = scmp.ne.s32.totalorder %s274, %s288
      %p290 = scmp.eq.s32.totalorder %s33, 0
      %p291 = por %p289, %p290
      %s293 = sadd.s32 %s292, 1
      %p296 = scmp.eq.s32.totalorder %s27, 1
      %p297 = scmp.ne.s32.totalorder %s292, %s294
      %p298 = scmp.eq.s32.totalorder %s27, 0
      %p299 = por %p297, %p298
      %p300 = scmp.ne.s32.totalorder %s292, %s294
      %p301 = scmp.eq.s32.totalorder %s32, 1
      %p302 = por %p300, %p301
      %p303 = scmp.ne.s32.totalorder %s294, %s295
      %p304 = scmp.eq.s32.totalorder %s32, 0
      %p305 = por %p303, %p304
      %p306 = scmp.ne.s32.totalorder %s294, %s295
      %p307 = scmp.eq.s32.totalorder %s33, 1
      %p308 = por %p306, %p307
      %p310 = scmp.ne.s32.totalorder %s295, %s309
      %p311 = scmp.eq.s32.totalorder %s33, 0
      %p312 = por %p310, %p311
      %s313 = ssub.s32 %s27, %s34
      %p314 = scmp.eq.s32.totalorder %s313, 0
      %s316 = sadd.s32 %s315, 1
      %s317 = scalar_select %p314, %s315, %s316
      %p320 = pneg %p314
      %p321 = scmp.eq.s32.totalorder %s27, 1
      %p322 = por %p320, %p321
      %p323 = scmp.ne.s32.totalorder %s315, %s318
      %p324 = scmp.eq.s32.totalorder %s27, 0
      %p325 = por %p323, %p324
      %p326 = scmp.ne.s32.totalorder %s315, %s318
      %p327 = scmp.eq.s32.totalorder %s32, 1
      %p328 = por %p326, %p327
      %p329 = scmp.ne.s32.totalorder %s318, %s319
      %p330 = scmp.eq.s32.totalorder %s32, 0
      %p331 = por %p329, %p330
      %p332 = scmp.ne.s32.totalorder %s318, %s319
      %p333 = scmp.eq.s32.totalorder %s33, 1
      %p334 = por %p332, %p333
      %p336 = scmp.ne.s32.totalorder %s319, %s335
      %p337 = scmp.eq.s32.totalorder %s33, 0
      %p338 = por %p336, %p337
      %p339 = scmp.le.s32.totalorder 1, %s27
      %p340 = scmp.lt.s32.totalorder %s27, 3
      %p341 = pnand %p339, %p340
      %p342 = pneg %p341
      // Predicated region
      $region9: #{tpu_custom_call.1} parent=5 // pred_check
        _
      $region10: #{tpu_custom_call.1} parent=5 // pred_check_branch
        %344 = sbr.rel (%p341) target = $region12
      $region11: #{tpu_custom_call.1} parent=5 // pred_region
        %s345 = ssub.s32 %s27, 1
        // Predicated region
        $region13: #{tpu_custom_call.1} parent=11 // pred_check
          %p346 = pneg %p74
        $region14: #{tpu_custom_call.1} parent=11 // pred_check_branch
          %348 = sbr.rel (%p346) target = $region16
        $region15: #{tpu_custom_call.1} parent=11 // pred_region
          _
        $region16: #{tpu_custom_call.1} parent=11 // pred_fallthru
          _
        // Predicated region
        $region17: #{tpu_custom_call.1} parent=11 // pred_check
          %p349 = pneg %p95
        $region18: #{tpu_custom_call.1} parent=11 // pred_check_branch
          %351 = sbr.rel (%p349) target = $region20
        $region19: #{tpu_custom_call.1} parent=11 // pred_region
          _
        $region20: #{tpu_custom_call.1} parent=11 // pred_fallthru
          _
        // Predicated region
        $region21: #{tpu_custom_call.1} parent=11 // pred_check
          %p352 = pneg %p116
        $region22: #{tpu_custom_call.1} parent=11 // pred_check_branch
          %354 = sbr.rel (%p352) target = $region24
        $region23: #{tpu_custom_call.1} parent=11 // pred_region
          %s356 = ssub.s32 3072, 3072
          %357 = vsyncadd [#allocation6], %s356
          %s358 = sshll.u32 [#allocation5], 4
          %s359 = int_to_ptr.vmem [resolvable:$true] %s358
          %364 = dma.hbm_to_vmem [thread:$0]  %s3, 3072, %s359, [#allocation6], 192, 192, 12
        $region24: #{tpu_custom_call.1} parent=11 // pred_fallthru
          _
        // Predicated region
        $region25: #{tpu_custom_call.1} parent=11 // pred_check
          %p365 = pneg %p137
        $region26: #{tpu_custom_call.1} parent=11 // pred_check_branch
          %367 = sbr.rel (%p365) target = $region28
        $region27: #{tpu_custom_call.1} parent=11 // pred_region
          _
        $region28: #{tpu_custom_call.1} parent=11 // pred_fallthru
          _
        // Predicated region
        $region29: #{tpu_custom_call.1} parent=11 // pred_check
          %p368 = pneg %p158
        $region30: #{tpu_custom_call.1} parent=11 // pred_check_branch
          %370 = sbr.rel (%p368) target = $region32
        $region31: #{tpu_custom_call.1} parent=11 // pred_region
          %s372 = ssub.s32 1024, 1024
          %373 = vsyncadd [#allocation6], %s372
          %s374 = sshll.u32 [#allocation7], 4
          %s375 = int_to_ptr.vmem [resolvable:$true] %s374
          %380 = dma.hbm_to_vmem [thread:$0]  %s5, 1024, %s375, [#allocation6], 64, 64, 4
        $region32: #{tpu_custom_call.1} parent=11 // pred_fallthru
          _
        // Predicated region
        $region33: #{tpu_custom_call.1} parent=11 // pred_check
          %p381 = pneg %p179
        $region34: #{tpu_custom_call.1} parent=11 // pred_check_branch
          %383 = sbr.rel (%p381) target = $region36
        $region35: #{tpu_custom_call.1} parent=11 // pred_region
          _
        $region36: #{tpu_custom_call.1} parent=11 // pred_fallthru
          _
        // Predicated region
        $region37: #{tpu_custom_call.1} parent=11 // pred_check
          %p384 = pneg %p200
        $region38: #{tpu_custom_call.1} parent=11 // pred_check_branch
          %386 = sbr.rel (%p384) target = $region40
        $region39: #{tpu_custom_call.1} parent=11 // pred_region
          _
        $region40: #{tpu_custom_call.1} parent=11 // pred_fallthru
          _
        // Predicated region
        $region41: #{tpu_custom_call.1} parent=11 // pred_check
          %p387 = pneg %p221
        $region42: #{tpu_custom_call.1} parent=11 // pred_check_branch
          %389 = sbr.rel (%p387) target = $region44
        $region43: #{tpu_custom_call.1} parent=11 // pred_region
          _
        $region44: #{tpu_custom_call.1} parent=11 // pred_fallthru
          _
        // Predicated region
        $region45: #{tpu_custom_call.1} parent=11 // pred_check
          %p390 = pneg %p242
        $region46: #{tpu_custom_call.1} parent=11 // pred_check_branch
          %392 = sbr.rel (%p390) target = $region48
        $region47: #{tpu_custom_call.1} parent=11 // pred_region
          %s394 = ssub.s32 2048, 2048
          %395 = vsyncadd [#allocation9], %s394
          %s396 = sshll.u32 [#allocation8], 4
          %s397 = int_to_ptr.vmem [resolvable:$true] %s396
          %402 = dma.hbm_to_vmem [thread:$0]  %s9, 2048, %s397, [#allocation9], 128, 128, 8
        $region48: #{tpu_custom_call.1} parent=11 // pred_fallthru
          _
        // Predicated region
        $region49: #{tpu_custom_call.1} parent=11 // pred_check
          %p403 = pneg %p263
        $region50: #{tpu_custom_call.1} parent=11 // pred_check_branch
          %405 = sbr.rel (%p403) target = $region52
        $region51: #{tpu_custom_call.1} parent=11 // pred_region
          _
        $region52: #{tpu_custom_call.1} parent=11 // pred_fallthru
          _
        // Predicated region
        $region53: #{tpu_custom_call.1} parent=11 // pred_check
          %p406 = pneg %p284
        $region54: #{tpu_custom_call.1} parent=11 // pred_check_branch
          %408 = sbr.rel (%p406) target = $region56
        $region55: #{tpu_custom_call.1} parent=11 // pred_region
          %s410 = ssub.s32 2048, 2048
          %411 = vsyncadd [#allocation9], %s410
          %s412 = sshll.u32 [#allocation10], 4
          %s413 = int_to_ptr.vmem [resolvable:$true] %s412
          %418 = dma.hbm_to_vmem [thread:$0]  %s11, 2048, %s413, [#allocation9], 64, 64, 4
        $region56: #{tpu_custom_call.1} parent=11 // pred_fallthru
          _
        // Predicated region
        $region57: #{tpu_custom_call.1} parent=11 // pred_check
          %p419 = pneg %p305
        $region58: #{tpu_custom_call.1} parent=11 // pred_check_branch
          %421 = sbr.rel (%p419) target = $region60
        $region59: #{tpu_custom_call.1} parent=11 // pred_region
          _
        $region60: #{tpu_custom_call.1} parent=11 // pred_fallthru
          _
      $region12: #{tpu_custom_call.1} parent=5 // pred_fallthru
        _
      %p422 = scmp.lt.s32.totalorder %s27, 2
      // Predicated region
      $region61: #{tpu_custom_call.1} parent=5 // pred_check
        %p423 = pneg %p422
      $region62: #{tpu_custom_call.1} parent=5 // pred_check_branch
        %425 = sbr.rel (%p423) target = $region64
      $region63: #{tpu_custom_call.1} parent=5 // pred_region
        // Predicated region
        $region65: #{tpu_custom_call.1} parent=63 // pred_check
          %p426 = pneg %p47
        $region66: #{tpu_custom_call.1} parent=63 // pred_check_branch
          %428 = sbr.rel (%p426) target = $region68
        $region67: #{tpu_custom_call.1} parent=63 // pred_region
          %s429 = sand.u32 %s37, 1
          %s430 = scalar_lea.sflag [#allocation3], %s429
          %s431 = sand.u32 %s37, 1
          %s432 = smul.addr %s431, 16
          %s433 = scalar_lea.vmem [#allocation2], %s432
          %s435 = ssub.s32 256, 256
          %436 = vsyncadd %s430, %s435
          %s437 = smul.addr %s27, 2
          %s438 = smul.addr %s437, 128
          %s439 = scalar_lea.hbm %s0, %s438
          %s440 = sshll.u32 %s433, 4
          %s441 = int_to_ptr.vmem [resolvable:$true] %s440
          %446 = dma.hbm_to_vmem [thread:$0]  %s439, 256, %s441, %s430, 128, 128, 8
        $region68: #{tpu_custom_call.1} parent=63 // pred_fallthru
          _
      $region64: #{tpu_custom_call.1} parent=5 // pred_fallthru
        _
      %p447 = scmp.le.s32.totalorder 1, %s27
      %p448 = scmp.lt.s32.totalorder %s27, 3
      %p449 = pnand %p447, %p448
      %p450 = pneg %p449
      // Predicated region
      $region69: #{tpu_custom_call.1} parent=5 // pred_check
        _
      $region70: #{tpu_custom_call.1} parent=5 // pred_check_branch
        %452 = sbr.rel (%p449) target = $region72
      $region71: #{tpu_custom_call.1} parent=5 // pred_region
        %s453 = ssub.s32 %s27, 1
        %s454 = sand.u32 %s40, 1
        %s455 = scalar_lea.sflag [#allocation3], %s454
        %s456 = sand.u32 %s40, 1
        %s457 = smul.addr %s456, 16
        %s458 = scalar_lea.vmem [#allocation2], %s457
        // Predicated region
        $region73: #{tpu_custom_call.1} parent=71 // pred_check
          %p459 = pneg %p53
        $region74: #{tpu_custom_call.1} parent=71 // pred_check_branch
          %461 = sbr.rel (%p459) target = $region76
        $region75: #{tpu_custom_call.1} parent=71 // pred_region
          %462 = dma.done %s455, 256
        $region76: #{tpu_custom_call.1} parent=71 // pred_fallthru
          _
        // Predicated region
        $region77: #{tpu_custom_call.1} parent=71 // pred_check
          %p463 = pneg %p116
        $region78: #{tpu_custom_call.1} parent=71 // pred_check_branch
          %465 = sbr.rel (%p463) target = $region80
        $region79: #{tpu_custom_call.1} parent=71 // pred_region
          %466 = dma.done [#allocation6], 3072
        $region80: #{tpu_custom_call.1} parent=71 // pred_fallthru
          _
        // Predicated region
        $region81: #{tpu_custom_call.1} parent=71 // pred_check
          %p467 = pneg %p158
        $region82: #{tpu_custom_call.1} parent=71 // pred_check_branch
          %469 = sbr.rel (%p467) target = $region84
        $region83: #{tpu_custom_call.1} parent=71 // pred_region
          %470 = dma.done [#allocation6], 1024
        $region84: #{tpu_custom_call.1} parent=71 // pred_fallthru
          _
        // Predicated region
        $region85: #{tpu_custom_call.1} parent=71 // pred_check
          %p471 = pneg %p242
        $region86: #{tpu_custom_call.1} parent=71 // pred_check_branch
          %473 = sbr.rel (%p471) target = $region88
        $region87: #{tpu_custom_call.1} parent=71 // pred_region
          %474 = dma.done [#allocation9], 2048
        $region88: #{tpu_custom_call.1} parent=71 // pred_fallthru
          _
        // Predicated region
        $region89: #{tpu_custom_call.1} parent=71 // pred_check
          %p475 = pneg %p284
        $region90: #{tpu_custom_call.1} parent=71 // pred_check_branch
          %477 = sbr.rel (%p475) target = $region92
        $region91: #{tpu_custom_call.1} parent=71 // pred_region
          %478 = dma.done [#allocation9], 2048
        $region92: #{tpu_custom_call.1} parent=71 // pred_fallthru
          _
        %s479 = sand.u32 %s40, 1
        %s480 = scalar_lea.sflag [#allocation3], %s479
        %s481 = sand.u32 %s40, 1
        %s482 = smul.addr %s481, 16
        %s483 = scalar_lea.vmem [#allocation2], %s482
        %p484 = pneg %p53
        %p485 = pneg %p50
        %p486 = pneg %p74
        %p487 = pneg %p71
        %p488 = pneg %p95
        %p489 = pneg %p92
        %p490 = pneg %p116
        %p491 = pneg %p113
        %p492 = pneg %p137
        %p493 = pneg %p134
        %p494 = pneg %p158
        %p495 = pneg %p155
        %p496 = pneg %p179
        %p497 = pneg %p176
        %p498 = pneg %p200
        %p499 = pneg %p197
        %p500 = pneg %p221
        %p501 = pneg %p218
        %p502 = pneg %p242
        %p503 = pneg %p239
        %p504 = pneg %p263
        %p505 = pneg %p260
        %p506 = pneg %p284
        %p507 = pneg %p281
        %p508 = pneg %p305
        %p509 = pneg %p302
        %p510 = pneg %p331
        %p511 = pneg %p328
        %s512 = sand.u32 %s318, 1
        %s513 = scalar_lea.sflag [#allocation4], %s512
        %s514 = sand.u32 %s318, 1
        %s515 = smul.addr %s514, 8
        %s516 = scalar_lea.vmem [#allocation11], %s515
        %v518 = vld [vmem:[%s458] sm:$0xff]
        %v519 = vld [vmem:[%s458 + $0x8] sm:$0xff]
        %v520 = vld [vmem:[%s1] sm:$0x1]
        %v521 = vld [vmem:[%s2] sm:$0x1]
        %522 = vadd.xlane.f32.xlu0 %v518
        %v523 = vpop.xlane.xlu0 %522
        %524 = vadd.xlane.f32.xlu0 %v519
        %v525 = vpop.xlane.xlu0 %524
        %v526 = vrcp.pop 128.0
        %v527 = vmul.f32 %v523, %v526
        %v528 = vmul.f32 %v525, %v526
        %v529 = vsub.f32 %v518, %v527
        %v530 = vsub.f32 %v519, %v528
        %v531 = vmul.f32 %v529, %v529
        %v532 = vmul.f32 %v530, %v530
        %533 = vadd.xlane.f32.xlu0 %v531
        %v534 = vpop.xlane.xlu0 %533
        %535 = vadd.xlane.f32.xlu0 %v532
        %v536 = vpop.xlane.xlu0 %535
        %v537 = vmul.f32 %v534, %v526
        %v538 = vmul.f32 %v536, %v526
        %v539 = vadd.f32 %v537, 1e-06
        %v540 = vadd.f32 %v538, 1e-06
        %v541 = vrsqrt.pop %v539
        %v542 = vrsqrt.pop %v540
        %v543 = vmul.f32 %v529, %v541
        %v544 = vmul.f32 %v530, %v542
        %v546 = vlaneseq
        %v547 = vshrl.u32 %v546, 7
        %v548 = vsub.s32 0, %v547
        %v549 = vrot.slane %v520, %v548
        %v551 = vmul.f32 %v543, %v549
        %v552 = vmul.f32 %v544, %v549
        %v554 = vlaneseq
        %v555 = vshrl.u32 %v554, 7
        %v556 = vsub.s32 0, %v555
        %v557 = vrot.slane %v521, %v556
        %v559 = vadd.f32 %v551, %v557
        %v560 = vadd.f32 %v552, %v557
        %v561 = vld [vmem:[#allocation5] sm:$0xff]
        %v562 = vld [vmem:[#allocation5 + $0x8] sm:$0xf]
        %v563 = vld [vmem:[#allocation5 + $0xc] sm:$0xff]
        %v564 = vld [vmem:[#allocation5 + $0x14] sm:$0xf]
        %v565 = vld [vmem:[#allocation5 + $0x18] sm:$0xff]
        %v566 = vld [vmem:[#allocation5 + $0x20] sm:$0xf]
        %v567 = vld [vmem:[#allocation5 + $0x24] sm:$0xff]
        %v568 = vld [vmem:[#allocation5 + $0x2c] sm:$0xf]
        %v569 = vld [vmem:[#allocation5 + $0x30] sm:$0xff]
        %v570 = vld [vmem:[#allocation5 + $0x38] sm:$0xf]
        %v571 = vld [vmem:[#allocation5 + $0x3c] sm:$0xff]
        %v572 = vld [vmem:[#allocation5 + $0x44] sm:$0xf]
        %v573 = vld [vmem:[#allocation5 + $0x48] sm:$0xff]
        %v574 = vld [vmem:[#allocation5 + $0x50] sm:$0xf]
        %v575 = vld [vmem:[#allocation5 + $0x54] sm:$0xff]
        %v576 = vld [vmem:[#allocation5 + $0x5c] sm:$0xf]
        %v577 = vld [vmem:[#allocation5 + $0x60] sm:$0xff]
        %v578 = vld [vmem:[#allocation5 + $0x68] sm:$0xf]
        %v579 = vld [vmem:[#allocation5 + $0x6c] sm:$0xff]
        %v580 = vld [vmem:[#allocation5 + $0x74] sm:$0xf]
        %v581 = vld [vmem:[#allocation5 + $0x78] sm:$0xff]
        %v582 = vld [vmem:[#allocation5 + $0x80] sm:$0xf]
        %v583 = vld [vmem:[#allocation5 + $0x84] sm:$0xff]
        %v584 = vld [vmem:[#allocation5 + $0x8c] sm:$0xf]
        %v585 = vld [vmem:[#allocation5 + $0x90] sm:$0xff]
        %v586 = vld [vmem:[#allocation5 + $0x98] sm:$0xf]
        %v587 = vld [vmem:[#allocation5 + $0x9c] sm:$0xff]
        %v588 = vld [vmem:[#allocation5 + $0xa4] sm:$0xf]
        %v589 = vld [vmem:[#allocation5 + $0xa8] sm:$0xff]
        %v590 = vld [vmem:[#allocation5 + $0xb0] sm:$0xf]
        %v591 = vld [vmem:[#allocation5 + $0xb4] sm:$0xff]
        %v592 = vld [vmem:[#allocation5 + $0xbc] sm:$0xf]
        %v593 = vpack.c.bf16 %v560, %v559
        %v594 = vld [vmem:[%s4] sm:$0x7]
        %v596 = vlaneseq
        %v597 = vshrl.u32 %v596, 7
        %v598 = vsub.s32 0, %v597
        %v599 = vrot.slane %v594, %v598
        %v600 = vlaneseq
        %v601 = vshrl.u32 %v600, 7
        %v602 = vsub.s32 1, %v601
        %v603 = vrot.slane %v594, %v602
        %v604 = vlaneseq
        %v605 = vshrl.u32 %v604, 7
        %v606 = vsub.s32 2, %v605
        %v607 = vrot.slane %v594, %v606
        %v643 = vunpack.c.l.b16 %v561
        %v644 = vunpack.c.h.b16 %v561
        %v645 = vunpack.c.l.b16 %v562
        %v646 = vunpack.c.l.b16 %v563
        %v647 = vunpack.c.h.b16 %v563
        %v648 = vunpack.c.l.b16 %v564
        %v649 = vunpack.c.l.b16 %v565
        %v650 = vunpack.c.h.b16 %v565
        %v651 = vunpack.c.l.b16 %v566
        %v652 = vunpack.c.l.b16 %v567
        %v653 = vunpack.c.h.b16 %v567
        %v654 = vunpack.c.l.b16 %v568
        %v655 = vunpack.c.l.b16 %v569
        %v656 = vunpack.c.h.b16 %v569
        %v657 = vunpack.c.l.b16 %v570
        %v658 = vunpack.c.l.b16 %v571
        %v659 = vunpack.c.h.b16 %v571
        %v660 = vunpack.c.l.b16 %v572
        %v661 = vunpack.c.l.b16 %v573
        %v662 = vunpack.c.h.b16 %v573
        %v663 = vunpack.c.l.b16 %v574
        %v664 = vunpack.c.l.b16 %v575
        %v665 = vunpack.c.h.b16 %v575
        %v666 = vunpack.c.l.b16 %v576
        %v667 = vunpack.c.l.b16 %v577
        %v668 = vunpack.c.h.b16 %v577
        %v669 = vunpack.c.l.b16 %v578
        %v670 = vunpack.c.l.b16 %v579
        %v671 = vunpack.c.h.b16 %v579
        %v672 = vunpack.c.l.b16 %v580
        %v673 = vunpack.c.l.b16 %v581
        %v674 = vunpack.c.h.b16 %v581
        %v675 = vunpack.c.l.b16 %v582
        %v676 = vunpack.c.l.b16 %v583
        %v677 = vunpack.c.h.b16 %v583
        %v678 = vunpack.c.l.b16 %v584
        %v679 = vunpack.c.l.b16 %v585
        %v680 = vunpack.c.h.b16 %v585
        %v681 = vunpack.c.l.b16 %v586
        %v682 = vunpack.c.l.b16 %v587
        %v683 = vunpack.c.h.b16 %v587
        %v684 = vunpack.c.l.b16 %v588
        %v685 = vunpack.c.l.b16 %v589
        %v686 = vunpack.c.h.b16 %v589
        %v687 = vunpack.c.l.b16 %v590
        %v688 = vunpack.c.l.b16 %v591
        %v689 = vunpack.c.h.b16 %v591
        %v690 = vunpack.c.l.b16 %v592
        %v691 = vpack.c.b16 %v646, %v643
        %v692 = vpack.c.b16 %v647, %v644
        %v693 = vpack.c.b16 %v648, %v645
        %v694 = vpack.c.b16 %v652, %v649
        %v695 = vpack.c.b16 %v653, %v650
        %v696 = vpack.c.b16 %v654, %v651
        %v697 = vpack.c.b16 %v658, %v655
        %v698 = vpack.c.b16 %v659, %v656
        %v699 = vpack.c.b16 %v660, %v657
        %v700 = vpack.c.b16 %v664, %v661
        %v701 = vpack.c.b16 %v665, %v662
        %v702 = vpack.c.b16 %v666, %v663
        %v703 = vpack.c.b16 %v670, %v667
        %v704 = vpack.c.b16 %v671, %v668
        %v705 = vpack.c.b16 %v672, %v669
        %v706 = vpack.c.b16 %v676, %v673
        %v707 = vpack.c.b16 %v677, %v674
        %v708 = vpack.c.b16 %v678, %v675
        %v709 = vpack.c.b16 %v682, %v679
        %v710 = vpack.c.b16 %v683, %v680
        %v711 = vpack.c.b16 %v684, %v681
        %v712 = vpack.c.b16 %v688, %v685
        %v713 = vpack.c.b16 %v689, %v686
        %v714 = vpack.c.b16 %v690, %v687
        %739 = vmatprep.subr.bf16.mxu0 %v692
        %740 = vmatpush1.bf16.msra.mxu0 %v691
        %741 = vmatprep.subr.bf16.mxu0 %v695
        %742 = vmatpush1.bf16.msra.mxu0 %v694
        %743 = vmatprep.subr.bf16.mxu0 %v698
        %744 = vmatpush1.bf16.msra.mxu0 %v697
        %745 = vmatprep.subr.bf16.mxu0 %v701
        %746 = vmatpush1.bf16.msra.mxu0 %v700
        %747 = vmatprep.subr.bf16.mxu0 %v704
        %748 = vmatpush1.bf16.msra.mxu0 %v703
        %749 = vmatprep.subr.bf16.mxu0 %v707
        %750 = vmatpush1.bf16.msra.mxu0 %v706
        %751 = vmatprep.subr.bf16.mxu0 %v710
        %752 = vmatpush1.bf16.msra.mxu0 %v709
        %753 = vmatprep.subr.bf16.mxu0 %v713
        %754 = vmatpush1.bf16.msra.mxu0 %v712
        %755 = vmatprep.subr.bf16.mxu0 0
        %756 = vmatpush1.bf16.msra.mxu0 0
        %757 = vmatprep.subr.bf16.mxu0 0
        %758 = vmatpush1.bf16.msra.mxu0 0
        %759 = vmatprep.subr.bf16.mxu0 0
        %760 = vmatpush1.bf16.msra.mxu0 0
        %761 = vmatprep.subr.bf16.mxu0 0
        %762 = vmatpush1.bf16.msra.mxu0 0
        %763 = vmatprep.subr.bf16.mxu0 0
        %764 = vmatpush1.bf16.msra.mxu0 0
        %765 = vmatprep.subr.bf16.mxu0 0
        %766 = vmatpush1.bf16.msra.mxu0 0
        %767 = vmatprep.subr.bf16.mxu0 0
        %768 = vmatpush1.bf16.msra.mxu0 0
        %769 = vmatprep.subr.bf16.mxu0 0
        %770 = vmatpush1.bf16.msra.mxu0 0
        %771 = vmatprep.mubr.bf16.mxu0 0
        %772 = vmatmul.mubr.bf16.gmra.mrb[0].mxu0 %v593
        %v773 = vpop.f32.mrb[0].mxu0
        %v774 = vadd.f32 %v599, %v773
        %v775 = vpop.f32.mrb[0].mxu0
        %v776 = vadd.f32 %v603, %v775
        %v777 = vpop.f32.mrb[0].mxu0
        %v778 = vadd.f32 %v599, %v777
        %v779 = vpop.f32.mrb[0].mxu0
        %v780 = vadd.f32 %v603, %v779
        %781 = vdwg.mxu0
        %782 = vmatprep.subr.bf16.mxu0 0
        %783 = vmatpush1.bf16.msra.mxu0 %v693
        %784 = vmatprep.subr.bf16.mxu0 0
        %785 = vmatpush1.bf16.msra.mxu0 %v696
        %786 = vmatprep.subr.bf16.mxu0 0
        %787 = vmatpush1.bf16.msra.mxu0 %v699
        %788 = vmatprep.subr.bf16.mxu0 0
        %789 = vmatpush1.bf16.msra.mxu0 %v702
        %790 = vmatprep.subr.bf16.mxu0 0
        %791 = vmatpush1.bf16.msra.mxu0 %v705
        %792 = vmatprep.subr.bf16.mxu0 0
        %793 = vmatpush1.bf16.msra.mxu0 %v708
        %794 = vmatprep.subr.bf16.mxu0 0
        %795 = vmatpush1.bf16.msra.mxu0 %v711
        %796 = vmatprep.subr.bf16.mxu0 0
        %797 = vmatpush1.bf16.msra.mxu0 %v714
        %798 = vmatprep.subr.bf16.mxu0 0
        %799 = vmatpush1.bf16.msra.mxu0 0
        %800 = vmatprep.subr.bf16.mxu0 0
        %801 = vmatpush1.bf16.msra.mxu0 0
        %802 = vmatprep.subr.bf16.mxu0 0
        %803 = vmatpush1.bf16.msra.mxu0 0
        %804 = vmatprep.subr.bf16.mxu0 0
        %805 = vmatpush1.bf16.msra.mxu0 0
        %806 = vmatprep.subr.bf16.mxu0 0
        %807 = vmatpush1.bf16.msra.mxu0 0
        %808 = vmatprep.subr.bf16.mxu0 0
        %809 = vmatpush1.bf16.msra.mxu0 0
        %810 = vmatprep.subr.bf16.mxu0 0
        %811 = vmatpush1.bf16.msra.mxu0 0
        %812 = vmatprep.subr.bf16.mxu0 0
        %813 = vmatpush1.bf16.msra.mxu0 0
        %814 = vmatprep.mubr.bf16.mxu0 0
        %815 = vmatmul.mubr.bf16.gmra.mrb[0].mxu0 %v593
        %v816 = vpop.f32.mrb[0].mxu0
        %v817 = vadd.f32 %v607, %v816
        %v818 = vpop.f32.mrb[0].mxu0
        %v819 = vpop.f32.mrb[0].mxu0
        %v820 = vadd.f32 %v607, %v819
        %v821 = vpop.f32.mrb[0].mxu0
        %822 = vdwg.mxu0
        %825 = vrot.lane.b32.xlu0 %v774, 96
        %v826 = vpop.permute.xlu0 %825
        %827 = vrot.lane.b32.xlu0 %v778, 96
        %v828 = vpop.permute.xlu0 %827
        %831 = vrot.lane.b32.xlu0 %v774, 64
        %v832 = vpop.permute.xlu0 %831
        %833 = vrot.lane.b32.xlu0 %v778, 64
        %v834 = vpop.permute.xlu0 %833
        %837 = vrot.lane.b32.xlu0 %v774, 32
        %v838 = vpop.permute.xlu0 %837
        %839 = vrot.lane.b32.xlu0 %v778, 32
        %v840 = vpop.permute.xlu0 %839
        %v843 = vcombine.low %v774, %v832
        %v844 = vcombine.high %v774, %v832
        %v846 = vunpack.c.l.s4 1983009808
        %v847 = vunpack.c.0.s8 %v846
        %v848 = vlaneseq
        %v849 = vshrl.u32 %v848, 7
        %v850 = vsub.s32 %v847, %v849
        %v851 = vrot.slane %v843, %v850
        %v853 = vunpack.c.l.s4 1983009808
        %v854 = vunpack.c.0.s8 %v853
        %v855 = vlaneseq
        %v856 = vshrl.u32 %v855, 7
        %v857 = vsub.s32 %v854, %v856
        %v858 = vrot.slane %v844, %v857
        %v859 = vcombine.low %v826, %v838
        %v860 = vcombine.high %v826, %v838
        %v862 = vunpack.c.l.s4 1983009808
        %v863 = vunpack.c.0.s8 %v862
        %v864 = vlaneseq
        %v865 = vshrl.u32 %v864, 7
        %v866 = vsub.s32 %v863, %v865
        %v867 = vrot.slane %v859, %v866
        %v869 = vunpack.c.l.s4 1983009808
        %v870 = vunpack.c.0.s8 %v869
        %v871 = vlaneseq
        %v872 = vshrl.u32 %v871, 7
        %v873 = vsub.s32 %v870, %v872
        %v874 = vrot.slane %v860, %v873
        %v875 = vcombine.low %v851, %v867
        %v876 = vcombine.high %v851, %v867
        %v878 = vunpack.c.l.s4 1934713408
        %v879 = vunpack.c.0.s8 %v878
        %v880 = vlaneseq
        %v881 = vshrl.u32 %v880, 7
        %v882 = vsub.s32 %v879, %v881
        %v883 = vrot.slane %v875, %v882
        %v885 = vunpack.c.l.s4 1934713408
        %v886 = vunpack.c.0.s8 %v885
        %v887 = vlaneseq
        %v888 = vshrl.u32 %v887, 7
        %v889 = vsub.s32 %v886, %v888
        %v890 = vrot.slane %v876, %v889
        %v891 = vcombine.low %v858, %v874
        %v892 = vcombine.high %v858, %v874
        %v894 = vunpack.c.l.s4 1934713408
        %v895 = vunpack.c.0.s8 %v894
        %v896 = vlaneseq
        %v897 = vshrl.u32 %v896, 7
        %v898 = vsub.s32 %v895, %v897
        %v899 = vrot.slane %v891, %v898
        %v901 = vunpack.c.l.s4 1934713408
        %v902 = vunpack.c.0.s8 %v901
        %v903 = vlaneseq
        %v904 = vshrl.u32 %v903, 7
        %v905 = vsub.s32 %v902, %v904
        %v906 = vrot.slane %v892, %v905
        %v907 = vcombine.high %v883, 0.0
        %v908 = vcombine.high %v890, 0.0
        %v909 = vcombine.high %v899, 0.0
        %v910 = vcombine.high %v906, 0.0
        %v911 = vcombine.low %v778, %v834
        %v912 = vcombine.high %v778, %v834
        %v914 = vunpack.c.l.s4 1983009808
        %v915 = vunpack.c.0.s8 %v914
        %v916 = vlaneseq
        %v917 = vshrl.u32 %v916, 7
        %v918 = vsub.s32 %v915, %v917
        %v919 = vrot.slane %v911, %v918
        %v921 = vunpack.c.l.s4 1983009808
        %v922 = vunpack.c.0.s8 %v921
        %v923 = vlaneseq
        %v924 = vshrl.u32 %v923, 7
        %v925 = vsub.s32 %v922, %v924
        %v926 = vrot.slane %v912, %v925
        %v927 = vcombine.low %v828, %v840
        %v928 = vcombine.high %v828, %v840
        %v930 = vunpack.c.l.s4 1983009808
        %v931 = vunpack.c.0.s8 %v930
        %v932 = vlaneseq
        %v933 = vshrl.u32 %v932, 7
        %v934 = vsub.s32 %v931, %v933
        %v935 = vrot.slane %v927, %v934
        %v937 = vunpack.c.l.s4 1983009808
        %v938 = vunpack.c.0.s8 %v937
        %v939 = vlaneseq
        %v940 = vshrl.u32 %v939, 7
        %v941 = vsub.s32 %v938, %v940
        %v942 = vrot.slane %v928, %v941
        %v943 = vcombine.low %v919, %v935
        %v944 = vcombine.high %v919, %v935
        %v946 = vunpack.c.l.s4 1934713408
        %v947 = vunpack.c.0.s8 %v946
        %v948 = vlaneseq
        %v949 = vshrl.u32 %v948, 7
        %v950 = vsub.s32 %v947, %v949
        %v951 = vrot.slane %v943, %v950
        %v953 = vunpack.c.l.s4 1934713408
        %v954 = vunpack.c.0.s8 %v953
        %v955 = vlaneseq
        %v956 = vshrl.u32 %v955, 7
        %v957 = vsub.s32 %v954, %v956
        %v958 = vrot.slane %v944, %v957
        %v959 = vcombine.low %v926, %v942
        %v960 = vcombine.high %v926, %v942
        %v962 = vunpack.c.l.s4 1934713408
        %v963 = vunpack.c.0.s8 %v962
        %v964 = vlaneseq
        %v965 = vshrl.u32 %v964, 7
        %v966 = vsub.s32 %v963, %v965
        %v967 = vrot.slane %v959, %v966
        %v969 = vunpack.c.l.s4 1934713408
        %v970 = vunpack.c.0.s8 %v969
        %v971 = vlaneseq
        %v972 = vshrl.u32 %v971, 7
        %v973 = vsub.s32 %v970, %v972
        %v974 = vrot.slane %v960, %v973
        %v975 = vcombine.high %v951, 0.0
        %v976 = vcombine.high %v958, 0.0
        %v977 = vcombine.high %v967, 0.0
        %v978 = vcombine.high %v974, 0.0
        %v979 = vcombine.low %v883, %v890
        %v981 = vunpack.c.l.s4 1983009808
        %v982 = vunpack.c.0.s8 %v981
        %v983 = vlaneseq
        %v984 = vshrl.u32 %v983, 7
        %v985 = vsub.s32 %v982, %v984
        %v986 = vrot.slane %v979, %v985
        %v987 = vcombine.low %v907, %v908
        %v989 = vunpack.c.l.s4 1983009808
        %v990 = vunpack.c.0.s8 %v989
        %v991 = vlaneseq
        %v992 = vshrl.u32 %v991, 7
        %v993 = vsub.s32 %v990, %v992
        %v994 = vrot.slane %v987, %v993
        %v995 = vcombine.low %v899, %v906
        %v997 = vunpack.c.l.s4 1983009808
        %v998 = vunpack.c.0.s8 %v997
        %v999 = vlaneseq
        %v1000 = vshrl.u32 %v999, 7
        %v1001 = vsub.s32 %v998, %v1000
        %v1002 = vrot.slane %v995, %v1001
        %v1003 = vcombine.low %v909, %v910
        %v1005 = vunpack.c.l.s4 1983009808
        %v1006 = vunpack.c.0.s8 %v1005
        %v1007 = vlaneseq
        %v1008 = vshrl.u32 %v1007, 7
        %v1009 = vsub.s32 %v1006, %v1008
        %v1010 = vrot.slane %v1003, %v1009
        %v1011 = vcombine.low %v986, %v994
        %v1012 = vcombine.high %v986, %v994
        %v1014 = vunpack.c.l.s4 1934713408
        %v1015 = vunpack.c.0.s8 %v1014
        %v1016 = vlaneseq
        %v1017 = vshrl.u32 %v1016, 7
        %v1018 = vsub.s32 %v1015, %v1017
        %v1019 = vrot.slane %v1011, %v1018
        %v1021 = vunpack.c.l.s4 1934713408
        %v1022 = vunpack.c.0.s8 %v1021
        %v1023 = vlaneseq
        %v1024 = vshrl.u32 %v1023, 7
        %v1025 = vsub.s32 %v1022, %v1024
        %v1026 = vrot.slane %v1012, %v1025
        %v1027 = vcombine.low %v1002, %v1010
        %v1028 = vcombine.high %v1002, %v1010
        %v1030 = vunpack.c.l.s4 1934713408
        %v1031 = vunpack.c.0.s8 %v1030
        %v1032 = vlaneseq
        %v1033 = vshrl.u32 %v1032, 7
        %v1034 = vsub.s32 %v1031, %v1033
        %v1035 = vrot.slane %v1027, %v1034
        %v1037 = vunpack.c.l.s4 1934713408
        %v1038 = vunpack.c.0.s8 %v1037
        %v1039 = vlaneseq
        %v1040 = vshrl.u32 %v1039, 7
        %v1041 = vsub.s32 %v1038, %v1040
        %v1042 = vrot.slane %v1028, %v1041
        %v1043 = vcombine.low %v1019, %v1035
        %v1044 = vcombine.high %v1019, %v1035
        %v1045 = vcombine.low %v1026, %v1042
        %v1046 = vcombine.high %v1026, %v1042
        %v1047 = vcombine.low %v951, %v958
        %v1049 = vunpack.c.l.s4 1983009808
        %v1050 = vunpack.c.0.s8 %v1049
        %v1051 = vlaneseq
        %v1052 = vshrl.u32 %v1051, 7
        %v1053 = vsub.s32 %v1050, %v1052
        %v1054 = vrot.slane %v1047, %v1053
        %v1055 = vcombine.low %v975, %v976
        %v1057 = vunpack.c.l.s4 1983009808
        %v1058 = vunpack.c.0.s8 %v1057
        %v1059 = vlaneseq
        %v1060 = vshrl.u32 %v1059, 7
        %v1061 = vsub.s32 %v1058, %v1060
        %v1062 = vrot.slane %v1055, %v1061
        %v1063 = vcombine.low %v967, %v974
        %v1065 = vunpack.c.l.s4 1983009808
        %v1066 = vunpack.c.0.s8 %v1065
        %v1067 = vlaneseq
        %v1068 = vshrl.u32 %v1067, 7
        %v1069 = vsub.s32 %v1066, %v1068
        %v1070 = vrot.slane %v1063, %v1069
        %v1071 = vcombine.low %v977, %v978
        %v1073 = vunpack.c.l.s4 1983009808
        %v1074 = vunpack.c.0.s8 %v1073
        %v1075 = vlaneseq
        %v1076 = vshrl.u32 %v1075, 7
        %v1077 = vsub.s32 %v1074, %v1076
        %v1078 = vrot.slane %v1071, %v1077
        %v1079 = vcombine.low %v1054, %v1062
        %v1080 = vcombine.high %v1054, %v1062
        %v1082 = vunpack.c.l.s4 1934713408
        %v1083 = vunpack.c.0.s8 %v1082
        %v1084 = vlaneseq
        %v1085 = vshrl.u32 %v1084, 7
        %v1086 = vsub.s32 %v1083, %v1085
        %v1087 = vrot.slane %v1079, %v1086
        %v1089 = vunpack.c.l.s4 1934713408
        %v1090 = vunpack.c.0.s8 %v1089
        %v1091 = vlaneseq
        %v1092 = vshrl.u32 %v1091, 7
        %v1093 = vsub.s32 %v1090, %v1092
        %v1094 = vrot.slane %v1080, %v1093
        %v1095 = vcombine.low %v1070, %v1078
        %v1096 = vcombine.high %v1070, %v1078
        %v1098 = vunpack.c.l.s4 1934713408
        %v1099 = vunpack.c.0.s8 %v1098
        %v1100 = vlaneseq
        %v1101 = vshrl.u32 %v1100, 7
        %v1102 = vsub.s32 %v1099, %v1101
        %v1103 = vrot.slane %v1095, %v1102
        %v1105 = vunpack.c.l.s4 1934713408
        %v1106 = vunpack.c.0.s8 %v1105
        %v1107 = vlaneseq
        %v1108 = vshrl.u32 %v1107, 7
        %v1109 = vsub.s32 %v1106, %v1108
        %v1110 = vrot.slane %v1096, %v1109
        %v1111 = vcombine.low %v1087, %v1103
        %v1112 = vcombine.high %v1087, %v1103
        %v1113 = vcombine.low %v1094, %v1110
        %v1114 = vcombine.high %v1094, %v1110
        %v1115 = vpack.c.bf16 %v1111, %v1043
        %v1116 = vpack.c.bf16 %v1112, %v1044
        %v1117 = vpack.c.bf16 %v1113, %v1045
        %v1118 = vpack.c.bf16 %v1114, %v1046
        %1121 = vrot.lane.b32.xlu0 %v776, 96
        %v1122 = vpop.permute.xlu0 %1121
        %1123 = vrot.lane.b32.xlu0 %v780, 96
        %v1124 = vpop.permute.xlu0 %1123
        %1127 = vrot.lane.b32.xlu0 %v776, 64
        %v1128 = vpop.permute.xlu0 %1127
        %1129 = vrot.lane.b32.xlu0 %v780, 64
        %v1130 = vpop.permute.xlu0 %1129
        %1133 = vrot.lane.b32.xlu0 %v776, 32
        %v1134 = vpop.permute.xlu0 %1133
        %1135 = vrot.lane.b32.xlu0 %v780, 32
        %v1136 = vpop.permute.xlu0 %1135
        %v1139 = vcombine.low %v776, %v1128
        %v1140 = vcombine.high %v776, %v1128
        %v1142 = vunpack.c.l.s4 1983009808
        %v1143 = vunpack.c.0.s8 %v1142
        %v1144 = vlaneseq
        %v1145 = vshrl.u32 %v1144, 7
        %v1146 = vsub.s32 %v1143, %v1145
        %v1147 = vrot.slane %v1139, %v1146
        %v1149 = vunpack.c.l.s4 1983009808
        %v1150 = vunpack.c.0.s8 %v1149
        %v1151 = vlaneseq
        %v1152 = vshrl.u32 %v1151, 7
        %v1153 = vsub.s32 %v1150, %v1152
        %v1154 = vrot.slane %v1140, %v1153
        %v1155 = vcombine.low %v1122, %v1134
        %v1156 = vcombine.high %v1122, %v1134
        %v1158 = vunpack.c.l.s4 1983009808
        %v1159 = vunpack.c.0.s8 %v1158
        %v1160 = vlaneseq
        %v1161 = vshrl.u32 %v1160, 7
        %v1162 = vsub.s32 %v1159, %v1161
        %v1163 = vrot.slane %v1155, %v1162
        %v1165 = vunpack.c.l.s4 1983009808
        %v1166 = vunpack.c.0.s8 %v1165
        %v1167 = vlaneseq
        %v1168 = vshrl.u32 %v1167, 7
        %v1169 = vsub.s32 %v1166, %v1168
        %v1170 = vrot.slane %v1156, %v1169
        %v1171 = vcombine.low %v1147, %v1163
        %v1172 = vcombine.high %v1147, %v1163
        %v1174 = vunpack.c.l.s4 1934713408
        %v1175 = vunpack.c.0.s8 %v1174
        %v1176 = vlaneseq
        %v1177 = vshrl.u32 %v1176, 7
        %v1178 = vsub.s32 %v1175, %v1177
        %v1179 = vrot.slane %v1171, %v1178
        %v1181 = vunpack.c.l.s4 1934713408
        %v1182 = vunpack.c.0.s8 %v1181
        %v1183 = vlaneseq
        %v1184 = vshrl.u32 %v1183, 7
        %v1185 = vsub.s32 %v1182, %v1184
        %v1186 = vrot.slane %v1172, %v1185
        %v1187 = vcombine.low %v1154, %v1170
        %v1188 = vcombine.high %v1154, %v1170
        %v1190 = vunpack.c.l.s4 1934713408
        %v1191 = vunpack.c.0.s8 %v1190
        %v1192 = vlaneseq
        %v1193 = vshrl.u32 %v1192, 7
        %v1194 = vsub.s32 %v1191, %v1193
        %v1195 = vrot.slane %v1187, %v1194
        %v1197 = vunpack.c.l.s4 1934713408
        %v1198 = vunpack.c.0.s8 %v1197
        %v1199 = vlaneseq
        %v1200 = vshrl.u32 %v1199, 7
        %v1201 = vsub.s32 %v1198, %v1200
        %v1202 = vrot.slane %v1188, %v1201
        %v1203 = vcombine.high %v1179, 0.0
        %v1204 = vcombine.high %v1186, 0.0
        %v1205 = vcombine.high %v1195, 0.0
        %v1206 = vcombine.high %v1202, 0.0
        %v1207 = vcombine.low %v780, %v1130
        %v1208 = vcombine.high %v780, %v1130
        %v1210 = vunpack.c.l.s4 1983009808
        %v1211 = vunpack.c.0.s8 %v1210
        %v1212 = vlaneseq
        %v1213 = vshrl.u32 %v1212, 7
        %v1214 = vsub.s32 %v1211, %v1213
        %v1215 = vrot.slane %v1207, %v1214
        %v1217 = vunpack.c.l.s4 1983009808
        %v1218 = vunpack.c.0.s8 %v1217
        %v1219 = vlaneseq
        %v1220 = vshrl.u32 %v1219, 7
        %v1221 = vsub.s32 %v1218, %v1220
        %v1222 = vrot.slane %v1208, %v1221
        %v1223 = vcombine.low %v1124, %v1136
        %v1224 = vcombine.high %v1124, %v1136
        %v1226 = vunpack.c.l.s4 1983009808
        %v1227 = vunpack.c.0.s8 %v1226
        %v1228 = vlaneseq
        %v1229 = vshrl.u32 %v1228, 7
        %v1230 = vsub.s32 %v1227, %v1229
        %v1231 = vrot.slane %v1223, %v1230
        %v1233 = vunpack.c.l.s4 1983009808
        %v1234 = vunpack.c.0.s8 %v1233
        %v1235 = vlaneseq
        %v1236 = vshrl.u32 %v1235, 7
        %v1237 = vsub.s32 %v1234, %v1236
        %v1238 = vrot.slane %v1224, %v1237
        %v1239 = vcombine.low %v1215, %v1231
        %v1240 = vcombine.high %v1215, %v1231
        %v1242 = vunpack.c.l.s4 1934713408
        %v1243 = vunpack.c.0.s8 %v1242
        %v1244 = vlaneseq
        %v1245 = vshrl.u32 %v1244, 7
        %v1246 = vsub.s32 %v1243, %v1245
        %v1247 = vrot.slane %v1239, %v1246
        %v1249 = vunpack.c.l.s4 1934713408
        %v1250 = vunpack.c.0.s8 %v1249
        %v1251 = vlaneseq
        %v1252 = vshrl.u32 %v1251, 7
        %v1253 = vsub.s32 %v1250, %v1252
        %v1254 = vrot.slane %v1240, %v1253
        %v1255 = vcombine.low %v1222, %v1238
        %v1256 = vcombine.high %v1222, %v1238
        %v1258 = vunpack.c.l.s4 1934713408
        %v1259 = vunpack.c.0.s8 %v1258
        %v1260 = vlaneseq
        %v1261 = vshrl.u32 %v1260, 7
        %v1262 = vsub.s32 %v1259, %v1261
        %v1263 = vrot.slane %v1255, %v1262
        %v1265 = vunpack.c.l.s4 1934713408
        %v1266 = vunpack.c.0.s8 %v1265
        %v1267 = vlaneseq
        %v1268 = vshrl.u32 %v1267, 7
        %v1269 = vsub.s32 %v1266, %v1268
        %v1270 = vrot.slane %v1256, %v1269
        %v1271 = vcombine.high %v1247, 0.0
        %v1272 = vcombine.high %v1254, 0.0
        %v1273 = vcombine.high %v1263, 0.0
        %v1274 = vcombine.high %v1270, 0.0
        %v1275 = vcombine.low %v1179, %v1186
        %v1277 = vunpack.c.l.s4 1983009808
        %v1278 = vunpack.c.0.s8 %v1277
        %v1279 = vlaneseq
        %v1280 = vshrl.u32 %v1279, 7
        %v1281 = vsub.s32 %v1278, %v1280
        %v1282 = vrot.slane %v1275, %v1281
        %v1283 = vcombine.low %v1203, %v1204
        %v1285 = vunpack.c.l.s4 1983009808
        %v1286 = vunpack.c.0.s8 %v1285
        %v1287 = vlaneseq
        %v1288 = vshrl.u32 %v1287, 7
        %v1289 = vsub.s32 %v1286, %v1288
        %v1290 = vrot.slane %v1283, %v1289
        %v1291 = vcombine.low %v1195, %v1202
        %v1293 = vunpack.c.l.s4 1983009808
        %v1294 = vunpack.c.0.s8 %v1293
        %v1295 = vlaneseq
        %v1296 = vshrl.u32 %v1295, 7
        %v1297 = vsub.s32 %v1294, %v1296
        %v1298 = vrot.slane %v1291, %v1297
        %v1299 = vcombine.low %v1205, %v1206
        %v1301 = vunpack.c.l.s4 1983009808
        %v1302 = vunpack.c.0.s8 %v1301
        %v1303 = vlaneseq
        %v1304 = vshrl.u32 %v1303, 7
        %v1305 = vsub.s32 %v1302, %v1304
        %v1306 = vrot.slane %v1299, %v1305
        %v1307 = vcombine.low %v1282, %v1290
        %v1308 = vcombine.high %v1282, %v1290
        %v1310 = vunpack.c.l.s4 1934713408
        %v1311 = vunpack.c.0.s8 %v1310
        %v1312 = vlaneseq
        %v1313 = vshrl.u32 %v1312, 7
        %v1314 = vsub.s32 %v1311, %v1313
        %v1315 = vrot.slane %v1307, %v1314
        %v1317 = vunpack.c.l.s4 1934713408
        %v1318 = vunpack.c.0.s8 %v1317
        %v1319 = vlaneseq
        %v1320 = vshrl.u32 %v1319, 7
        %v1321 = vsub.s32 %v1318, %v1320
        %v1322 = vrot.slane %v1308, %v1321
        %v1323 = vcombine.low %v1298, %v1306
        %v1324 = vcombine.high %v1298, %v1306
        %v1326 = vunpack.c.l.s4 1934713408
        %v1327 = vunpack.c.0.s8 %v1326
        %v1328 = vlaneseq
        %v1329 = vshrl.u32 %v1328, 7
        %v1330 = vsub.s32 %v1327, %v1329
        %v1331 = vrot.slane %v1323, %v1330
        %v1333 = vunpack.c.l.s4 1934713408
        %v1334 = vunpack.c.0.s8 %v1333
        %v1335 = vlaneseq
        %v1336 = vshrl.u32 %v1335, 7
        %v1337 = vsub.s32 %v1334, %v1336
        %v1338 = vrot.slane %v1324, %v1337
        %v1339 = vcombine.low %v1315, %v1331
        %v1340 = vcombine.high %v1315, %v1331
        %v1341 = vcombine.low %v1322, %v1338
        %v1342 = vcombine.high %v1322, %v1338
        %v1343 = vcombine.low %v1247, %v1254
        %v1345 = vunpack.c.l.s4 1983009808
        %v1346 = vunpack.c.0.s8 %v1345
        %v1347 = vlaneseq
        %v1348 = vshrl.u32 %v1347, 7
        %v1349 = vsub.s32 %v1346, %v1348
        %v1350 = vrot.slane %v1343, %v1349
        %v1351 = vcombine.low %v1271, %v1272
        %v1353 = vunpack.c.l.s4 1983009808
        %v1354 = vunpack.c.0.s8 %v1353
        %v1355 = vlaneseq
        %v1356 = vshrl.u32 %v1355, 7
        %v1357 = vsub.s32 %v1354, %v1356
        %v1358 = vrot.slane %v1351, %v1357
        %v1359 = vcombine.low %v1263, %v1270
        %v1361 = vunpack.c.l.s4 1983009808
        %v1362 = vunpack.c.0.s8 %v1361
        %v1363 = vlaneseq
        %v1364 = vshrl.u32 %v1363, 7
        %v1365 = vsub.s32 %v1362, %v1364
        %v1366 = vrot.slane %v1359, %v1365
        %v1367 = vcombine.low %v1273, %v1274
        %v1369 = vunpack.c.l.s4 1983009808
        %v1370 = vunpack.c.0.s8 %v1369
        %v1371 = vlaneseq
        %v1372 = vshrl.u32 %v1371, 7
        %v1373 = vsub.s32 %v1370, %v1372
        %v1374 = vrot.slane %v1367, %v1373
        %v1375 = vcombine.low %v1350, %v1358
        %v1376 = vcombine.high %v1350, %v1358
        %v1378 = vunpack.c.l.s4 1934713408
        %v1379 = vunpack.c.0.s8 %v1378
        %v1380 = vlaneseq
        %v1381 = vshrl.u32 %v1380, 7
        %v1382 = vsub.s32 %v1379, %v1381
        %v1383 = vrot.slane %v1375, %v1382
        %v1385 = vunpack.c.l.s4 1934713408
        %v1386 = vunpack.c.0.s8 %v1385
        %v1387 = vlaneseq
        %v1388 = vshrl.u32 %v1387, 7
        %v1389 = vsub.s32 %v1386, %v1388
        %v1390 = vrot.slane %v1376, %v1389
        %v1391 = vcombine.low %v1366, %v1374
        %v1392 = vcombine.high %v1366, %v1374
        %v1394 = vunpack.c.l.s4 1934713408
        %v1395 = vunpack.c.0.s8 %v1394
        %v1396 = vlaneseq
        %v1397 = vshrl.u32 %v1396, 7
        %v1398 = vsub.s32 %v1395, %v1397
        %v1399 = vrot.slane %v1391, %v1398
        %v1401 = vunpack.c.l.s4 1934713408
        %v1402 = vunpack.c.0.s8 %v1401
        %v1403 = vlaneseq
        %v1404 = vshrl.u32 %v1403, 7
        %v1405 = vsub.s32 %v1402, %v1404
        %v1406 = vrot.slane %v1392, %v1405
        %v1407 = vcombine.low %v1383, %v1399
        %v1408 = vcombine.high %v1383, %v1399
        %v1409 = vcombine.low %v1390, %v1406
        %v1410 = vcombine.high %v1390, %v1406
        %v1411 = vpack.c.bf16 %v1407, %v1339
        %v1412 = vpack.c.bf16 %v1408, %v1340
        %v1413 = vpack.c.bf16 %v1409, %v1341
        %v1414 = vpack.c.bf16 %v1410, %v1342
        %1417 = vrot.lane.b32.xlu0 %v817, 96
        %v1418 = vpop.permute.xlu0 %1417
        %1419 = vrot.lane.b32.xlu0 %v820, 96
        %v1420 = vpop.permute.xlu0 %1419
        %1423 = vrot.lane.b32.xlu0 %v817, 64
        %v1424 = vpop.permute.xlu0 %1423
        %1425 = vrot.lane.b32.xlu0 %v820, 64
        %v1426 = vpop.permute.xlu0 %1425
        %1429 = vrot.lane.b32.xlu0 %v817, 32
        %v1430 = vpop.permute.xlu0 %1429
        %1431 = vrot.lane.b32.xlu0 %v820, 32
        %v1432 = vpop.permute.xlu0 %1431
        %v1435 = vcombine.low %v817, %v1424
        %v1436 = vcombine.high %v817, %v1424
        %v1438 = vunpack.c.l.s4 1983009808
        %v1439 = vunpack.c.0.s8 %v1438
        %v1440 = vlaneseq
        %v1441 = vshrl.u32 %v1440, 7
        %v1442 = vsub.s32 %v1439, %v1441
        %v1443 = vrot.slane %v1435, %v1442
        %v1445 = vunpack.c.l.s4 1983009808
        %v1446 = vunpack.c.0.s8 %v1445
        %v1447 = vlaneseq
        %v1448 = vshrl.u32 %v1447, 7
        %v1449 = vsub.s32 %v1446, %v1448
        %v1450 = vrot.slane %v1436, %v1449
        %v1451 = vcombine.low %v1418, %v1430
        %v1452 = vcombine.high %v1418, %v1430
        %v1454 = vunpack.c.l.s4 1983009808
        %v1455 = vunpack.c.0.s8 %v1454
        %v1456 = vlaneseq
        %v1457 = vshrl.u32 %v1456, 7
        %v1458 = vsub.s32 %v1455, %v1457
        %v1459 = vrot.slane %v1451, %v1458
        %v1461 = vunpack.c.l.s4 1983009808
        %v1462 = vunpack.c.0.s8 %v1461
        %v1463 = vlaneseq
        %v1464 = vshrl.u32 %v1463, 7
        %v1465 = vsub.s32 %v1462, %v1464
        %v1466 = vrot.slane %v1452, %v1465
        %v1467 = vcombine.low %v1443, %v1459
        %v1468 = vcombine.high %v1443, %v1459
        %v1470 = vunpack.c.l.s4 1934713408
        %v1471 = vunpack.c.0.s8 %v1470
        %v1472 = vlaneseq
        %v1473 = vshrl.u32 %v1472, 7
        %v1474 = vsub.s32 %v1471, %v1473
        %v1475 = vrot.slane %v1467, %v1474
        %v1477 = vunpack.c.l.s4 1934713408
        %v1478 = vunpack.c.0.s8 %v1477
        %v1479 = vlaneseq
        %v1480 = vshrl.u32 %v1479, 7
        %v1481 = vsub.s32 %v1478, %v1480
        %v1482 = vrot.slane %v1468, %v1481
        %v1483 = vcombine.low %v1450, %v1466
        %v1484 = vcombine.high %v1450, %v1466
        %v1486 = vunpack.c.l.s4 1934713408
        %v1487 = vunpack.c.0.s8 %v1486
        %v1488 = vlaneseq
        %v1489 = vshrl.u32 %v1488, 7
        %v1490 = vsub.s32 %v1487, %v1489
        %v1491 = vrot.slane %v1483, %v1490
        %v1493 = vunpack.c.l.s4 1934713408
        %v1494 = vunpack.c.0.s8 %v1493
        %v1495 = vlaneseq
        %v1496 = vshrl.u32 %v1495, 7
        %v1497 = vsub.s32 %v1494, %v1496
        %v1498 = vrot.slane %v1484, %v1497
        %v1499 = vcombine.high %v1475, 0.0
        %v1500 = vcombine.high %v1482, 0.0
        %v1501 = vcombine.high %v1491, 0.0
        %v1502 = vcombine.high %v1498, 0.0
        %v1503 = vcombine.low %v820, %v1426
        %v1504 = vcombine.high %v820, %v1426
        %v1506 = vunpack.c.l.s4 1983009808
        %v1507 = vunpack.c.0.s8 %v1506
        %v1508 = vlaneseq
        %v1509 = vshrl.u32 %v1508, 7
        %v1510 = vsub.s32 %v1507, %v1509
        %v1511 = vrot.slane %v1503, %v1510
        %v1513 = vunpack.c.l.s4 1983009808
        %v1514 = vunpack.c.0.s8 %v1513
        %v1515 = vlaneseq
        %v1516 = vshrl.u32 %v1515, 7
        %v1517 = vsub.s32 %v1514, %v1516
        %v1518 = vrot.slane %v1504, %v1517
        %v1519 = vcombine.low %v1420, %v1432
        %v1520 = vcombine.high %v1420, %v1432
        %v1522 = vunpack.c.l.s4 1983009808
        %v1523 = vunpack.c.0.s8 %v1522
        %v1524 = vlaneseq
        %v1525 = vshrl.u32 %v1524, 7
        %v1526 = vsub.s32 %v1523, %v1525
        %v1527 = vrot.slane %v1519, %v1526
        %v1529 = vunpack.c.l.s4 1983009808
        %v1530 = vunpack.c.0.s8 %v1529
        %v1531 = vlaneseq
        %v1532 = vshrl.u32 %v1531, 7
        %v1533 = vsub.s32 %v1530, %v1532
        %v1534 = vrot.slane %v1520, %v1533
        %v1535 = vcombine.low %v1511, %v1527
        %v1536 = vcombine.high %v1511, %v1527
        %v1538 = vunpack.c.l.s4 1934713408
        %v1539 = vunpack.c.0.s8 %v1538
        %v1540 = vlaneseq
        %v1541 = vshrl.u32 %v1540, 7
        %v1542 = vsub.s32 %v1539, %v1541
        %v1543 = vrot.slane %v1535, %v1542
        %v1545 = vunpack.c.l.s4 1934713408
        %v1546 = vunpack.c.0.s8 %v1545
        %v1547 = vlaneseq
        %v1548 = vshrl.u32 %v1547, 7
        %v1549 = vsub.s32 %v1546, %v1548
        %v1550 = vrot.slane %v1536, %v1549
        %v1551 = vcombine.low %v1518, %v1534
        %v1552 = vcombine.high %v1518, %v1534
        %v1554 = vunpack.c.l.s4 1934713408
        %v1555 = vunpack.c.0.s8 %v1554
        %v1556 = vlaneseq
        %v1557 = vshrl.u32 %v1556, 7
        %v1558 = vsub.s32 %v1555, %v1557
        %v1559 = vrot.slane %v1551, %v1558
        %v1561 = vunpack.c.l.s4 1934713408
        %v1562 = vunpack.c.0.s8 %v1561
        %v1563 = vlaneseq
        %v1564 = vshrl.u32 %v1563, 7
        %v1565 = vsub.s32 %v1562, %v1564
        %v1566 = vrot.slane %v1552, %v1565
        %v1567 = vcombine.high %v1543, 0.0
        %v1568 = vcombine.high %v1550, 0.0
        %v1569 = vcombine.high %v1559, 0.0
        %v1570 = vcombine.high %v1566, 0.0
        %v1571 = vcombine.low %v1475, %v1482
        %v1573 = vunpack.c.l.s4 1983009808
        %v1574 = vunpack.c.0.s8 %v1573
        %v1575 = vlaneseq
        %v1576 = vshrl.u32 %v1575, 7
        %v1577 = vsub.s32 %v1574, %v1576
        %v1578 = vrot.slane %v1571, %v1577
        %v1579 = vcombine.low %v1499, %v1500
        %v1581 = vunpack.c.l.s4 1983009808
        %v1582 = vunpack.c.0.s8 %v1581
        %v1583 = vlaneseq
        %v1584 = vshrl.u32 %v1583, 7
        %v1585 = vsub.s32 %v1582, %v1584
        %v1586 = vrot.slane %v1579, %v1585
        %v1587 = vcombine.low %v1491, %v1498
        %v1589 = vunpack.c.l.s4 1983009808
        %v1590 = vunpack.c.0.s8 %v1589
        %v1591 = vlaneseq
        %v1592 = vshrl.u32 %v1591, 7
        %v1593 = vsub.s32 %v1590, %v1592
        %v1594 = vrot.slane %v1587, %v1593
        %v1595 = vcombine.low %v1501, %v1502
        %v1597 = vunpack.c.l.s4 1983009808
        %v1598 = vunpack.c.0.s8 %v1597
        %v1599 = vlaneseq
        %v1600 = vshrl.u32 %v1599, 7
        %v1601 = vsub.s32 %v1598, %v1600
        %v1602 = vrot.slane %v1595, %v1601
        %v1603 = vcombine.low %v1578, %v1586
        %v1604 = vcombine.high %v1578, %v1586
        %v1606 = vunpack.c.l.s4 1934713408
        %v1607 = vunpack.c.0.s8 %v1606
        %v1608 = vlaneseq
        %v1609 = vshrl.u32 %v1608, 7
        %v1610 = vsub.s32 %v1607, %v1609
        %v1611 = vrot.slane %v1603, %v1610
        %v1613 = vunpack.c.l.s4 1934713408
        %v1614 = vunpack.c.0.s8 %v1613
        %v1615 = vlaneseq
        %v1616 = vshrl.u32 %v1615, 7
        %v1617 = vsub.s32 %v1614, %v1616
        %v1618 = vrot.slane %v1604, %v1617
        %v1619 = vcombine.low %v1594, %v1602
        %v1620 = vcombine.high %v1594, %v1602
        %v1622 = vunpack.c.l.s4 1934713408
        %v1623 = vunpack.c.0.s8 %v1622
        %v1624 = vlaneseq
        %v1625 = vshrl.u32 %v1624, 7
        %v1626 = vsub.s32 %v1623, %v1625
        %v1627 = vrot.slane %v1619, %v1626
        %v1629 = vunpack.c.l.s4 1934713408
        %v1630 = vunpack.c.0.s8 %v1629
        %v1631 = vlaneseq
        %v1632 = vshrl.u32 %v1631, 7
        %v1633 = vsub.s32 %v1630, %v1632
        %v1634 = vrot.slane %v1620, %v1633
        %v1635 = vcombine.low %v1611, %v1627
        %v1636 = vcombine.high %v1611, %v1627
        %v1637 = vcombine.low %v1618, %v1634
        %v1638 = vcombine.high %v1618, %v1634
        %v1639 = vcombine.low %v1543, %v1550
        %v1641 = vunpack.c.l.s4 1983009808
        %v1642 = vunpack.c.0.s8 %v1641
        %v1643 = vlaneseq
        %v1644 = vshrl.u32 %v1643, 7
        %v1645 = vsub.s32 %v1642, %v1644
        %v1646 = vrot.slane %v1639, %v1645
        %v1647 = vcombine.low %v1567, %v1568
        %v1649 = vunpack.c.l.s4 1983009808
        %v1650 = vunpack.c.0.s8 %v1649
        %v1651 = vlaneseq
        %v1652 = vshrl.u32 %v1651, 7
        %v1653 = vsub.s32 %v1650, %v1652
        %v1654 = vrot.slane %v1647, %v1653
        %v1655 = vcombine.low %v1559, %v1566
        %v1657 = vunpack.c.l.s4 1983009808
        %v1658 = vunpack.c.0.s8 %v1657
        %v1659 = vlaneseq
        %v1660 = vshrl.u32 %v1659, 7
        %v1661 = vsub.s32 %v1658, %v1660
        %v1662 = vrot.slane %v1655, %v1661
        %v1663 = vcombine.low %v1569, %v1570
        %v1665 = vunpack.c.l.s4 1983009808
        %v1666 = vunpack.c.0.s8 %v1665
        %v1667 = vlaneseq
        %v1668 = vshrl.u32 %v1667, 7
        %v1669 = vsub.s32 %v1666, %v1668
        %v1670 = vrot.slane %v1663, %v1669
        %v1671 = vcombine.low %v1646, %v1654
        %v1672 = vcombine.high %v1646, %v1654
        %v1674 = vunpack.c.l.s4 1934713408
        %v1675 = vunpack.c.0.s8 %v1674
        %v1676 = vlaneseq
        %v1677 = vshrl.u32 %v1676, 7
        %v1678 = vsub.s32 %v1675, %v1677
        %v1679 = vrot.slane %v1671, %v1678
        %v1681 = vunpack.c.l.s4 1934713408
        %v1682 = vunpack.c.0.s8 %v1681
        %v1683 = vlaneseq
        %v1684 = vshrl.u32 %v1683, 7
        %v1685 = vsub.s32 %v1682, %v1684
        %v1686 = vrot.slane %v1672, %v1685
        %v1687 = vcombine.low %v1662, %v1670
        %v1688 = vcombine.high %v1662, %v1670
        %v1690 = vunpack.c.l.s4 1934713408
        %v1691 = vunpack.c.0.s8 %v1690
        %v1692 = vlaneseq
        %v1693 = vshrl.u32 %v1692, 7
        %v1694 = vsub.s32 %v1691, %v1693
        %v1695 = vrot.slane %v1687, %v1694
        %v1697 = vunpack.c.l.s4 1934713408
        %v1698 = vunpack.c.0.s8 %v1697
        %v1699 = vlaneseq
        %v1700 = vshrl.u32 %v1699, 7
        %v1701 = vsub.s32 %v1698, %v1700
        %v1702 = vrot.slane %v1688, %v1701
        %v1703 = vcombine.low %v1679, %v1695
        %v1704 = vcombine.high %v1679, %v1695
        %v1705 = vcombine.low %v1686, %v1702
        %v1706 = vcombine.high %v1686, %v1702
        %v1707 = vpack.c.bf16 %v1703, %v1635
        %v1708 = vpack.c.bf16 %v1704, %v1636
        %v1709 = vpack.c.bf16 %v1705, %v1637
        %v1710 = vpack.c.bf16 %v1706, %v1638
        %vm1711 = vcmask 261120
        %v1713 = vsel %vm1711, %v1115, 0
        %v1716 = vsel %vm1711, %v1411, 0
        %1718 = vmatprep.subr.bf16.mxu0 0
        %1719 = vmatpush1.bf16.xpose.msra.mxu0 %v1716
        %1720 = vmatprep.subr.bf16.mxu0 0
        %1721 = vmatpush1.bf16.xpose.msra.mxu0 0
        %1722 = vmatprep.subr.bf16.mxu0 0
        %1723 = vmatpush1.bf16.xpose.msra.mxu0 0
        %1724 = vmatprep.subr.bf16.mxu0 0
        %1725 = vmatpush1.bf16.xpose.msra.mxu0 0
        %1726 = vmatprep.subr.bf16.mxu0 0
        %1727 = vmatpush1.bf16.xpose.msra.mxu0 0
        %1728 = vmatprep.subr.bf16.mxu0 0
        %1729 = vmatpush1.bf16.xpose.msra.mxu0 0
        %1730 = vmatprep.subr.bf16.mxu0 0
        %1731 = vmatpush1.bf16.xpose.msra.mxu0 0
        %1732 = vmatprep.subr.bf16.mxu0 0
        %1733 = vmatpush1.bf16.xpose.msra.mxu0 0
        %1734 = vmatprep.subr.bf16.mxu0 0
        %1735 = vmatpush1.bf16.xpose.msra.mxu0 0
        %1736 = vmatprep.subr.bf16.mxu0 0
        %1737 = vmatpush1.bf16.xpose.msra.mxu0 0
        %1738 = vmatprep.subr.bf16.mxu0 0
        %1739 = vmatpush1.bf16.xpose.msra.mxu0 0
        %1740 = vmatprep.subr.bf16.mxu0 0
        %1741 = vmatpush1.bf16.xpose.msra.mxu0 0
        %1742 = vmatprep.subr.bf16.mxu0 0
        %1743 = vmatpush1.bf16.xpose.msra.mxu0 0
        %1744 = vmatprep.subr.bf16.mxu0 0
        %1745 = vmatpush1.bf16.xpose.msra.mxu0 0
        %1746 = vmatprep.subr.bf16.mxu0 0
        %1747 = vmatpush1.bf16.xpose.msra.mxu0 0
        %1748 = vmatprep.subr.bf16.mxu0 0
        %1749 = vmatpush1.bf16.xpose.msra.mxu0 0
        %1750 = vmatprep.mubr.bf16.mxu0 0
        %1751 = vmatmul.mubr.bf16.gmra.mrb[0].mxu0 %v1713
        %v1752 = vpop.f32.mrb[0].mxu0
        %v1753 = vadd.f32 0.0, %v1752
        %v1754 = vpop.f32.mrb[0].mxu0
        %v1755 = vpop.f32.mrb[0].mxu0
        %v1756 = vadd.f32 0.0, %v1755
        %v1757 = vpop.f32.mrb[0].mxu0
        %1758 = vdwg.mxu0
        %v1760 = vsel %vm1711, %v1116, 0
        %v1763 = vsel %vm1711, %v1412, 0
        %1765 = vmatprep.subr.bf16.mxu0 0
        %1766 = vmatpush1.bf16.xpose.msra.mxu0 %v1763
        %1767 = vmatprep.subr.bf16.mxu0 0
        %1768 = vmatpush1.bf16.xpose.msra.mxu0 0
        %1769 = vmatprep.subr.bf16.mxu0 0
        %1770 = vmatpush1.bf16.xpose.msra.mxu0 0
        %1771 = vmatprep.subr.bf16.mxu0 0
        %1772 = vmatpush1.bf16.xpose.msra.mxu0 0
        %1773 = vmatprep.subr.bf16.mxu0 0
        %1774 = vmatpush1.bf16.xpose.msra.mxu0 0
        %1775 = vmatprep.subr.bf16.mxu0 0
        %1776 = vmatpush1.bf16.xpose.msra.mxu0 0
        %1777 = vmatprep.subr.bf16.mxu0 0
        %1778 = vmatpush1.bf16.xpose.msra.mxu0 0
        %1779 = vmatprep.subr.bf16.mxu0 0
        %1780 = vmatpush1.bf16.xpose.msra.mxu0 0
        %1781 = vmatprep.subr.bf16.mxu0 0
        %1782 = vmatpush1.bf16.xpose.msra.mxu0 0
        %1783 = vmatprep.subr.bf16.mxu0 0
        %1784 = vmatpush1.bf16.xpose.msra.mxu0 0
        %1785 = vmatprep.subr.bf16.mxu0 0
        %1786 = vmatpush1.bf16.xpose.msra.mxu0 0
        %1787 = vmatprep.subr.bf16.mxu0 0
        %1788 = vmatpush1.bf16.xpose.msra.mxu0 0
        %1789 = vmatprep.subr.bf16.mxu0 0
        %1790 = vmatpush1.bf16.xpose.msra.mxu0 0
        %1791 = vmatprep.subr.bf16.mxu0 0
        %1792 = vmatpush1.bf16.xpose.msra.mxu0 0
        %1793 = vmatprep.subr.bf16.mxu0 0
        %1794 = vmatpush1.bf16.xpose.msra.mxu0 0
        %1795 = vmatprep.subr.bf16.mxu0 0
        %1796 = vmatpush1.bf16.xpose.msra.mxu0 0
        %1797 = vmatprep.mubr.bf16.mxu0 0
        %1798 = vmatmul.mubr.bf16.gmra.mrb[0].mxu0 %v1760
        %v1799 = vpop.f32.mrb[0].mxu0
        %v1800 = vadd.f32 0.0, %v1799
        %v1801 = vpop.f32.mrb[0].mxu0
        %v1802 = vpop.f32.mrb[0].mxu0
        %v1803 = vadd.f32 0.0, %v1802
        %v1804 = vpop.f32.mrb[0].mxu0
        %1805 = vdwg.mxu0
        %v1807 = vsel %vm1711, %v1117, 0
        %v1810 = vsel %vm1711, %v1413, 0
        %1812 = vmatprep.subr.bf16.mxu0 0
        %1813 = vmatpush1.bf16.xpose.msra.mxu0 %v1810
        %1814 = vmatprep.subr.bf16.mxu0 0
        %1815 = vmatpush1.bf16.xpose.msra.mxu0 0
        %1816 = vmatprep.subr.bf16.mxu0 0
        %1817 = vmatpush1.bf16.xpose.msra.mxu0 0
        %1818 = vmatprep.subr.bf16.mxu0 0
        %1819 = vmatpush1.bf16.xpose.msra.mxu0 0
        %1820 = vmatprep.subr.bf16.mxu0 0
        %1821 = vmatpush1.bf16.xpose.msra.mxu0 0
        %1822 = vmatprep.subr.bf16.mxu0 0
        %1823 = vmatpush1.bf16.xpose.msra.mxu0 0
        %1824 = vmatprep.subr.bf16.mxu0 0
        %1825 = vmatpush1.bf16.xpose.msra.mxu0 0
        %1826 = vmatprep.subr.bf16.mxu0 0
        %1827 = vmatpush1.bf16.xpose.msra.mxu0 0
        %1828 = vmatprep.subr.bf16.mxu0 0
        %1829 = vmatpush1.bf16.xpose.msra.mxu0 0
        %1830 = vmatprep.subr.bf16.mxu0 0
        %1831 = vmatpush1.bf16.xpose.msra.mxu0 0
        %1832 = vmatprep.subr.bf16.mxu0 0
        %1833 = vmatpush1.bf16.xpose.msra.mxu0 0
        %1834 = vmatprep.subr.bf16.mxu0 0
        %1835 = vmatpush1.bf16.xpose.msra.mxu0 0
        %1836 = vmatprep.subr.bf16.mxu0 0
        %1837 = vmatpush1.bf16.xpose.msra.mxu0 0
        %1838 = vmatprep.subr.bf16.mxu0 0
        %1839 = vmatpush1.bf16.xpose.msra.mxu0 0
        %1840 = vmatprep.subr.bf16.mxu0 0
        %1841 = vmatpush1.bf16.xpose.msra.mxu0 0
        %1842 = vmatprep.subr.bf16.mxu0 0
        %1843 = vmatpush1.bf16.xpose.msra.mxu0 0
        %1844 = vmatprep.mubr.bf16.mxu0 0
        %1845 = vmatmul.mubr.bf16.gmra.mrb[0].mxu0 %v1807
        %v1846 = vpop.f32.mrb[0].mxu0
        %v1847 = vadd.f32 0.0, %v1846
        %v1848 = vpop.f32.mrb[0].mxu0
        %v1849 = vpop.f32.mrb[0].mxu0
        %v1850 = vadd.f32 0.0, %v1849
        %v1851 = vpop.f32.mrb[0].mxu0
        %1852 = vdwg.mxu0
        %v1854 = vsel %vm1711, %v1118, 0
        %v1857 = vsel %vm1711, %v1414, 0
        %1859 = vmatprep.subr.bf16.mxu0 0
        %1860 = vmatpush1.bf16.xpose.msra.mxu0 %v1857
        %1861 = vmatprep.subr.bf16.mxu0 0
        %1862 = vmatpush1.bf16.xpose.msra.mxu0 0
        %1863 = vmatprep.subr.bf16.mxu0 0
        %1864 = vmatpush1.bf16.xpose.msra.mxu0 0
        %1865 = vmatprep.subr.bf16.mxu0 0
        %1866 = vmatpush1.bf16.xpose.msra.mxu0 0
        %1867 = vmatprep.subr.bf16.mxu0 0
        %1868 = vmatpush1.bf16.xpose.msra.mxu0 0
        %1869 = vmatprep.subr.bf16.mxu0 0
        %1870 = vmatpush1.bf16.xpose.msra.mxu0 0
        %1871 = vmatprep.subr.bf16.mxu0 0
        %1872 = vmatpush1.bf16.xpose.msra.mxu0 0
        %1873 = vmatprep.subr.bf16.mxu0 0
        %1874 = vmatpush1.bf16.xpose.msra.mxu0 0
        %1875 = vmatprep.subr.bf16.mxu0 0
        %1876 = vmatpush1.bf16.xpose.msra.mxu0 0
        %1877 = vmatprep.subr.bf16.mxu0 0
        %1878 = vmatpush1.bf16.xpose.msra.mxu0 0
        %1879 = vmatprep.subr.bf16.mxu0 0
        %1880 = vmatpush1.bf16.xpose.msra.mxu0 0
        %1881 = vmatprep.subr.bf16.mxu0 0
        %1882 = vmatpush1.bf16.xpose.msra.mxu0 0
        %1883 = vmatprep.subr.bf16.mxu0 0
        %1884 = vmatpush1.bf16.xpose.msra.mxu0 0
        %1885 = vmatprep.subr.bf16.mxu0 0
        %1886 = vmatpush1.bf16.xpose.msra.mxu0 0
        %1887 = vmatprep.subr.bf16.mxu0 0
        %1888 = vmatpush1.bf16.xpose.msra.mxu0 0
        %1889 = vmatprep.subr.bf16.mxu0 0
        %1890 = vmatpush1.bf16.xpose.msra.mxu0 0
        %1891 = vmatprep.mubr.bf16.mxu0 0
        %1892 = vmatmul.mubr.bf16.gmra.mrb[0].mxu0 %v1854
        %v1893 = vpop.f32.mrb[0].mxu0
        %v1894 = vadd.f32 0.0, %v1893
        %v1895 = vpop.f32.mrb[0].mxu0
        %v1896 = vpop.f32.mrb[0].mxu0
        %v1897 = vadd.f32 0.0, %v1896
        %v1898 = vpop.f32.mrb[0].mxu0
        %1899 = vdwg.mxu0
        %vm1900 = vcmask 130048
        %v1901 = vsel %vm1900, %v1753, -inf
        %1902 = vmax.xlane.f32.xlu0 %v1901
        %v1903 = vpop.xlane.xlu0 %1902
        %v1904 = vsel %vm1900, %v1756, -inf
        %1905 = vmax.xlane.f32.xlu0 %v1904
        %v1906 = vpop.xlane.xlu0 %1905
        %v1907 = vsel %vm1900, %v1800, -inf
        %1908 = vmax.xlane.f32.xlu0 %v1907
        %v1909 = vpop.xlane.xlu0 %1908
        %v1910 = vsel %vm1900, %v1803, -inf
        %1911 = vmax.xlane.f32.xlu0 %v1910
        %v1912 = vpop.xlane.xlu0 %1911
        %v1913 = vsel %vm1900, %v1847, -inf
        %1914 = vmax.xlane.f32.xlu0 %v1913
        %v1915 = vpop.xlane.xlu0 %1914
        %v1916 = vsel %vm1900, %v1850, -inf
        %1917 = vmax.xlane.f32.xlu0 %v1916
        %v1918 = vpop.xlane.xlu0 %1917
        %v1919 = vsel %vm1900, %v1894, -inf
        %1920 = vmax.xlane.f32.xlu0 %v1919
        %v1921 = vpop.xlane.xlu0 %1920
        %v1922 = vsel %vm1900, %v1897, -inf
        %1923 = vmax.xlane.f32.xlu0 %v1922
        %v1924 = vpop.xlane.xlu0 %1923
        %v1925 = vsub.f32 %v1753, %v1903
        %v1926 = vsub.f32 %v1756, %v1906
        %v1927 = vsub.f32 %v1800, %v1909
        %v1928 = vsub.f32 %v1803, %v1912
        %v1929 = vsub.f32 %v1847, %v1915
        %v1930 = vsub.f32 %v1850, %v1918
        %v1931 = vsub.f32 %v1894, %v1921
        %v1932 = vsub.f32 %v1897, %v1924
        %v1933 = vmul.f32 %v1925, 1.442695
        %v1934 = vpow.pop %v1933
        %v1935 = vmul.f32 %v1926, 1.442695
        %v1936 = vpow.pop %v1935
        %v1937 = vmul.f32 %v1927, 1.442695
        %v1938 = vpow.pop %v1937
        %v1939 = vmul.f32 %v1928, 1.442695
        %v1940 = vpow.pop %v1939
        %v1941 = vmul.f32 %v1929, 1.442695
        %v1942 = vpow.pop %v1941
        %v1943 = vmul.f32 %v1930, 1.442695
        %v1944 = vpow.pop %v1943
        %v1945 = vmul.f32 %v1931, 1.442695
        %v1946 = vpow.pop %v1945
        %v1947 = vmul.f32 %v1932, 1.442695
        %v1948 = vpow.pop %v1947
        %v1949 = vsel %vm1900, %v1934, 0.0
        %1950 = vadd.xlane.f32.xlu0 %v1949
        %v1951 = vpop.xlane.xlu0 %1950
        %v1952 = vsel %vm1900, %v1936, 0.0
        %1953 = vadd.xlane.f32.xlu0 %v1952
        %v1954 = vpop.xlane.xlu0 %1953
        %v1955 = vsel %vm1900, %v1938, 0.0
        %1956 = vadd.xlane.f32.xlu0 %v1955
        %v1957 = vpop.xlane.xlu0 %1956
        %v1958 = vsel %vm1900, %v1940, 0.0
        %1959 = vadd.xlane.f32.xlu0 %v1958
        %v1960 = vpop.xlane.xlu0 %1959
        %v1961 = vsel %vm1900, %v1942, 0.0
        %1962 = vadd.xlane.f32.xlu0 %v1961
        %v1963 = vpop.xlane.xlu0 %1962
        %v1964 = vsel %vm1900, %v1944, 0.0
        %1965 = vadd.xlane.f32.xlu0 %v1964
        %v1966 = vpop.xlane.xlu0 %1965
        %v1967 = vsel %vm1900, %v1946, 0.0
        %1968 = vadd.xlane.f32.xlu0 %v1967
        %v1969 = vpop.xlane.xlu0 %1968
        %v1970 = vsel %vm1900, %v1948, 0.0
        %1971 = vadd.xlane.f32.xlu0 %v1970
        %v1972 = vpop.xlane.xlu0 %1971
        %v1973 = vrcp.pop %v1951
        %v1974 = vrcp.pop %v1954
        %v1975 = vrcp.pop %v1957
        %v1976 = vrcp.pop %v1960
        %v1977 = vrcp.pop %v1963
        %v1978 = vrcp.pop %v1966
        %v1979 = vrcp.pop %v1969
        %v1980 = vrcp.pop %v1972
        %v1981 = vmul.f32 %v1934, %v1973
        %v1982 = vmul.f32 %v1936, %v1974
        %v1983 = vmul.f32 %v1938, %v1975
        %v1984 = vmul.f32 %v1940, %v1976
        %v1985 = vmul.f32 %v1942, %v1977
        %v1986 = vmul.f32 %v1944, %v1978
        %v1987 = vmul.f32 %v1946, %v1979
        %v1988 = vmul.f32 %v1948, %v1980
        %v1989 = vpack.c.bf16 %v1982, %v1981
        %v1990 = vpack.c.bf16 %v1984, %v1983
        %v1991 = vpack.c.bf16 %v1986, %v1985
        %v1992 = vpack.c.bf16 %v1988, %v1987
        %v1994 = vsel %vm1900, %v1989, 0
        %1996 = vmatprep.subr.bf16.mxu0 0
        %1997 = vmatpush1.bf16.msra.mxu0 %v1707
        %1998 = vmatprep.subr.bf16.mxu0 0
        %1999 = vmatpush1.bf16.msra.mxu0 0
        %2000 = vmatprep.subr.bf16.mxu0 0
        %2001 = vmatpush1.bf16.msra.mxu0 0
        %2002 = vmatprep.subr.bf16.mxu0 0
        %2003 = vmatpush1.bf16.msra.mxu0 0
        %2004 = vmatprep.subr.bf16.mxu0 0
        %2005 = vmatpush1.bf16.msra.mxu0 0
        %2006 = vmatprep.subr.bf16.mxu0 0
        %2007 = vmatpush1.bf16.msra.mxu0 0
        %2008 = vmatprep.subr.bf16.mxu0 0
        %2009 = vmatpush1.bf16.msra.mxu0 0
        %2010 = vmatprep.subr.bf16.mxu0 0
        %2011 = vmatpush1.bf16.msra.mxu0 0
        %2012 = vmatprep.subr.bf16.mxu0 0
        %2013 = vmatpush1.bf16.msra.mxu0 0
        %2014 = vmatprep.subr.bf16.mxu0 0
        %2015 = vmatpush1.bf16.msra.mxu0 0
        %2016 = vmatprep.subr.bf16.mxu0 0
        %2017 = vmatpush1.bf16.msra.mxu0 0
        %2018 = vmatprep.subr.bf16.mxu0 0
        %2019 = vmatpush1.bf16.msra.mxu0 0
        %2020 = vmatprep.subr.bf16.mxu0 0
        %2021 = vmatpush1.bf16.msra.mxu0 0
        %2022 = vmatprep.subr.bf16.mxu0 0
        %2023 = vmatpush1.bf16.msra.mxu0 0
        %2024 = vmatprep.subr.bf16.mxu0 0
        %2025 = vmatpush1.bf16.msra.mxu0 0
        %2026 = vmatprep.subr.bf16.mxu0 0
        %2027 = vmatpush1.bf16.msra.mxu0 0
        %2028 = vmatprep.mubr.bf16.mxu0 0
        %2029 = vmatmul.mubr.bf16.gmra.mrb[0].mxu0 %v1994
        %v2030 = vpop.f32.mrb[0].mxu0
        %v2031 = vadd.f32 0.0, %v2030
        %v2032 = vpop.f32.mrb[0].mxu0
        %v2033 = vpop.f32.mrb[0].mxu0
        %v2034 = vadd.f32 0.0, %v2033
        %v2035 = vpop.f32.mrb[0].mxu0
        %2036 = vdwg.mxu0
        %v2038 = vsel %vm1900, %v1990, 0
        %2040 = vmatprep.subr.bf16.mxu0 0
        %2041 = vmatpush1.bf16.msra.mxu0 %v1708
        %2042 = vmatprep.subr.bf16.mxu0 0
        %2043 = vmatpush1.bf16.msra.mxu0 0
        %2044 = vmatprep.subr.bf16.mxu0 0
        %2045 = vmatpush1.bf16.msra.mxu0 0
        %2046 = vmatprep.subr.bf16.mxu0 0
        %2047 = vmatpush1.bf16.msra.mxu0 0
        %2048 = vmatprep.subr.bf16.mxu0 0
        %2049 = vmatpush1.bf16.msra.mxu0 0
        %2050 = vmatprep.subr.bf16.mxu0 0
        %2051 = vmatpush1.bf16.msra.mxu0 0
        %2052 = vmatprep.subr.bf16.mxu0 0
        %2053 = vmatpush1.bf16.msra.mxu0 0
        %2054 = vmatprep.subr.bf16.mxu0 0
        %2055 = vmatpush1.bf16.msra.mxu0 0
        %2056 = vmatprep.subr.bf16.mxu0 0
        %2057 = vmatpush1.bf16.msra.mxu0 0
        %2058 = vmatprep.subr.bf16.mxu0 0
        %2059 = vmatpush1.bf16.msra.mxu0 0
        %2060 = vmatprep.subr.bf16.mxu0 0
        %2061 = vmatpush1.bf16.msra.mxu0 0
        %2062 = vmatprep.subr.bf16.mxu0 0
        %2063 = vmatpush1.bf16.msra.mxu0 0
        %2064 = vmatprep.subr.bf16.mxu0 0
        %2065 = vmatpush1.bf16.msra.mxu0 0
        %2066 = vmatprep.subr.bf16.mxu0 0
        %2067 = vmatpush1.bf16.msra.mxu0 0
        %2068 = vmatprep.subr.bf16.mxu0 0
        %2069 = vmatpush1.bf16.msra.mxu0 0
        %2070 = vmatprep.subr.bf16.mxu0 0
        %2071 = vmatpush1.bf16.msra.mxu0 0
        %2072 = vmatprep.mubr.bf16.mxu0 0
        %2073 = vmatmul.mubr.bf16.gmra.mrb[0].mxu0 %v2038
        %v2074 = vpop.f32.mrb[0].mxu0
        %v2075 = vadd.f32 0.0, %v2074
        %v2076 = vpop.f32.mrb[0].mxu0
        %v2077 = vpop.f32.mrb[0].mxu0
        %v2078 = vadd.f32 0.0, %v2077
        %v2079 = vpop.f32.mrb[0].mxu0
        %2080 = vdwg.mxu0
        %v2082 = vsel %vm1900, %v1991, 0
        %2084 = vmatprep.subr.bf16.mxu0 0
        %2085 = vmatpush1.bf16.msra.mxu0 %v1709
        %2086 = vmatprep.subr.bf16.mxu0 0
        %2087 = vmatpush1.bf16.msra.mxu0 0
        %2088 = vmatprep.subr.bf16.mxu0 0
        %2089 = vmatpush1.bf16.msra.mxu0 0
        %2090 = vmatprep.subr.bf16.mxu0 0
        %2091 = vmatpush1.bf16.msra.mxu0 0
        %2092 = vmatprep.subr.bf16.mxu0 0
        %2093 = vmatpush1.bf16.msra.mxu0 0
        %2094 = vmatprep.subr.bf16.mxu0 0
        %2095 = vmatpush1.bf16.msra.mxu0 0
        %2096 = vmatprep.subr.bf16.mxu0 0
        %2097 = vmatpush1.bf16.msra.mxu0 0
        %2098 = vmatprep.subr.bf16.mxu0 0
        %2099 = vmatpush1.bf16.msra.mxu0 0
        %2100 = vmatprep.subr.bf16.mxu0 0
        %2101 = vmatpush1.bf16.msra.mxu0 0
        %2102 = vmatprep.subr.bf16.mxu0 0
        %2103 = vmatpush1.bf16.msra.mxu0 0
        %2104 = vmatprep.subr.bf16.mxu0 0
        %2105 = vmatpush1.bf16.msra.mxu0 0
        %2106 = vmatprep.subr.bf16.mxu0 0
        %2107 = vmatpush1.bf16.msra.mxu0 0
        %2108 = vmatprep.subr.bf16.mxu0 0
        %2109 = vmatpush1.bf16.msra.mxu0 0
        %2110 = vmatprep.subr.bf16.mxu0 0
        %2111 = vmatpush1.bf16.msra.mxu0 0
        %2112 = vmatprep.subr.bf16.mxu0 0
        %2113 = vmatpush1.bf16.msra.mxu0 0
        %2114 = vmatprep.subr.bf16.mxu0 0
        %2115 = vmatpush1.bf16.msra.mxu0 0
        %2116 = vmatprep.mubr.bf16.mxu0 0
        %2117 = vmatmul.mubr.bf16.gmra.mrb[0].mxu0 %v2082
        %v2118 = vpop.f32.mrb[0].mxu0
        %v2119 = vadd.f32 0.0, %v2118
        %v2120 = vpop.f32.mrb[0].mxu0
        %v2121 = vpop.f32.mrb[0].mxu0
        %v2122 = vadd.f32 0.0, %v2121
        %v2123 = vpop.f32.mrb[0].mxu0
        %2124 = vdwg.mxu0
        %v2126 = vsel %vm1900, %v1992, 0
        %2128 = vmatprep.subr.bf16.mxu0 0
        %2129 = vmatpush1.bf16.msra.mxu0 %v1710
        %2130 = vmatprep.subr.bf16.mxu0 0
        %2131 = vmatpush1.bf16.msra.mxu0 0
        %2132 = vmatprep.subr.bf16.mxu0 0
        %2133 = vmatpush1.bf16.msra.mxu0 0
        %2134 = vmatprep.subr.bf16.mxu0 0
        %2135 = vmatpush1.bf16.msra.mxu0 0
        %2136 = vmatprep.subr.bf16.mxu0 0
        %2137 = vmatpush1.bf16.msra.mxu0 0
        %2138 = vmatprep.subr.bf16.mxu0 0
        %2139 = vmatpush1.bf16.msra.mxu0 0
        %2140 = vmatprep.subr.bf16.mxu0 0
        %2141 = vmatpush1.bf16.msra.mxu0 0
        %2142 = vmatprep.subr.bf16.mxu0 0
        %2143 = vmatpush1.bf16.msra.mxu0 0
        %2144 = vmatprep.subr.bf16.mxu0 0
        %2145 = vmatpush1.bf16.msra.mxu0 0
        %2146 = vmatprep.subr.bf16.mxu0 0
        %2147 = vmatpush1.bf16.msra.mxu0 0
        %2148 = vmatprep.subr.bf16.mxu0 0
        %2149 = vmatpush1.bf16.msra.mxu0 0
        %2150 = vmatprep.subr.bf16.mxu0 0
        %2151 = vmatpush1.bf16.msra.mxu0 0
        %2152 = vmatprep.subr.bf16.mxu0 0
        %2153 = vmatpush1.bf16.msra.mxu0 0
        %2154 = vmatprep.subr.bf16.mxu0 0
        %2155 = vmatpush1.bf16.msra.mxu0 0
        %2156 = vmatprep.subr.bf16.mxu0 0
        %2157 = vmatpush1.bf16.msra.mxu0 0
        %2158 = vmatprep.subr.bf16.mxu0 0
        %2159 = vmatpush1.bf16.msra.mxu0 0
        %2160 = vmatprep.mubr.bf16.mxu0 0
        %2161 = vmatmul.mubr.bf16.gmra.mrb[0].mxu0 %v2126
        %v2162 = vpop.f32.mrb[0].mxu0
        %v2163 = vadd.f32 0.0, %v2162
        %v2164 = vpop.f32.mrb[0].mxu0
        %v2165 = vpop.f32.mrb[0].mxu0
        %v2166 = vadd.f32 0.0, %v2165
        %v2167 = vpop.f32.mrb[0].mxu0
        %2168 = vdwg.mxu0
        %v2169 = vcombine.low %v2031, %v2119
        %v2170 = vcombine.high %v2031, %v2119
        %v2172 = vunpack.c.l.s4 1983009808
        %v2173 = vunpack.c.0.s8 %v2172
        %v2174 = vlaneseq
        %v2175 = vshrl.u32 %v2174, 7
        %v2176 = vsub.s32 %v2173, %v2175
        %v2177 = vrot.slane %v2169, %v2176
        %v2179 = vunpack.c.l.s4 1983009808
        %v2180 = vunpack.c.0.s8 %v2179
        %v2181 = vlaneseq
        %v2182 = vshrl.u32 %v2181, 7
        %v2183 = vsub.s32 %v2180, %v2182
        %v2184 = vrot.slane %v2170, %v2183
        %v2185 = vcombine.low %v2075, %v2163
        %v2186 = vcombine.high %v2075, %v2163
        %v2188 = vunpack.c.l.s4 1983009808
        %v2189 = vunpack.c.0.s8 %v2188
        %v2190 = vlaneseq
        %v2191 = vshrl.u32 %v2190, 7
        %v2192 = vsub.s32 %v2189, %v2191
        %v2193 = vrot.slane %v2185, %v2192
        %v2195 = vunpack.c.l.s4 1983009808
        %v2196 = vunpack.c.0.s8 %v2195
        %v2197 = vlaneseq
        %v2198 = vshrl.u32 %v2197, 7
        %v2199 = vsub.s32 %v2196, %v2198
        %v2200 = vrot.slane %v2186, %v2199
        %v2201 = vcombine.low %v2177, %v2193
        %v2202 = vcombine.high %v2177, %v2193
        %v2204 = vunpack.c.l.s4 1934713408
        %v2205 = vunpack.c.0.s8 %v2204
        %v2206 = vlaneseq
        %v2207 = vshrl.u32 %v2206, 7
        %v2208 = vsub.s32 %v2205, %v2207
        %v2209 = vrot.slane %v2201, %v2208
        %v2211 = vunpack.c.l.s4 1934713408
        %v2212 = vunpack.c.0.s8 %v2211
        %v2213 = vlaneseq
        %v2214 = vshrl.u32 %v2213, 7
        %v2215 = vsub.s32 %v2212, %v2214
        %v2216 = vrot.slane %v2202, %v2215
        %v2217 = vcombine.low %v2184, %v2200
        %v2218 = vcombine.high %v2184, %v2200
        %v2220 = vunpack.c.l.s4 1934713408
        %v2221 = vunpack.c.0.s8 %v2220
        %v2222 = vlaneseq
        %v2223 = vshrl.u32 %v2222, 7
        %v2224 = vsub.s32 %v2221, %v2223
        %v2225 = vrot.slane %v2217, %v2224
        %v2227 = vunpack.c.l.s4 1934713408
        %v2228 = vunpack.c.0.s8 %v2227
        %v2229 = vlaneseq
        %v2230 = vshrl.u32 %v2229, 7
        %v2231 = vsub.s32 %v2228, %v2230
        %v2232 = vrot.slane %v2218, %v2231
        %v2233 = vcombine.high %v2209, 0.0
        %v2234 = vcombine.high %v2216, 0.0
        %v2235 = vcombine.high %v2225, 0.0
        %v2236 = vcombine.high %v2232, 0.0
        %v2237 = vcombine.low %v2034, %v2122
        %v2238 = vcombine.high %v2034, %v2122
        %v2240 = vunpack.c.l.s4 1983009808
        %v2241 = vunpack.c.0.s8 %v2240
        %v2242 = vlaneseq
        %v2243 = vshrl.u32 %v2242, 7
        %v2244 = vsub.s32 %v2241, %v2243
        %v2245 = vrot.slane %v2237, %v2244
        %v2247 = vunpack.c.l.s4 1983009808
        %v2248 = vunpack.c.0.s8 %v2247
        %v2249 = vlaneseq
        %v2250 = vshrl.u32 %v2249, 7
        %v2251 = vsub.s32 %v2248, %v2250
        %v2252 = vrot.slane %v2238, %v2251
        %v2253 = vcombine.low %v2078, %v2166
        %v2254 = vcombine.high %v2078, %v2166
        %v2256 = vunpack.c.l.s4 1983009808
        %v2257 = vunpack.c.0.s8 %v2256
        %v2258 = vlaneseq
        %v2259 = vshrl.u32 %v2258, 7
        %v2260 = vsub.s32 %v2257, %v2259
        %v2261 = vrot.slane %v2253, %v2260
        %v2263 = vunpack.c.l.s4 1983009808
        %v2264 = vunpack.c.0.s8 %v2263
        %v2265 = vlaneseq
        %v2266 = vshrl.u32 %v2265, 7
        %v2267 = vsub.s32 %v2264, %v2266
        %v2268 = vrot.slane %v2254, %v2267
        %v2269 = vcombine.low %v2245, %v2261
        %v2270 = vcombine.high %v2245, %v2261
        %v2272 = vunpack.c.l.s4 1934713408
        %v2273 = vunpack.c.0.s8 %v2272
        %v2274 = vlaneseq
        %v2275 = vshrl.u32 %v2274, 7
        %v2276 = vsub.s32 %v2273, %v2275
        %v2277 = vrot.slane %v2269, %v2276
        %v2279 = vunpack.c.l.s4 1934713408
        %v2280 = vunpack.c.0.s8 %v2279
        %v2281 = vlaneseq
        %v2282 = vshrl.u32 %v2281, 7
        %v2283 = vsub.s32 %v2280, %v2282
        %v2284 = vrot.slane %v2270, %v2283
        %v2285 = vcombine.low %v2252, %v2268
        %v2286 = vcombine.high %v2252, %v2268
        %v2288 = vunpack.c.l.s4 1934713408
        %v2289 = vunpack.c.0.s8 %v2288
        %v2290 = vlaneseq
        %v2291 = vshrl.u32 %v2290, 7
        %v2292 = vsub.s32 %v2289, %v2291
        %v2293 = vrot.slane %v2285, %v2292
        %v2295 = vunpack.c.l.s4 1934713408
        %v2296 = vunpack.c.0.s8 %v2295
        %v2297 = vlaneseq
        %v2298 = vshrl.u32 %v2297, 7
        %v2299 = vsub.s32 %v2296, %v2298
        %v2300 = vrot.slane %v2286, %v2299
        %v2301 = vcombine.high %v2277, 0.0
        %v2302 = vcombine.high %v2284, 0.0
        %v2303 = vcombine.high %v2293, 0.0
        %v2304 = vcombine.high %v2300, 0.0
        %v2305 = vcombine.low %v2209, %v2216
        %v2307 = vunpack.c.l.s4 1983009808
        %v2308 = vunpack.c.0.s8 %v2307
        %v2309 = vlaneseq
        %v2310 = vshrl.u32 %v2309, 7
        %v2311 = vsub.s32 %v2308, %v2310
        %v2312 = vrot.slane %v2305, %v2311
        %v2313 = vcombine.low %v2233, %v2234
        %v2315 = vunpack.c.l.s4 1983009808
        %v2316 = vunpack.c.0.s8 %v2315
        %v2317 = vlaneseq
        %v2318 = vshrl.u32 %v2317, 7
        %v2319 = vsub.s32 %v2316, %v2318
        %v2320 = vrot.slane %v2313, %v2319
        %v2321 = vcombine.low %v2225, %v2232
        %v2323 = vunpack.c.l.s4 1983009808
        %v2324 = vunpack.c.0.s8 %v2323
        %v2325 = vlaneseq
        %v2326 = vshrl.u32 %v2325, 7
        %v2327 = vsub.s32 %v2324, %v2326
        %v2328 = vrot.slane %v2321, %v2327
        %v2329 = vcombine.low %v2235, %v2236
        %v2331 = vunpack.c.l.s4 1983009808
        %v2332 = vunpack.c.0.s8 %v2331
        %v2333 = vlaneseq
        %v2334 = vshrl.u32 %v2333, 7
        %v2335 = vsub.s32 %v2332, %v2334
        %v2336 = vrot.slane %v2329, %v2335
        %v2337 = vcombine.low %v2312, %v2320
        %v2338 = vcombine.high %v2312, %v2320
        %v2340 = vunpack.c.l.s4 1934713408
        %v2341 = vunpack.c.0.s8 %v2340
        %v2342 = vlaneseq
        %v2343 = vshrl.u32 %v2342, 7
        %v2344 = vsub.s32 %v2341, %v2343
        %v2345 = vrot.slane %v2337, %v2344
        %v2347 = vunpack.c.l.s4 1934713408
        %v2348 = vunpack.c.0.s8 %v2347
        %v2349 = vlaneseq
        %v2350 = vshrl.u32 %v2349, 7
        %v2351 = vsub.s32 %v2348, %v2350
        %v2352 = vrot.slane %v2338, %v2351
        %v2353 = vcombine.low %v2328, %v2336
        %v2354 = vcombine.high %v2328, %v2336
        %v2356 = vunpack.c.l.s4 1934713408
        %v2357 = vunpack.c.0.s8 %v2356
        %v2358 = vlaneseq
        %v2359 = vshrl.u32 %v2358, 7
        %v2360 = vsub.s32 %v2357, %v2359
        %v2361 = vrot.slane %v2353, %v2360
        %v2363 = vunpack.c.l.s4 1934713408
        %v2364 = vunpack.c.0.s8 %v2363
        %v2365 = vlaneseq
        %v2366 = vshrl.u32 %v2365, 7
        %v2367 = vsub.s32 %v2364, %v2366
        %v2368 = vrot.slane %v2354, %v2367
        %v2369 = vcombine.low %v2345, %v2361
        %v2370 = vcombine.high %v2345, %v2361
        %v2371 = vcombine.low %v2352, %v2368
        %v2372 = vcombine.high %v2352, %v2368
        %v2373 = vcombine.low %v2277, %v2284
        %v2375 = vunpack.c.l.s4 1983009808
        %v2376 = vunpack.c.0.s8 %v2375
        %v2377 = vlaneseq
        %v2378 = vshrl.u32 %v2377, 7
        %v2379 = vsub.s32 %v2376, %v2378
        %v2380 = vrot.slane %v2373, %v2379
        %v2381 = vcombine.low %v2301, %v2302
        %v2383 = vunpack.c.l.s4 1983009808
        %v2384 = vunpack.c.0.s8 %v2383
        %v2385 = vlaneseq
        %v2386 = vshrl.u32 %v2385, 7
        %v2387 = vsub.s32 %v2384, %v2386
        %v2388 = vrot.slane %v2381, %v2387
        %v2389 = vcombine.low %v2293, %v2300
        %v2391 = vunpack.c.l.s4 1983009808
        %v2392 = vunpack.c.0.s8 %v2391
        %v2393 = vlaneseq
        %v2394 = vshrl.u32 %v2393, 7
        %v2395 = vsub.s32 %v2392, %v2394
        %v2396 = vrot.slane %v2389, %v2395
        %v2397 = vcombine.low %v2303, %v2304
        %v2399 = vunpack.c.l.s4 1983009808
        %v2400 = vunpack.c.0.s8 %v2399
        %v2401 = vlaneseq
        %v2402 = vshrl.u32 %v2401, 7
        %v2403 = vsub.s32 %v2400, %v2402
        %v2404 = vrot.slane %v2397, %v2403
        %v2405 = vcombine.low %v2380, %v2388
        %v2406 = vcombine.high %v2380, %v2388
        %v2408 = vunpack.c.l.s4 1934713408
        %v2409 = vunpack.c.0.s8 %v2408
        %v2410 = vlaneseq
        %v2411 = vshrl.u32 %v2410, 7
        %v2412 = vsub.s32 %v2409, %v2411
        %v2413 = vrot.slane %v2405, %v2412
        %v2415 = vunpack.c.l.s4 1934713408
        %v2416 = vunpack.c.0.s8 %v2415
        %v2417 = vlaneseq
        %v2418 = vshrl.u32 %v2417, 7
        %v2419 = vsub.s32 %v2416, %v2418
        %v2420 = vrot.slane %v2406, %v2419
        %v2421 = vcombine.low %v2396, %v2404
        %v2422 = vcombine.high %v2396, %v2404
        %v2424 = vunpack.c.l.s4 1934713408
        %v2425 = vunpack.c.0.s8 %v2424
        %v2426 = vlaneseq
        %v2427 = vshrl.u32 %v2426, 7
        %v2428 = vsub.s32 %v2425, %v2427
        %v2429 = vrot.slane %v2421, %v2428
        %v2431 = vunpack.c.l.s4 1934713408
        %v2432 = vunpack.c.0.s8 %v2431
        %v2433 = vlaneseq
        %v2434 = vshrl.u32 %v2433, 7
        %v2435 = vsub.s32 %v2432, %v2434
        %v2436 = vrot.slane %v2422, %v2435
        %v2437 = vcombine.low %v2413, %v2429
        %v2438 = vcombine.high %v2413, %v2429
        %v2439 = vcombine.low %v2420, %v2436
        %v2440 = vcombine.high %v2420, %v2436
        %2443 = vrot.lane.b32.xlu0 %v2370, 32
        %v2444 = vpop.permute.xlu0 %2443
        %2445 = vrot.lane.b32.xlu0 %v2438, 32
        %v2446 = vpop.permute.xlu0 %2445
        %2451 = vrot.lane.b32.xlu0 %v2371, 64
        %v2452 = vpop.permute.xlu0 %2451
        %2453 = vrot.lane.b32.xlu0 %v2439, 64
        %v2454 = vpop.permute.xlu0 %2453
        %2459 = vrot.lane.b32.xlu0 %v2372, 96
        %v2460 = vpop.permute.xlu0 %2459
        %2461 = vrot.lane.b32.xlu0 %v2440, 96
        %v2462 = vpop.permute.xlu0 %2461
        %v2465 = vsel %vm1711, %v2369, %v2444
        %v2466 = vsel %vm1711, %v2437, %v2446
        %vm2467 = vcmask 523264
        %v2468 = vsel %vm2467, %v2465, %v2452
        %v2469 = vsel %vm2467, %v2466, %v2454
        %vm2470 = vcmask 785408
        %v2471 = vsel %vm2470, %v2468, %v2460
        %v2472 = vsel %vm2470, %v2469, %v2462
        %v2473 = vld [vmem:[#allocation7] sm:$0xf]
        %v2474 = vld [vmem:[#allocation7 + $0x4] sm:$0xf]
        %v2475 = vld [vmem:[#allocation7 + $0x8] sm:$0xf]
        %v2476 = vld [vmem:[#allocation7 + $0xc] sm:$0xf]
        %v2477 = vld [vmem:[#allocation7 + $0x10] sm:$0xf]
        %v2478 = vld [vmem:[#allocation7 + $0x14] sm:$0xf]
        %v2479 = vld [vmem:[#allocation7 + $0x18] sm:$0xf]
        %v2480 = vld [vmem:[#allocation7 + $0x1c] sm:$0xf]
        %v2481 = vld [vmem:[#allocation7 + $0x20] sm:$0xf]
        %v2482 = vld [vmem:[#allocation7 + $0x24] sm:$0xf]
        %v2483 = vld [vmem:[#allocation7 + $0x28] sm:$0xf]
        %v2484 = vld [vmem:[#allocation7 + $0x2c] sm:$0xf]
        %v2485 = vld [vmem:[#allocation7 + $0x30] sm:$0xf]
        %v2486 = vld [vmem:[#allocation7 + $0x34] sm:$0xf]
        %v2487 = vld [vmem:[#allocation7 + $0x38] sm:$0xf]
        %v2488 = vld [vmem:[#allocation7 + $0x3c] sm:$0xf]
        %v2489 = vpack.c.bf16 %v2472, %v2471
        %v2490 = vld [vmem:[%s6] sm:$0x1]
        %v2492 = vlaneseq
        %v2493 = vshrl.u32 %v2492, 7
        %v2494 = vsub.s32 0, %v2493
        %v2495 = vrot.slane %v2490, %v2494
        %v2513 = vunpack.c.l.b16 %v2473
        %v2514 = vunpack.c.l.b16 %v2474
        %v2515 = vunpack.c.l.b16 %v2475
        %v2516 = vunpack.c.l.b16 %v2476
        %v2517 = vunpack.c.l.b16 %v2477
        %v2518 = vunpack.c.l.b16 %v2478
        %v2519 = vunpack.c.l.b16 %v2479
        %v2520 = vunpack.c.l.b16 %v2480
        %v2521 = vunpack.c.l.b16 %v2481
        %v2522 = vunpack.c.l.b16 %v2482
        %v2523 = vunpack.c.l.b16 %v2483
        %v2524 = vunpack.c.l.b16 %v2484
        %v2525 = vunpack.c.l.b16 %v2485
        %v2526 = vunpack.c.l.b16 %v2486
        %v2527 = vunpack.c.l.b16 %v2487
        %v2528 = vunpack.c.l.b16 %v2488
        %v2529 = vpack.c.b16 %v2514, %v2513
        %v2530 = vpack.c.b16 %v2516, %v2515
        %v2531 = vpack.c.b16 %v2518, %v2517
        %v2532 = vpack.c.b16 %v2520, %v2519
        %v2533 = vpack.c.b16 %v2522, %v2521
        %v2534 = vpack.c.b16 %v2524, %v2523
        %v2535 = vpack.c.b16 %v2526, %v2525
        %v2536 = vpack.c.b16 %v2528, %v2527
        %2545 = vmatprep.subr.bf16.mxu0 0
        %2546 = vmatpush1.bf16.msra.mxu0 %v2529
        %2547 = vmatprep.subr.bf16.mxu0 0
        %2548 = vmatpush1.bf16.msra.mxu0 %v2530
        %2549 = vmatprep.subr.bf16.mxu0 0
        %2550 = vmatpush1.bf16.msra.mxu0 %v2531
        %2551 = vmatprep.subr.bf16.mxu0 0
        %2552 = vmatpush1.bf16.msra.mxu0 %v2532
        %2553 = vmatprep.subr.bf16.mxu0 0
        %2554 = vmatpush1.bf16.msra.mxu0 %v2533
        %2555 = vmatprep.subr.bf16.mxu0 0
        %2556 = vmatpush1.bf16.msra.mxu0 %v2534
        %2557 = vmatprep.subr.bf16.mxu0 0
        %2558 = vmatpush1.bf16.msra.mxu0 %v2535
        %2559 = vmatprep.subr.bf16.mxu0 0
        %2560 = vmatpush1.bf16.msra.mxu0 %v2536
        %2561 = vmatprep.subr.bf16.mxu0 0
        %2562 = vmatpush1.bf16.msra.mxu0 0
        %2563 = vmatprep.subr.bf16.mxu0 0
        %2564 = vmatpush1.bf16.msra.mxu0 0
        %2565 = vmatprep.subr.bf16.mxu0 0
        %2566 = vmatpush1.bf16.msra.mxu0 0
        %2567 = vmatprep.subr.bf16.mxu0 0
        %2568 = vmatpush1.bf16.msra.mxu0 0
        %2569 = vmatprep.subr.bf16.mxu0 0
        %2570 = vmatpush1.bf16.msra.mxu0 0
        %2571 = vmatprep.subr.bf16.mxu0 0
        %2572 = vmatpush1.bf16.msra.mxu0 0
        %2573 = vmatprep.subr.bf16.mxu0 0
        %2574 = vmatpush1.bf16.msra.mxu0 0
        %2575 = vmatprep.subr.bf16.mxu0 0
        %2576 = vmatpush1.bf16.msra.mxu0 0
        %2577 = vmatprep.mubr.bf16.mxu0 0
        %2578 = vmatmul.mubr.bf16.gmra.mrb[0].mxu0 %v2489
        %v2579 = vpop.f32.mrb[0].mxu0
        %v2580 = vadd.f32 %v2495, %v2579
        %v2581 = vpop.f32.mrb[0].mxu0
        %v2582 = vpop.f32.mrb[0].mxu0
        %v2583 = vadd.f32 %v2495, %v2582
        %v2584 = vpop.f32.mrb[0].mxu0
        %2585 = vdwg.mxu0
        %v2586 = vadd.f32 %v518, %v2580
        %v2587 = vadd.f32 %v519, %v2583
        %v2588 = vld [vmem:[%s7] sm:$0x1]
        %v2589 = vld [vmem:[%s8] sm:$0x1]
        %2590 = vadd.xlane.f32.xlu0 %v2586
        %v2591 = vpop.xlane.xlu0 %2590
        %2592 = vadd.xlane.f32.xlu0 %v2587
        %v2593 = vpop.xlane.xlu0 %2592
        %v2594 = vmul.f32 %v2591, %v526
        %v2595 = vmul.f32 %v2593, %v526
        %v2596 = vsub.f32 %v2586, %v2594
        %v2597 = vsub.f32 %v2587, %v2595
        %v2598 = vmul.f32 %v2596, %v2596
        %v2599 = vmul.f32 %v2597, %v2597
        %2600 = vadd.xlane.f32.xlu0 %v2598
        %v2601 = vpop.xlane.xlu0 %2600
        %2602 = vadd.xlane.f32.xlu0 %v2599
        %v2603 = vpop.xlane.xlu0 %2602
        %v2604 = vmul.f32 %v2601, %v526
        %v2605 = vmul.f32 %v2603, %v526
        %v2606 = vadd.f32 %v2604, 1e-06
        %v2607 = vadd.f32 %v2605, 1e-06
        %v2608 = vrsqrt.pop %v2606
        %v2609 = vrsqrt.pop %v2607
        %v2610 = vmul.f32 %v2596, %v2608
        %v2611 = vmul.f32 %v2597, %v2609
        %v2613 = vlaneseq
        %v2614 = vshrl.u32 %v2613, 7
        %v2615 = vsub.s32 0, %v2614
        %v2616 = vrot.slane %v2588, %v2615
        %v2618 = vmul.f32 %v2610, %v2616
        %v2619 = vmul.f32 %v2611, %v2616
        %v2621 = vlaneseq
        %v2622 = vshrl.u32 %v2621, 7
        %v2623 = vsub.s32 0, %v2622
        %v2624 = vrot.slane %v2589, %v2623
        %v2626 = vadd.f32 %v2618, %v2624
        %v2627 = vadd.f32 %v2619, %v2624
        %v2628 = vld [vmem:[#allocation8] sm:$0xff]
        %v2629 = vld [vmem:[#allocation8 + $0x8] sm:$0xff]
        %v2630 = vld [vmem:[#allocation8 + $0x10] sm:$0xff]
        %v2631 = vld [vmem:[#allocation8 + $0x18] sm:$0xff]
        %v2632 = vld [vmem:[#allocation8 + $0x20] sm:$0xff]
        %v2633 = vld [vmem:[#allocation8 + $0x28] sm:$0xff]
        %v2634 = vld [vmem:[#allocation8 + $0x30] sm:$0xff]
        %v2635 = vld [vmem:[#allocation8 + $0x38] sm:$0xff]
        %v2636 = vld [vmem:[#allocation8 + $0x40] sm:$0xff]
        %v2637 = vld [vmem:[#allocation8 + $0x48] sm:$0xff]
        %v2638 = vld [vmem:[#allocation8 + $0x50] sm:$0xff]
        %v2639 = vld [vmem:[#allocation8 + $0x58] sm:$0xff]
        %v2640 = vld [vmem:[#allocation8 + $0x60] sm:$0xff]
        %v2641 = vld [vmem:[#allocation8 + $0x68] sm:$0xff]
        %v2642 = vld [vmem:[#allocation8 + $0x70] sm:$0xff]
        %v2643 = vld [vmem:[#allocation8 + $0x78] sm:$0xff]
        %v2644 = vpack.c.bf16 %v2627, %v2626
        %v2645 = vld [vmem:[%s10] sm:$0x3]
        %v2647 = vlaneseq
        %v2648 = vshrl.u32 %v2647, 7
        %v2649 = vsub.s32 0, %v2648
        %v2650 = vrot.slane %v2645, %v2649
        %v2651 = vlaneseq
        %v2652 = vshrl.u32 %v2651, 7
        %v2653 = vsub.s32 1, %v2652
        %v2654 = vrot.slane %v2645, %v2653
        %v2673 = vunpack.c.l.b16 %v2628
        %v2674 = vunpack.c.h.b16 %v2628
        %v2675 = vunpack.c.l.b16 %v2629
        %v2676 = vunpack.c.h.b16 %v2629
        %v2677 = vunpack.c.l.b16 %v2630
        %v2678 = vunpack.c.h.b16 %v2630
        %v2679 = vunpack.c.l.b16 %v2631
        %v2680 = vunpack.c.h.b16 %v2631
        %v2681 = vunpack.c.l.b16 %v2632
        %v2682 = vunpack.c.h.b16 %v2632
        %v2683 = vunpack.c.l.b16 %v2633
        %v2684 = vunpack.c.h.b16 %v2633
        %v2685 = vunpack.c.l.b16 %v2634
        %v2686 = vunpack.c.h.b16 %v2634
        %v2687 = vunpack.c.l.b16 %v2635
        %v2688 = vunpack.c.h.b16 %v2635
        %v2689 = vunpack.c.l.b16 %v2636
        %v2690 = vunpack.c.h.b16 %v2636
        %v2691 = vunpack.c.l.b16 %v2637
        %v2692 = vunpack.c.h.b16 %v2637
        %v2693 = vunpack.c.l.b16 %v2638
        %v2694 = vunpack.c.h.b16 %v2638
        %v2695 = vunpack.c.l.b16 %v2639
        %v2696 = vunpack.c.h.b16 %v2639
        %v2697 = vunpack.c.l.b16 %v2640
        %v2698 = vunpack.c.h.b16 %v2640
        %v2699 = vunpack.c.l.b16 %v2641
        %v2700 = vunpack.c.h.b16 %v2641
        %v2701 = vunpack.c.l.b16 %v2642
        %v2702 = vunpack.c.h.b16 %v2642
        %v2703 = vunpack.c.l.b16 %v2643
        %v2704 = vunpack.c.h.b16 %v2643
        %v2705 = vpack.c.b16 %v2675, %v2673
        %v2706 = vpack.c.b16 %v2676, %v2674
        %v2707 = vpack.c.b16 %v2679, %v2677
        %v2708 = vpack.c.b16 %v2680, %v2678
        %v2709 = vpack.c.b16 %v2683, %v2681
        %v2710 = vpack.c.b16 %v2684, %v2682
        %v2711 = vpack.c.b16 %v2687, %v2685
        %v2712 = vpack.c.b16 %v2688, %v2686
        %v2713 = vpack.c.b16 %v2691, %v2689
        %v2714 = vpack.c.b16 %v2692, %v2690
        %v2715 = vpack.c.b16 %v2695, %v2693
        %v2716 = vpack.c.b16 %v2696, %v2694
        %v2717 = vpack.c.b16 %v2699, %v2697
        %v2718 = vpack.c.b16 %v2700, %v2698
        %v2719 = vpack.c.b16 %v2703, %v2701
        %v2720 = vpack.c.b16 %v2704, %v2702
        %2737 = vmatprep.subr.bf16.mxu0 %v2706
        %2738 = vmatpush1.bf16.msra.mxu0 %v2705
        %2739 = vmatprep.subr.bf16.mxu0 %v2708
        %2740 = vmatpush1.bf16.msra.mxu0 %v2707
        %2741 = vmatprep.subr.bf16.mxu0 %v2710
        %2742 = vmatpush1.bf16.msra.mxu0 %v2709
        %2743 = vmatprep.subr.bf16.mxu0 %v2712
        %2744 = vmatpush1.bf16.msra.mxu0 %v2711
        %2745 = vmatprep.subr.bf16.mxu0 %v2714
        %2746 = vmatpush1.bf16.msra.mxu0 %v2713
        %2747 = vmatprep.subr.bf16.mxu0 %v2716
        %2748 = vmatpush1.bf16.msra.mxu0 %v2715
        %2749 = vmatprep.subr.bf16.mxu0 %v2718
        %2750 = vmatpush1.bf16.msra.mxu0 %v2717
        %2751 = vmatprep.subr.bf16.mxu0 %v2720
        %2752 = vmatpush1.bf16.msra.mxu0 %v2719
        %2753 = vmatprep.subr.bf16.mxu0 0
        %2754 = vmatpush1.bf16.msra.mxu0 0
        %2755 = vmatprep.subr.bf16.mxu0 0
        %2756 = vmatpush1.bf16.msra.mxu0 0
        %2757 = vmatprep.subr.bf16.mxu0 0
        %2758 = vmatpush1.bf16.msra.mxu0 0
        %2759 = vmatprep.subr.bf16.mxu0 0
        %2760 = vmatpush1.bf16.msra.mxu0 0
        %2761 = vmatprep.subr.bf16.mxu0 0
        %2762 = vmatpush1.bf16.msra.mxu0 0
        %2763 = vmatprep.subr.bf16.mxu0 0
        %2764 = vmatpush1.bf16.msra.mxu0 0
        %2765 = vmatprep.subr.bf16.mxu0 0
        %2766 = vmatpush1.bf16.msra.mxu0 0
        %2767 = vmatprep.subr.bf16.mxu0 0
        %2768 = vmatpush1.bf16.msra.mxu0 0
        %2769 = vmatprep.mubr.bf16.mxu0 0
        %2770 = vmatmul.mubr.bf16.gmra.mrb[0].mxu0 %v2644
        %v2771 = vpop.f32.mrb[0].mxu0
        %v2772 = vadd.f32 %v2650, %v2771
        %v2773 = vpop.f32.mrb[0].mxu0
        %v2774 = vadd.f32 %v2654, %v2773
        %v2775 = vpop.f32.mrb[0].mxu0
        %v2776 = vadd.f32 %v2650, %v2775
        %v2777 = vpop.f32.mrb[0].mxu0
        %v2778 = vadd.f32 %v2654, %v2777
        %2779 = vdwg.mxu0
        %v2780 = vmul.f32 %v2772, 0.5
        %v2781 = vmul.f32 %v2774, 0.5
        %v2782 = vmul.f32 %v2776, 0.5
        %v2783 = vmul.f32 %v2778, 0.5
        %v2784 = vmul.f32 %v2772, 0.70710677
        %v2785 = vmul.f32 %v2774, 0.70710677
        %v2786 = vmul.f32 %v2776, 0.70710677
        %v2787 = vmul.f32 %v2778, 0.70710677
        %v2788 = verf.f32.pop %v2784
        %v2789 = verf.f32.pop %v2785
        %v2790 = verf.f32.pop %v2786
        %v2791 = verf.f32.pop %v2787
        %v2792 = vadd.f32 %v2788, 1.0
        %v2793 = vadd.f32 %v2789, 1.0
        %v2794 = vadd.f32 %v2790, 1.0
        %v2795 = vadd.f32 %v2791, 1.0
        %v2796 = vmul.f32 %v2780, %v2792
        %v2797 = vmul.f32 %v2781, %v2793
        %v2798 = vmul.f32 %v2782, %v2794
        %v2799 = vmul.f32 %v2783, %v2795
        %v2800 = vld [vmem:[#allocation10] sm:$0xf]
        %v2801 = vld [vmem:[#allocation10 + $0x4] sm:$0xf]
        %v2802 = vld [vmem:[#allocation10 + $0x8] sm:$0xf]
        %v2803 = vld [vmem:[#allocation10 + $0xc] sm:$0xf]
        %v2804 = vld [vmem:[#allocation10 + $0x10] sm:$0xf]
        %v2805 = vld [vmem:[#allocation10 + $0x14] sm:$0xf]
        %v2806 = vld [vmem:[#allocation10 + $0x18] sm:$0xf]
        %v2807 = vld [vmem:[#allocation10 + $0x1c] sm:$0xf]
        %v2808 = vld [vmem:[#allocation10 + $0x20] sm:$0xf]
        %v2809 = vld [vmem:[#allocation10 + $0x24] sm:$0xf]
        %v2810 = vld [vmem:[#allocation10 + $0x28] sm:$0xf]
        %v2811 = vld [vmem:[#allocation10 + $0x2c] sm:$0xf]
        %v2812 = vld [vmem:[#allocation10 + $0x30] sm:$0xf]
        %v2813 = vld [vmem:[#allocation10 + $0x34] sm:$0xf]
        %v2814 = vld [vmem:[#allocation10 + $0x38] sm:$0xf]
        %v2815 = vld [vmem:[#allocation10 + $0x3c] sm:$0xf]
        %v2816 = vld [vmem:[#allocation10 + $0x40] sm:$0xf]
        %v2817 = vld [vmem:[#allocation10 + $0x44] sm:$0xf]
        %v2818 = vld [vmem:[#allocation10 + $0x48] sm:$0xf]
        %v2819 = vld [vmem:[#allocation10 + $0x4c] sm:$0xf]
        %v2820 = vld [vmem:[#allocation10 + $0x50] sm:$0xf]
        %v2821 = vld [vmem:[#allocation10 + $0x54] sm:$0xf]
        %v2822 = vld [vmem:[#allocation10 + $0x58] sm:$0xf]
        %v2823 = vld [vmem:[#allocation10 + $0x5c] sm:$0xf]
        %v2824 = vld [vmem:[#allocation10 + $0x60] sm:$0xf]
        %v2825 = vld [vmem:[#allocation10 + $0x64] sm:$0xf]
        %v2826 = vld [vmem:[#allocation10 + $0x68] sm:$0xf]
        %v2827 = vld [vmem:[#allocation10 + $0x6c] sm:$0xf]
        %v2828 = vld [vmem:[#allocation10 + $0x70] sm:$0xf]
        %v2829 = vld [vmem:[#allocation10 + $0x74] sm:$0xf]
        %v2830 = vld [vmem:[#allocation10 + $0x78] sm:$0xf]
        %v2831 = vld [vmem:[#allocation10 + $0x7c] sm:$0xf]
        %v2832 = vpack.c.bf16 %v2798, %v2796
        %v2833 = vpack.c.bf16 %v2799, %v2797
        %v2834 = vld [vmem:[%s12] sm:$0x1]
        %v2836 = vlaneseq
        %v2837 = vshrl.u32 %v2836, 7
        %v2838 = vsub.s32 0, %v2837
        %v2839 = vrot.slane %v2834, %v2838
        %v2873 = vunpack.c.l.b16 %v2800
        %v2874 = vunpack.c.l.b16 %v2801
        %v2875 = vunpack.c.l.b16 %v2802
        %v2876 = vunpack.c.l.b16 %v2803
        %v2877 = vunpack.c.l.b16 %v2804
        %v2878 = vunpack.c.l.b16 %v2805
        %v2879 = vunpack.c.l.b16 %v2806
        %v2880 = vunpack.c.l.b16 %v2807
        %v2881 = vunpack.c.l.b16 %v2808
        %v2882 = vunpack.c.l.b16 %v2809
        %v2883 = vunpack.c.l.b16 %v2810
        %v2884 = vunpack.c.l.b16 %v2811
        %v2885 = vunpack.c.l.b16 %v2812
        %v2886 = vunpack.c.l.b16 %v2813
        %v2887 = vunpack.c.l.b16 %v2814
        %v2888 = vunpack.c.l.b16 %v2815
        %v2889 = vunpack.c.l.b16 %v2816
        %v2890 = vunpack.c.l.b16 %v2817
        %v2891 = vunpack.c.l.b16 %v2818
        %v2892 = vunpack.c.l.b16 %v2819
        %v2893 = vunpack.c.l.b16 %v2820
        %v2894 = vunpack.c.l.b16 %v2821
        %v2895 = vunpack.c.l.b16 %v2822
        %v2896 = vunpack.c.l.b16 %v2823
        %v2897 = vunpack.c.l.b16 %v2824
        %v2898 = vunpack.c.l.b16 %v2825
        %v2899 = vunpack.c.l.b16 %v2826
        %v2900 = vunpack.c.l.b16 %v2827
        %v2901 = vunpack.c.l.b16 %v2828
        %v2902 = vunpack.c.l.b16 %v2829
        %v2903 = vunpack.c.l.b16 %v2830
        %v2904 = vunpack.c.l.b16 %v2831
        %v2905 = vpack.c.b16 %v2874, %v2873
        %v2906 = vpack.c.b16 %v2876, %v2875
        %v2907 = vpack.c.b16 %v2878, %v2877
        %v2908 = vpack.c.b16 %v2880, %v2879
        %v2909 = vpack.c.b16 %v2882, %v2881
        %v2910 = vpack.c.b16 %v2884, %v2883
        %v2911 = vpack.c.b16 %v2886, %v2885
        %v2912 = vpack.c.b16 %v2888, %v2887
        %v2913 = vpack.c.b16 %v2890, %v2889
        %v2914 = vpack.c.b16 %v2892, %v2891
        %v2915 = vpack.c.b16 %v2894, %v2893
        %v2916 = vpack.c.b16 %v2896, %v2895
        %v2917 = vpack.c.b16 %v2898, %v2897
        %v2918 = vpack.c.b16 %v2900, %v2899
        %v2919 = vpack.c.b16 %v2902, %v2901
        %v2920 = vpack.c.b16 %v2904, %v2903
        %2937 = vmatprep.subr.bf16.mxu0 0
        %2938 = vmatpush1.bf16.msra.mxu0 %v2905
        %2939 = vmatprep.subr.bf16.mxu0 0
        %2940 = vmatpush1.bf16.msra.mxu0 %v2906
        %2941 = vmatprep.subr.bf16.mxu0 0
        %2942 = vmatpush1.bf16.msra.mxu0 %v2907
        %2943 = vmatprep.subr.bf16.mxu0 0
        %2944 = vmatpush1.bf16.msra.mxu0 %v2908
        %2945 = vmatprep.subr.bf16.mxu0 0
        %2946 = vmatpush1.bf16.msra.mxu0 %v2909
        %2947 = vmatprep.subr.bf16.mxu0 0
        %2948 = vmatpush1.bf16.msra.mxu0 %v2910
        %2949 = vmatprep.subr.bf16.mxu0 0
        %2950 = vmatpush1.bf16.msra.mxu0 %v2911
        %2951 = vmatprep.subr.bf16.mxu0 0
        %2952 = vmatpush1.bf16.msra.mxu0 %v2912
        %2953 = vmatprep.subr.bf16.mxu0 0
        %2954 = vmatpush1.bf16.msra.mxu0 %v2913
        %2955 = vmatprep.subr.bf16.mxu0 0
        %2956 = vmatpush1.bf16.msra.mxu0 %v2914
        %2957 = vmatprep.subr.bf16.mxu0 0
        %2958 = vmatpush1.bf16.msra.mxu0 %v2915
        %2959 = vmatprep.subr.bf16.mxu0 0
        %2960 = vmatpush1.bf16.msra.mxu0 %v2916
        %2961 = vmatprep.subr.bf16.mxu0 0
        %2962 = vmatpush1.bf16.msra.mxu0 %v2917
        %2963 = vmatprep.subr.bf16.mxu0 0
        %2964 = vmatpush1.bf16.msra.mxu0 %v2918
        %2965 = vmatprep.subr.bf16.mxu0 0
        %2966 = vmatpush1.bf16.msra.mxu0 %v2919
        %2967 = vmatprep.subr.bf16.mxu0 0
        %2968 = vmatpush1.bf16.msra.mxu0 %v2920
        %2969 = vmatprep.mubr.bf16.mxu0 %v2833
        %2970 = vmatmul.mubr.bf16.gmra.mrb[0].mxu0 %v2832
        %v2971 = vpop.f32.mrb[0].mxu0
        %v2972 = vadd.f32 %v2839, %v2971
        %v2973 = vpop.f32.mrb[0].mxu0
        %v2974 = vpop.f32.mrb[0].mxu0
        %v2975 = vadd.f32 %v2839, %v2974
        %v2976 = vpop.f32.mrb[0].mxu0
        %2977 = vdwg.mxu0
        %v2978 = vadd.f32 %v2586, %v2972
        %v2979 = vadd.f32 %v2587, %v2975
        %v2980 = vpack.c.bf16 %v2979, %v2978
        %v2982 = vunpack.c.l.b16 %v2980
        %v2983 = vunpack.c.h.b16 %v2980
        %v2984 = vpack.c.b16 %v2982, %v2982
        %v2985 = vpack.c.b16 %v2983, %v2983
        %2988 = vst [vmem:[%s516] sm:$0xf] %v2984
        %2989 = vst [vmem:[%s516 + $0x4] sm:$0xf] %v2985
        %s2990 = sand.u32 %s318, 1
        %s2991 = scalar_lea.sflag [#allocation4], %s2990
        %s2992 = sand.u32 %s318, 1
        %s2993 = smul.addr %s2992, 8
        %s2994 = scalar_lea.vmem [#allocation11], %s2993
        // Predicated region
        $region93: #{tpu_custom_call.1} parent=71 // pred_check
          %p2995 = pneg %p328
        $region94: #{tpu_custom_call.1} parent=71 // pred_check_branch
          %2997 = sbr.rel (%p2995) target = $region96
        $region95: #{tpu_custom_call.1} parent=71 // pred_region
          %s2999 = ssub.s32 128, 128
          %3000 = vsyncadd %s2991, %s2999
          %s3001 = smul.addr %s32, 2
          %s3002 = smul.addr %s3001, 64
          %s3003 = scalar_lea.hbm %s13, %s3002
          %s3004 = sshll.u32 %s2994, 4
          %s3005 = int_to_ptr.vmem [resolvable:$true] %s3004
          %3010 = dma.vmem_to_hbm [thread:$0]  %s3005, 128, %s3003, %s2991, 64, 64, 4
        $region96: #{tpu_custom_call.1} parent=71 // pred_fallthru
          _
      $region72: #{tpu_custom_call.1} parent=5 // pred_fallthru
        _
      %p3011 = scmp.le.s32.totalorder 2, %s27
      // Predicated region
      $region97: #{tpu_custom_call.1} parent=5 // pred_check
        %p3012 = pneg %p3011
      $region98: #{tpu_custom_call.1} parent=5 // pred_check_branch
        %3014 = sbr.rel (%p3012) target = $region100
      $region99: #{tpu_custom_call.1} parent=5 // pred_region
        %s3015 = ssub.s32 %s27, 2
        // Predicated region
        $region101: #{tpu_custom_call.1} parent=99 // pred_check
          %p3016 = pneg %p334
        $region102: #{tpu_custom_call.1} parent=99 // pred_check_branch
          %3018 = sbr.rel (%p3016) target = $region104
        $region103: #{tpu_custom_call.1} parent=99 // pred_region
          %s3019 = sand.u32 %s319, 1
          %s3020 = scalar_lea.sflag [#allocation4], %s3019
          %s3021 = sand.u32 %s319, 1
          %s3022 = smul.addr %s3021, 8
          %s3023 = scalar_lea.vmem [#allocation11], %s3022
          %3024 = dma.done %s3020, 128
        $region104: #{tpu_custom_call.1} parent=99 // pred_fallthru
          _
      $region100: #{tpu_custom_call.1} parent=5 // pred_fallthru
        _
    $region6: #{tpu_custom_call.1} parent=1 // loop_footer
      %s31 = sadd.s32 1, %s27
    $region7: #{tpu_custom_call.1} parent=1 // loop_footer_branch
      %26 = sbr.rel target = $region3
    $region8: #{tpu_custom_call.1} parent=1 // loop_exit
      _
    %3025 = vsyncpa [#allocation3], 1
    %s3026 = scalar_lea.sflag [#allocation3], 1
    %3027 = vsyncpa %s3026, 1
    %3028 = vsyncpa [#allocation6], 1
    %3029 = vsyncpa [#allocation9], 1
    %3030 = vsyncpa [#allocation4], 1
    %s3031 = scalar_lea.sflag [#allocation4], 1
    %3032 = vsyncpa %s3031, 1

</llo_original>
